<compile_context>
chip_gen: v7x
topology: tpu7x:2x2x1
jax: 0.10.0
libtpu: 0.0.40
codegen_flags: <defaults>
</compile_context>

<pallas_src>
import functools

import jax
import jax.numpy as jnp
from jax import lax
from jax.experimental import pallas as pl
from jax.experimental.pallas import tpu as pltpu

K = 5                        # conv kernel size
PAD = 2                      # 'same' padding for k=5, stride=1
GROUP = 5                    # taps per MXU accumulation chunk (= one kernel row)
NUM_GROUPS = (K * K) // GROUP


def _fused_convblock_kernel(x_ref, masks_ref, w1_ref, b1_ref, w2_ref, b2_ref,
                            alpha_ref, out_ref, *, W, C, L):
    """Fused conv5x5 -> PReLU -> conv5x5 -> +residual for one batch block.

    x_ref, out_ref : (C, L) with L = Nb*H*W, lane-dense (NCHW flattened)
    masks_ref      : (K*K, L) f32 0/1 halo masks (precomputed on host)
    w{1,2}_ref     : (NUM_GROUPS, C, GROUP*C) bf16, columns = tap_in_group*C + cin
    b{1,2}_ref     : (C, 1) f32
    alpha_ref      : (1,) f32 in SMEM (single-parameter PReLU)
    """

    def conv(img, w_ref):
        # Zero-padded 'same' 5x5 conv of img:(C, L) f32 -> (C, L) f32.
        # Tap shifts are lane rotations (XLU); halo zeroing is a 0/1 mask mul
        # (VALU); each GROUP-tap bf16 sub-slab goes straight to the MXU.
        acc = None
        for g in range(NUM_GROUPS):
            taps = []
            for t in range(g * GROUP, (g + 1) * GROUP):
                dy = t // K - PAD
                dx = t % K - PAD
                shift = (-(dy * W + dx)) % L
                shifted = img if shift == 0 else pltpu.roll(img, shift, axis=1)
                if dy == 0 and dx == 0:
                    taps.append(shifted)               # center tap: all-ones mask
                else:
                    taps.append(shifted * masks_ref[t:t + 1, :])
            sub = jnp.concatenate(taps, axis=0).astype(jnp.bfloat16)  # (GROUP*C, L)
            part = jnp.dot(w_ref[g], sub, preferred_element_type=jnp.float32)
            acc = part if acc is None else acc + part
        return acc                                     # (C, L) f32

    x = x_ref[...].astype(jnp.float32)                 # (C, L)

    # conv1 + bias + PReLU (single alpha)
    h = conv(x, w1_ref) + b1_ref[...]
    alpha = alpha_ref[0]
    h = jnp.where(h > 0, h, alpha * h)

    # conv2 + bias + residual; single lane-dense full-width store.
    y = conv(h, w2_ref) + b2_ref[...] + x
    out_ref[...] = y.astype(out_ref.dtype)


def _halo_masks(H, W, Nb):
    """(K*K, Nb*H*W) f32 0/1 masks: mask[t, p] = 1 iff tap t reads in-bounds."""
    pos = jnp.arange(H * W, dtype=jnp.int32)
    row = pos // W
    col = pos % W
    rows = []
    for ky in range(K):
        dy = ky - PAD
        for kx in range(K):
            dx = kx - PAD
            ok = ((row >= -dy) & (row < H - dy) &
                  (col >= -dx) & (col < W - dx))
            rows.append(ok)
    masks = jnp.stack(rows).astype(jnp.float32)        # (K*K, H*W)
    return jnp.tile(masks, (1, Nb))                    # (K*K, Nb*H*W)


def _pack_weight(w, C):
    """OIHW (C,C,K,K) -> (NUM_GROUPS, C, GROUP*C) bf16, matching the kernel's
    tap-group sub-slab row order (tap_in_group*C + cin), taps = ky*K + kx."""
    wm = jnp.transpose(w, (0, 2, 3, 1)).reshape(C, K * K * C)   # cols: t*C + cin
    wm = wm.reshape(C, NUM_GROUPS, GROUP * C).transpose(1, 0, 2)
    return wm.astype(jnp.bfloat16)


def _pick_batch_block(N, C, HW):
    """Largest Nb dividing N that keeps >= 2 grid steps (pipelining) and keeps
    the per-step lane-dense slabs comfortably inside VMEM."""
    for nb in range(max(N // 2, 1), 0, -1):
        per_step_bytes = 6 * C * nb * HW * 4           # x/out blocks + live values
        if N % nb == 0 and per_step_bytes <= (8 << 20):
            return nb
    return 1


def conv_block_forward(x_nchw, w1, b1, alpha, w2, b2):
    """ConvBlock forward. x_nchw: (N, C, H, W); weights in PyTorch OIHW."""
    N, Cin, H, W = x_nchw.shape
    Cout = w1.shape[0]
    assert Cin == Cout, "residual add (x + out) requires in_channels == out_channels"
    C = Cin
    # TODO(synk): pad channels in the wrapper if C is ever not a multiple of 8.
    assert C % 8 == 0, "C must be a multiple of 8 for sublane-aligned slabs"
    HW = H * W

    Nb = _pick_batch_block(N, C, HW)
    steps = N // Nb
    L = Nb * HW

    # Lane-dense packed layout: (steps, C, Nb*HW).  Pure layout plumbing.
    x_g = (x_nchw.reshape(steps, Nb, C, HW)
           .transpose(0, 2, 1, 3)
           .reshape(steps, C, L))

    masks = _halo_masks(H, W, Nb)                      # (K*K, L) f32
    w1g = _pack_weight(w1, C)                          # (NUM_GROUPS, C, GROUP*C) bf16
    w2g = _pack_weight(w2, C)
    b1c = b1.reshape(C, 1).astype(jnp.float32)
    b2c = b2.reshape(C, 1).astype(jnp.float32)
    alpha1 = jnp.reshape(alpha, (1,)).astype(jnp.float32)

    kernel = functools.partial(_fused_convblock_kernel, W=W, C=C, L=L)

    out_g = pl.pallas_call(
        kernel,
        out_shape=jax.ShapeDtypeStruct((steps, C, L), jnp.float32),
        grid=(steps,),
        in_specs=[
            pl.BlockSpec((None, C, L), lambda n: (n, 0, 0)),                # x block
            pl.BlockSpec((K * K, L), lambda n: (0, 0)),                     # halo masks
            pl.BlockSpec((NUM_GROUPS, C, GROUP * C), lambda n: (0, 0, 0)),  # w1
            pl.BlockSpec((C, 1), lambda n: (0, 0)),                         # b1
            pl.BlockSpec((NUM_GROUPS, C, GROUP * C), lambda n: (0, 0, 0)),  # w2
            pl.BlockSpec((C, 1), lambda n: (0, 0)),                         # b2
            pl.BlockSpec(memory_space=pltpu.MemorySpace.SMEM),              # alpha
        ],
        out_specs=pl.BlockSpec((None, C, L), lambda n: (n, 0, 0)),
        compiler_params=pltpu.CompilerParams(
            dimension_semantics=("parallel",)),
    )(x_g, masks, w1g, b1c, w2g, b2c, alpha1)

    return (out_g.reshape(steps, C, Nb, HW)
            .transpose(0, 2, 1, 3)
            .reshape(N, C, H, W))


def _reference(x_nchw, w1, b1, alpha, w2, b2):
    """Pure-JAX f32 reference (lax.conv in NCHW/OIHW) for correctness check."""
    dn = lax.conv_dimension_numbers(x_nchw.shape, w1.shape,
                                    ('NCHW', 'OIHW', 'NCHW'))
    h = lax.conv_general_dilated(x_nchw, w1, (1, 1), 'SAME',
                                 dimension_numbers=dn,
                                 precision=lax.Precision.HIGHEST)
    h = h + b1[None, :, None, None]
    h = jnp.where(h > 0, h, alpha * h)
    o = lax.conv_general_dilated(h, w2, (1, 1), 'SAME',
                                 dimension_numbers=dn,
                                 precision=lax.Precision.HIGHEST)
    o = o + b2[None, :, None, None]
    return x_nchw + o


if __name__ == "__main__":
    N, C, H, W = 4, 8, 16, 16          # in_channels == out_channels (residual)
    key = jax.random.PRNGKey(0)
    kx, k1, kb1, k2, kb2 = jax.random.split(key, 5)

    x = jax.random.normal(kx, (N, C, H, W), jnp.float32)
    # Deterministic synthetic parameters (PyTorch shapes: (Cout, Cin, K, K))
    w1 = jax.random.normal(k1, (C, C, K, K), jnp.float32) * 0.05
    b1 = jax.random.normal(kb1, (C,), jnp.float32) * 0.05
    w2 = jax.random.normal(k2, (C, C, K, K), jnp.float32) * 0.05
    b2 = jax.random.normal(kb2, (C,), jnp.float32) * 0.05
    alpha = jnp.float32(0.25)          # nn.PReLU() default init

    y = conv_block_forward(x, w1, b1, alpha, w2, b2)
    y = jax.block_until_ready(y)

    y_ref = _reference(x, w1, b1, alpha, w2, b2)
    assert y.shape == (N, C, H, W)
    # bf16 MXU operands vs f32 reference -> relaxed tolerance (per review note).
    assert jnp.allclose(y, y_ref, atol=3e-2, rtol=3e-2), "mismatch vs reference"

    print("KERNEL_OK")
</pallas_src>

<mosaic_0001>
module attributes {stable_mosaic.version = 11 : i64} {
  func.func @_fused_convblock_kernel(%arg0: i32, %arg1: memref<1x8x512xf32, #tpu.memory_space<vmem>>, %arg2: memref<25x512xf32, #tpu.memory_space<vmem>>, %arg3: memref<5x8x40xbf16, #tpu.memory_space<vmem>>, %arg4: memref<8x1xf32, #tpu.memory_space<vmem>>, %arg5: memref<5x8x40xbf16, #tpu.memory_space<vmem>>, %arg6: memref<8x1xf32, #tpu.memory_space<vmem>>, %arg7: memref<1xf32, #tpu.memory_space<smem>>, %arg8: memref<1x8x512xf32, #tpu.memory_space<vmem>>) attributes {dimension_semantics = [#tpu.dimension_semantics<parallel>], iteration_bounds = array<i64: 2>, scalar_prefetch = 0 : i64, scratch_operands = 0 : i64, tpu.core_type = #tpu.core_type<tc>, window_params = [{transform_indices = @transform_0, window_bounds = array<i64: 1, 8, 512>}, {pipeline_mode = #tpu.pipeline_mode<synchronous>, transform_indices = @transform_1, window_bounds = array<i64: 25, 512>}, {pipeline_mode = #tpu.pipeline_mode<synchronous>, transform_indices = @transform_2, window_bounds = array<i64: 5, 8, 40>}, {pipeline_mode = #tpu.pipeline_mode<synchronous>, transform_indices = @transform_3, window_bounds = array<i64: 8, 1>}, {pipeline_mode = #tpu.pipeline_mode<synchronous>, transform_indices = @transform_4, window_bounds = array<i64: 5, 8, 40>}, {pipeline_mode = #tpu.pipeline_mode<synchronous>, transform_indices = @transform_5, window_bounds = array<i64: 8, 1>}, {transform_indices = @transform_6, window_bounds = array<i64: 1>}, {transform_indices = @transform_7, window_bounds = array<i64: 1, 8, 512>}]} {
    %c0 = arith.constant 0 : index
    %c0_0 = arith.constant 0 : index
    %c0_1 = arith.constant 0 : index
    %0 = vector.load %arg1[%c0, %c0_0, %c0_1] : memref<1x8x512xf32, #tpu.memory_space<vmem>>, vector<1x8x512xf32>
    %1 = vector.shape_cast %0 : vector<1x8x512xf32> to vector<8x512xf32>
    %c34_i32 = arith.constant 34 : i32
    %2 = tpu.dynamic_rotate %1 by %c34_i32 dim 1 : vector<8x512xf32>, i32 -> vector<8x512xf32>
    %c0_2 = arith.constant 0 : index
    %c0_3 = arith.constant 0 : index
    %3 = vector.load %arg2[%c0_2, %c0_3] : memref<25x512xf32, #tpu.memory_space<vmem>>, vector<1x512xf32>
    %4 = vector.broadcast %3 : vector<1x512xf32> to vector<8x512xf32>
    %5 = arith.mulf %2, %4 : vector<8x512xf32>
    %c33_i32 = arith.constant 33 : i32
    %6 = tpu.dynamic_rotate %1 by %c33_i32 dim 1 : vector<8x512xf32>, i32 -> vector<8x512xf32>
    %c1 = arith.constant 1 : index
    %c0_4 = arith.constant 0 : index
    %7 = vector.load %arg2[%c1, %c0_4] : memref<25x512xf32, #tpu.memory_space<vmem>>, vector<1x512xf32>
    %8 = vector.broadcast %7 : vector<1x512xf32> to vector<8x512xf32>
    %9 = arith.mulf %6, %8 : vector<8x512xf32>
    %c32_i32 = arith.constant 32 : i32
    %10 = tpu.dynamic_rotate %1 by %c32_i32 dim 1 : vector<8x512xf32>, i32 -> vector<8x512xf32>
    %c2 = arith.constant 2 : index
    %c0_5 = arith.constant 0 : index
    %11 = vector.load %arg2[%c2, %c0_5] : memref<25x512xf32, #tpu.memory_space<vmem>>, vector<1x512xf32>
    %12 = vector.broadcast %11 : vector<1x512xf32> to vector<8x512xf32>
    %13 = arith.mulf %10, %12 : vector<8x512xf32>
    %c31_i32 = arith.constant 31 : i32
    %14 = tpu.dynamic_rotate %1 by %c31_i32 dim 1 : vector<8x512xf32>, i32 -> vector<8x512xf32>
    %c3 = arith.constant 3 : index
    %c0_6 = arith.constant 0 : index
    %15 = vector.load %arg2[%c3, %c0_6] : memref<25x512xf32, #tpu.memory_space<vmem>>, vector<1x512xf32>
    %16 = vector.broadcast %15 : vector<1x512xf32> to vector<8x512xf32>
    %17 = arith.mulf %14, %16 : vector<8x512xf32>
    %c30_i32 = arith.constant 30 : i32
    %18 = tpu.dynamic_rotate %1 by %c30_i32 dim 1 : vector<8x512xf32>, i32 -> vector<8x512xf32>
    %c4 = arith.constant 4 : index
    %c0_7 = arith.constant 0 : index
    %19 = vector.load %arg2[%c4, %c0_7] : memref<25x512xf32, #tpu.memory_space<vmem>>, vector<1x512xf32>
    %20 = vector.broadcast %19 : vector<1x512xf32> to vector<8x512xf32>
    %21 = arith.mulf %18, %20 : vector<8x512xf32>
    %22 = tpu.concatenate %5, %9, %13, %17, %21 in 0 : vector<8x512xf32>, vector<8x512xf32>, vector<8x512xf32>, vector<8x512xf32>, vector<8x512xf32> -> vector<40x512xf32>
    %23 = arith.truncf %22 : vector<40x512xf32> to vector<40x512xbf16>
    %c0_8 = arith.constant 0 : index
    %c0_9 = arith.constant 0 : index
    %c0_10 = arith.constant 0 : index
    %24 = vector.load %arg3[%c0_8, %c0_9, %c0_10] : memref<5x8x40xbf16, #tpu.memory_space<vmem>>, vector<1x8x40xbf16>
    %25 = vector.shape_cast %24 : vector<1x8x40xbf16> to vector<8x40xbf16>
    %cst = arith.constant dense<0.000000e+00> : vector<8x512xf32>
    %26 = tpu.matmul %25, %23, %cst {dimension_numbers = #tpu.dot_dimension_numbers<[1], [0], [0], [1], [0, 0, 1, 1], [], []>} : vector<8x40xbf16>, vector<40x512xbf16>, vector<8x512xf32> -> vector<8x512xf32>
    %c18_i32 = arith.constant 18 : i32
    %27 = tpu.dynamic_rotate %1 by %c18_i32 dim 1 : vector<8x512xf32>, i32 -> vector<8x512xf32>
    %c5 = arith.constant 5 : index
    %c0_11 = arith.constant 0 : index
    %28 = vector.load %arg2[%c5, %c0_11] : memref<25x512xf32, #tpu.memory_space<vmem>>, vector<1x512xf32>
    %29 = vector.broadcast %28 : vector<1x512xf32> to vector<8x512xf32>
    %30 = arith.mulf %27, %29 : vector<8x512xf32>
    %c17_i32 = arith.constant 17 : i32
    %31 = tpu.dynamic_rotate %1 by %c17_i32 dim 1 : vector<8x512xf32>, i32 -> vector<8x512xf32>
    %c6 = arith.constant 6 : index
    %c0_12 = arith.constant 0 : index
    %32 = vector.load %arg2[%c6, %c0_12] : memref<25x512xf32, #tpu.memory_space<vmem>>, vector<1x512xf32>
    %33 = vector.broadcast %32 : vector<1x512xf32> to vector<8x512xf32>
    %34 = arith.mulf %31, %33 : vector<8x512xf32>
    %c16_i32 = arith.constant 16 : i32
    %35 = tpu.dynamic_rotate %1 by %c16_i32 dim 1 : vector<8x512xf32>, i32 -> vector<8x512xf32>
    %c7 = arith.constant 7 : index
    %c0_13 = arith.constant 0 : index
    %36 = vector.load %arg2[%c7, %c0_13] : memref<25x512xf32, #tpu.memory_space<vmem>>, vector<1x512xf32>
    %37 = vector.broadcast %36 : vector<1x512xf32> to vector<8x512xf32>
    %38 = arith.mulf %35, %37 : vector<8x512xf32>
    %c15_i32 = arith.constant 15 : i32
    %39 = tpu.dynamic_rotate %1 by %c15_i32 dim 1 : vector<8x512xf32>, i32 -> vector<8x512xf32>
    %c8 = arith.constant 8 : index
    %c0_14 = arith.constant 0 : index
    %40 = vector.load %arg2[%c8, %c0_14] : memref<25x512xf32, #tpu.memory_space<vmem>>, vector<1x512xf32>
    %41 = vector.broadcast %40 : vector<1x512xf32> to vector<8x512xf32>
    %42 = arith.mulf %39, %41 : vector<8x512xf32>
    %c14_i32 = arith.constant 14 : i32
    %43 = tpu.dynamic_rotate %1 by %c14_i32 dim 1 : vector<8x512xf32>, i32 -> vector<8x512xf32>
    %c9 = arith.constant 9 : index
    %c0_15 = arith.constant 0 : index
    %44 = vector.load %arg2[%c9, %c0_15] : memref<25x512xf32, #tpu.memory_space<vmem>>, vector<1x512xf32>
    %45 = vector.broadcast %44 : vector<1x512xf32> to vector<8x512xf32>
    %46 = arith.mulf %43, %45 : vector<8x512xf32>
    %47 = tpu.concatenate %30, %34, %38, %42, %46 in 0 : vector<8x512xf32>, vector<8x512xf32>, vector<8x512xf32>, vector<8x512xf32>, vector<8x512xf32> -> vector<40x512xf32>
    %48 = arith.truncf %47 : vector<40x512xf32> to vector<40x512xbf16>
    %c1_16 = arith.constant 1 : index
    %c0_17 = arith.constant 0 : index
    %c0_18 = arith.constant 0 : index
    %49 = vector.load %arg3[%c1_16, %c0_17, %c0_18] : memref<5x8x40xbf16, #tpu.memory_space<vmem>>, vector<1x8x40xbf16>
    %50 = vector.shape_cast %49 : vector<1x8x40xbf16> to vector<8x40xbf16>
    %cst_19 = arith.constant dense<0.000000e+00> : vector<8x512xf32>
    %51 = tpu.matmul %50, %48, %cst_19 {dimension_numbers = #tpu.dot_dimension_numbers<[1], [0], [0], [1], [0, 0, 1, 1], [], []>} : vector<8x40xbf16>, vector<40x512xbf16>, vector<8x512xf32> -> vector<8x512xf32>
    %52 = arith.addf %26, %51 : vector<8x512xf32>
    %c2_i32 = arith.constant 2 : i32
    %53 = tpu.dynamic_rotate %1 by %c2_i32 dim 1 : vector<8x512xf32>, i32 -> vector<8x512xf32>
    %c10 = arith.constant 10 : index
    %c0_20 = arith.constant 0 : index
    %54 = vector.load %arg2[%c10, %c0_20] : memref<25x512xf32, #tpu.memory_space<vmem>>, vector<1x512xf32>
    %55 = vector.broadcast %54 : vector<1x512xf32> to vector<8x512xf32>
    %56 = arith.mulf %53, %55 : vector<8x512xf32>
    %c1_i32 = arith.constant 1 : i32
    %57 = tpu.dynamic_rotate %1 by %c1_i32 dim 1 : vector<8x512xf32>, i32 -> vector<8x512xf32>
    %c11 = arith.constant 11 : index
    %c0_21 = arith.constant 0 : index
    %58 = vector.load %arg2[%c11, %c0_21] : memref<25x512xf32, #tpu.memory_space<vmem>>, vector<1x512xf32>
    %59 = vector.broadcast %58 : vector<1x512xf32> to vector<8x512xf32>
    %60 = arith.mulf %57, %59 : vector<8x512xf32>
    %c511_i32 = arith.constant 511 : i32
    %61 = tpu.dynamic_rotate %1 by %c511_i32 dim 1 : vector<8x512xf32>, i32 -> vector<8x512xf32>
    %c13 = arith.constant 13 : index
    %c0_22 = arith.constant 0 : index
    %62 = vector.load %arg2[%c13, %c0_22] : memref<25x512xf32, #tpu.memory_space<vmem>>, vector<1x512xf32>
    %63 = vector.broadcast %62 : vector<1x512xf32> to vector<8x512xf32>
    %64 = arith.mulf %61, %63 : vector<8x512xf32>
    %c510_i32 = arith.constant 510 : i32
    %65 = tpu.dynamic_rotate %1 by %c510_i32 dim 1 : vector<8x512xf32>, i32 -> vector<8x512xf32>
    %c14 = arith.constant 14 : index
    %c0_23 = arith.constant 0 : index
    %66 = vector.load %arg2[%c14, %c0_23] : memref<25x512xf32, #tpu.memory_space<vmem>>, vector<1x512xf32>
    %67 = vector.broadcast %66 : vector<1x512xf32> to vector<8x512xf32>
    %68 = arith.mulf %65, %67 : vector<8x512xf32>
    %69 = tpu.concatenate %56, %60, %1, %64, %68 in 0 : vector<8x512xf32>, vector<8x512xf32>, vector<8x512xf32>, vector<8x512xf32>, vector<8x512xf32> -> vector<40x512xf32>
    %70 = arith.truncf %69 : vector<40x512xf32> to vector<40x512xbf16>
    %c2_24 = arith.constant 2 : index
    %c0_25 = arith.constant 0 : index
    %c0_26 = arith.constant 0 : index
    %71 = vector.load %arg3[%c2_24, %c0_25, %c0_26] : memref<5x8x40xbf16, #tpu.memory_space<vmem>>, vector<1x8x40xbf16>
    %72 = vector.shape_cast %71 : vector<1x8x40xbf16> to vector<8x40xbf16>
    %cst_27 = arith.constant dense<0.000000e+00> : vector<8x512xf32>
    %73 = tpu.matmul %72, %70, %cst_27 {dimension_numbers = #tpu.dot_dimension_numbers<[1], [0], [0], [1], [0, 0, 1, 1], [], []>} : vector<8x40xbf16>, vector<40x512xbf16>, vector<8x512xf32> -> vector<8x512xf32>
    %74 = arith.addf %52, %73 : vector<8x512xf32>
    %c498_i32 = arith.constant 498 : i32
    %75 = tpu.dynamic_rotate %1 by %c498_i32 dim 1 : vector<8x512xf32>, i32 -> vector<8x512xf32>
    %c15 = arith.constant 15 : index
    %c0_28 = arith.constant 0 : index
    %76 = vector.load %arg2[%c15, %c0_28] : memref<25x512xf32, #tpu.memory_space<vmem>>, vector<1x512xf32>
    %77 = vector.broadcast %76 : vector<1x512xf32> to vector<8x512xf32>
    %78 = arith.mulf %75, %77 : vector<8x512xf32>
    %c497_i32 = arith.constant 497 : i32
    %79 = tpu.dynamic_rotate %1 by %c497_i32 dim 1 : vector<8x512xf32>, i32 -> vector<8x512xf32>
    %c16 = arith.constant 16 : index
    %c0_29 = arith.constant 0 : index
    %80 = vector.load %arg2[%c16, %c0_29] : memref<25x512xf32, #tpu.memory_space<vmem>>, vector<1x512xf32>
    %81 = vector.broadcast %80 : vector<1x512xf32> to vector<8x512xf32>
    %82 = arith.mulf %79, %81 : vector<8x512xf32>
    %c496_i32 = arith.constant 496 : i32
    %83 = tpu.dynamic_rotate %1 by %c496_i32 dim 1 : vector<8x512xf32>, i32 -> vector<8x512xf32>
    %c17 = arith.constant 17 : index
    %c0_30 = arith.constant 0 : index
    %84 = vector.load %arg2[%c17, %c0_30] : memref<25x512xf32, #tpu.memory_space<vmem>>, vector<1x512xf32>
    %85 = vector.broadcast %84 : vector<1x512xf32> to vector<8x512xf32>
    %86 = arith.mulf %83, %85 : vector<8x512xf32>
    %c495_i32 = arith.constant 495 : i32
    %87 = tpu.dynamic_rotate %1 by %c495_i32 dim 1 : vector<8x512xf32>, i32 -> vector<8x512xf32>
    %c18 = arith.constant 18 : index
    %c0_31 = arith.constant 0 : index
    %88 = vector.load %arg2[%c18, %c0_31] : memref<25x512xf32, #tpu.memory_space<vmem>>, vector<1x512xf32>
    %89 = vector.broadcast %88 : vector<1x512xf32> to vector<8x512xf32>
    %90 = arith.mulf %87, %89 : vector<8x512xf32>
    %c494_i32 = arith.constant 494 : i32
    %91 = tpu.dynamic_rotate %1 by %c494_i32 dim 1 : vector<8x512xf32>, i32 -> vector<8x512xf32>
    %c19 = arith.constant 19 : index
    %c0_32 = arith.constant 0 : index
    %92 = vector.load %arg2[%c19, %c0_32] : memref<25x512xf32, #tpu.memory_space<vmem>>, vector<1x512xf32>
    %93 = vector.broadcast %92 : vector<1x512xf32> to vector<8x512xf32>
    %94 = arith.mulf %91, %93 : vector<8x512xf32>
    %95 = tpu.concatenate %78, %82, %86, %90, %94 in 0 : vector<8x512xf32>, vector<8x512xf32>, vector<8x512xf32>, vector<8x512xf32>, vector<8x512xf32> -> vector<40x512xf32>
    %96 = arith.truncf %95 : vector<40x512xf32> to vector<40x512xbf16>
    %c3_33 = arith.constant 3 : index
    %c0_34 = arith.constant 0 : index
    %c0_35 = arith.constant 0 : index
    %97 = vector.load %arg3[%c3_33, %c0_34, %c0_35] : memref<5x8x40xbf16, #tpu.memory_space<vmem>>, vector<1x8x40xbf16>
    %98 = vector.shape_cast %97 : vector<1x8x40xbf16> to vector<8x40xbf16>
    %cst_36 = arith.constant dense<0.000000e+00> : vector<8x512xf32>
    %99 = tpu.matmul %98, %96, %cst_36 {dimension_numbers = #tpu.dot_dimension_numbers<[1], [0], [0], [1], [0, 0, 1, 1], [], []>} : vector<8x40xbf16>, vector<40x512xbf16>, vector<8x512xf32> -> vector<8x512xf32>
    %100 = arith.addf %74, %99 : vector<8x512xf32>
    %c482_i32 = arith.constant 482 : i32
    %101 = tpu.dynamic_rotate %1 by %c482_i32 dim 1 : vector<8x512xf32>, i32 -> vector<8x512xf32>
    %c20 = arith.constant 20 : index
    %c0_37 = arith.constant 0 : index
    %102 = vector.load %arg2[%c20, %c0_37] : memref<25x512xf32, #tpu.memory_space<vmem>>, vector<1x512xf32>
    %103 = vector.broadcast %102 : vector<1x512xf32> to vector<8x512xf32>
    %104 = arith.mulf %101, %103 : vector<8x512xf32>
    %c481_i32 = arith.constant 481 : i32
    %105 = tpu.dynamic_rotate %1 by %c481_i32 dim 1 : vector<8x512xf32>, i32 -> vector<8x512xf32>
    %c21 = arith.constant 21 : index
    %c0_38 = arith.constant 0 : index
    %106 = vector.load %arg2[%c21, %c0_38] : memref<25x512xf32, #tpu.memory_space<vmem>>, vector<1x512xf32>
    %107 = vector.broadcast %106 : vector<1x512xf32> to vector<8x512xf32>
    %108 = arith.mulf %105, %107 : vector<8x512xf32>
    %c480_i32 = arith.constant 480 : i32
    %109 = tpu.dynamic_rotate %1 by %c480_i32 dim 1 : vector<8x512xf32>, i32 -> vector<8x512xf32>
    %c22 = arith.constant 22 : index
    %c0_39 = arith.constant 0 : index
    %110 = vector.load %arg2[%c22, %c0_39] : memref<25x512xf32, #tpu.memory_space<vmem>>, vector<1x512xf32>
    %111 = vector.broadcast %110 : vector<1x512xf32> to vector<8x512xf32>
    %112 = arith.mulf %109, %111 : vector<8x512xf32>
    %c479_i32 = arith.constant 479 : i32
    %113 = tpu.dynamic_rotate %1 by %c479_i32 dim 1 : vector<8x512xf32>, i32 -> vector<8x512xf32>
    %c23 = arith.constant 23 : index
    %c0_40 = arith.constant 0 : index
    %114 = vector.load %arg2[%c23, %c0_40] : memref<25x512xf32, #tpu.memory_space<vmem>>, vector<1x512xf32>
    %115 = vector.broadcast %114 : vector<1x512xf32> to vector<8x512xf32>
    %116 = arith.mulf %113, %115 : vector<8x512xf32>
    %c478_i32 = arith.constant 478 : i32
    %117 = tpu.dynamic_rotate %1 by %c478_i32 dim 1 : vector<8x512xf32>, i32 -> vector<8x512xf32>
    %c24 = arith.constant 24 : index
    %c0_41 = arith.constant 0 : index
    %118 = vector.load %arg2[%c24, %c0_41] : memref<25x512xf32, #tpu.memory_space<vmem>>, vector<1x512xf32>
    %119 = vector.broadcast %118 : vector<1x512xf32> to vector<8x512xf32>
    %120 = arith.mulf %117, %119 : vector<8x512xf32>
    %121 = tpu.concatenate %104, %108, %112, %116, %120 in 0 : vector<8x512xf32>, vector<8x512xf32>, vector<8x512xf32>, vector<8x512xf32>, vector<8x512xf32> -> vector<40x512xf32>
    %122 = arith.truncf %121 : vector<40x512xf32> to vector<40x512xbf16>
    %c4_42 = arith.constant 4 : index
    %c0_43 = arith.constant 0 : index
    %c0_44 = arith.constant 0 : index
    %123 = vector.load %arg3[%c4_42, %c0_43, %c0_44] : memref<5x8x40xbf16, #tpu.memory_space<vmem>>, vector<1x8x40xbf16>
    %124 = vector.shape_cast %123 : vector<1x8x40xbf16> to vector<8x40xbf16>
    %cst_45 = arith.constant dense<0.000000e+00> : vector<8x512xf32>
    %125 = tpu.matmul %124, %122, %cst_45 {dimension_numbers = #tpu.dot_dimension_numbers<[1], [0], [0], [1], [0, 0, 1, 1], [], []>} : vector<8x40xbf16>, vector<40x512xbf16>, vector<8x512xf32> -> vector<8x512xf32>
    %126 = arith.addf %100, %125 : vector<8x512xf32>
    %c0_46 = arith.constant 0 : index
    %c0_47 = arith.constant 0 : index
    %127 = vector.load %arg4[%c0_46, %c0_47] : memref<8x1xf32, #tpu.memory_space<vmem>>, vector<8x1xf32>
    %128 = vector.broadcast %127 : vector<8x1xf32> to vector<8x512xf32>
    %129 = arith.addf %126, %128 : vector<8x512xf32>
    %c0_48 = arith.constant 0 : index
    %130 = memref.load %arg7[%c0_48] : memref<1xf32, #tpu.memory_space<smem>>
    %cst_49 = arith.constant 0.000000e+00 : f32
    %131 = vector.broadcast %cst_49 : f32 to vector<8x512xf32>
    %132 = arith.cmpf ogt, %129, %131 : vector<8x512xf32>
    %133 = vector.broadcast %130 : f32 to vector<8x512xf32>
    %134 = arith.mulf %133, %129 : vector<8x512xf32>
    %135 = arith.select %132, %129, %134 : vector<8x512xi1>, vector<8x512xf32>
    %c34_i32_50 = arith.constant 34 : i32
    %136 = tpu.dynamic_rotate %135 by %c34_i32_50 dim 1 : vector<8x512xf32>, i32 -> vector<8x512xf32>
    %c0_51 = arith.constant 0 : index
    %c0_52 = arith.constant 0 : index
    %137 = vector.load %arg2[%c0_51, %c0_52] : memref<25x512xf32, #tpu.memory_space<vmem>>, vector<1x512xf32>
    %138 = vector.broadcast %137 : vector<1x512xf32> to vector<8x512xf32>
    %139 = arith.mulf %136, %138 : vector<8x512xf32>
    %c33_i32_53 = arith.constant 33 : i32
    %140 = tpu.dynamic_rotate %135 by %c33_i32_53 dim 1 : vector<8x512xf32>, i32 -> vector<8x512xf32>
    %c1_54 = arith.constant 1 : index
    %c0_55 = arith.constant 0 : index
    %141 = vector.load %arg2[%c1_54, %c0_55] : memref<25x512xf32, #tpu.memory_space<vmem>>, vector<1x512xf32>
    %142 = vector.broadcast %141 : vector<1x512xf32> to vector<8x512xf32>
    %143 = arith.mulf %140, %142 : vector<8x512xf32>
    %c32_i32_56 = arith.constant 32 : i32
    %144 = tpu.dynamic_rotate %135 by %c32_i32_56 dim 1 : vector<8x512xf32>, i32 -> vector<8x512xf32>
    %c2_57 = arith.constant 2 : index
    %c0_58 = arith.constant 0 : index
    %145 = vector.load %arg2[%c2_57, %c0_58] : memref<25x512xf32, #tpu.memory_space<vmem>>, vector<1x512xf32>
    %146 = vector.broadcast %145 : vector<1x512xf32> to vector<8x512xf32>
    %147 = arith.mulf %144, %146 : vector<8x512xf32>
    %c31_i32_59 = arith.constant 31 : i32
    %148 = tpu.dynamic_rotate %135 by %c31_i32_59 dim 1 : vector<8x512xf32>, i32 -> vector<8x512xf32>
    %c3_60 = arith.constant 3 : index
    %c0_61 = arith.constant 0 : index
    %149 = vector.load %arg2[%c3_60, %c0_61] : memref<25x512xf32, #tpu.memory_space<vmem>>, vector<1x512xf32>
    %150 = vector.broadcast %149 : vector<1x512xf32> to vector<8x512xf32>
    %151 = arith.mulf %148, %150 : vector<8x512xf32>
    %c30_i32_62 = arith.constant 30 : i32
    %152 = tpu.dynamic_rotate %135 by %c30_i32_62 dim 1 : vector<8x512xf32>, i32 -> vector<8x512xf32>
    %c4_63 = arith.constant 4 : index
    %c0_64 = arith.constant 0 : index
    %153 = vector.load %arg2[%c4_63, %c0_64] : memref<25x512xf32, #tpu.memory_space<vmem>>, vector<1x512xf32>
    %154 = vector.broadcast %153 : vector<1x512xf32> to vector<8x512xf32>
    %155 = arith.mulf %152, %154 : vector<8x512xf32>
    %156 = tpu.concatenate %139, %143, %147, %151, %155 in 0 : vector<8x512xf32>, vector<8x512xf32>, vector<8x512xf32>, vector<8x512xf32>, vector<8x512xf32> -> vector<40x512xf32>
    %157 = arith.truncf %156 : vector<40x512xf32> to vector<40x512xbf16>
    %c0_65 = arith.constant 0 : index
    %c0_66 = arith.constant 0 : index
    %c0_67 = arith.constant 0 : index
    %158 = vector.load %arg5[%c0_65, %c0_66, %c0_67] : memref<5x8x40xbf16, #tpu.memory_space<vmem>>, vector<1x8x40xbf16>
    %159 = vector.shape_cast %158 : vector<1x8x40xbf16> to vector<8x40xbf16>
    %cst_68 = arith.constant dense<0.000000e+00> : vector<8x512xf32>
    %160 = tpu.matmul %159, %157, %cst_68 {dimension_numbers = #tpu.dot_dimension_numbers<[1], [0], [0], [1], [0, 0, 1, 1], [], []>} : vector<8x40xbf16>, vector<40x512xbf16>, vector<8x512xf32> -> vector<8x512xf32>
    %c18_i32_69 = arith.constant 18 : i32
    %161 = tpu.dynamic_rotate %135 by %c18_i32_69 dim 1 : vector<8x512xf32>, i32 -> vector<8x512xf32>
    %c5_70 = arith.constant 5 : index
    %c0_71 = arith.constant 0 : index
    %162 = vector.load %arg2[%c5_70, %c0_71] : memref<25x512xf32, #tpu.memory_space<vmem>>, vector<1x512xf32>
    %163 = vector.broadcast %162 : vector<1x512xf32> to vector<8x512xf32>
    %164 = arith.mulf %161, %163 : vector<8x512xf32>
    %c17_i32_72 = arith.constant 17 : i32
    %165 = tpu.dynamic_rotate %135 by %c17_i32_72 dim 1 : vector<8x512xf32>, i32 -> vector<8x512xf32>
    %c6_73 = arith.constant 6 : index
    %c0_74 = arith.constant 0 : index
    %166 = vector.load %arg2[%c6_73, %c0_74] : memref<25x512xf32, #tpu.memory_space<vmem>>, vector<1x512xf32>
    %167 = vector.broadcast %166 : vector<1x512xf32> to vector<8x512xf32>
    %168 = arith.mulf %165, %167 : vector<8x512xf32>
    %c16_i32_75 = arith.constant 16 : i32
    %169 = tpu.dynamic_rotate %135 by %c16_i32_75 dim 1 : vector<8x512xf32>, i32 -> vector<8x512xf32>
    %c7_76 = arith.constant 7 : index
    %c0_77 = arith.constant 0 : index
    %170 = vector.load %arg2[%c7_76, %c0_77] : memref<25x512xf32, #tpu.memory_space<vmem>>, vector<1x512xf32>
    %171 = vector.broadcast %170 : vector<1x512xf32> to vector<8x512xf32>
    %172 = arith.mulf %169, %171 : vector<8x512xf32>
    %c15_i32_78 = arith.constant 15 : i32
    %173 = tpu.dynamic_rotate %135 by %c15_i32_78 dim 1 : vector<8x512xf32>, i32 -> vector<8x512xf32>
    %c8_79 = arith.constant 8 : index
    %c0_80 = arith.constant 0 : index
    %174 = vector.load %arg2[%c8_79, %c0_80] : memref<25x512xf32, #tpu.memory_space<vmem>>, vector<1x512xf32>
    %175 = vector.broadcast %174 : vector<1x512xf32> to vector<8x512xf32>
    %176 = arith.mulf %173, %175 : vector<8x512xf32>
    %c14_i32_81 = arith.constant 14 : i32
    %177 = tpu.dynamic_rotate %135 by %c14_i32_81 dim 1 : vector<8x512xf32>, i32 -> vector<8x512xf32>
    %c9_82 = arith.constant 9 : index
    %c0_83 = arith.constant 0 : index
    %178 = vector.load %arg2[%c9_82, %c0_83] : memref<25x512xf32, #tpu.memory_space<vmem>>, vector<1x512xf32>
    %179 = vector.broadcast %178 : vector<1x512xf32> to vector<8x512xf32>
    %180 = arith.mulf %177, %179 : vector<8x512xf32>
    %181 = tpu.concatenate %164, %168, %172, %176, %180 in 0 : vector<8x512xf32>, vector<8x512xf32>, vector<8x512xf32>, vector<8x512xf32>, vector<8x512xf32> -> vector<40x512xf32>
    %182 = arith.truncf %181 : vector<40x512xf32> to vector<40x512xbf16>
    %c1_84 = arith.constant 1 : index
    %c0_85 = arith.constant 0 : index
    %c0_86 = arith.constant 0 : index
    %183 = vector.load %arg5[%c1_84, %c0_85, %c0_86] : memref<5x8x40xbf16, #tpu.memory_space<vmem>>, vector<1x8x40xbf16>
    %184 = vector.shape_cast %183 : vector<1x8x40xbf16> to vector<8x40xbf16>
    %cst_87 = arith.constant dense<0.000000e+00> : vector<8x512xf32>
    %185 = tpu.matmul %184, %182, %cst_87 {dimension_numbers = #tpu.dot_dimension_numbers<[1], [0], [0], [1], [0, 0, 1, 1], [], []>} : vector<8x40xbf16>, vector<40x512xbf16>, vector<8x512xf32> -> vector<8x512xf32>
    %186 = arith.addf %160, %185 : vector<8x512xf32>
    %c2_i32_88 = arith.constant 2 : i32
    %187 = tpu.dynamic_rotate %135 by %c2_i32_88 dim 1 : vector<8x512xf32>, i32 -> vector<8x512xf32>
    %c10_89 = arith.constant 10 : index
    %c0_90 = arith.constant 0 : index
    %188 = vector.load %arg2[%c10_89, %c0_90] : memref<25x512xf32, #tpu.memory_space<vmem>>, vector<1x512xf32>
    %189 = vector.broadcast %188 : vector<1x512xf32> to vector<8x512xf32>
    %190 = arith.mulf %187, %189 : vector<8x512xf32>
    %c1_i32_91 = arith.constant 1 : i32
    %191 = tpu.dynamic_rotate %135 by %c1_i32_91 dim 1 : vector<8x512xf32>, i32 -> vector<8x512xf32>
    %c11_92 = arith.constant 11 : index
    %c0_93 = arith.constant 0 : index
    %192 = vector.load %arg2[%c11_92, %c0_93] : memref<25x512xf32, #tpu.memory_space<vmem>>, vector<1x512xf32>
    %193 = vector.broadcast %192 : vector<1x512xf32> to vector<8x512xf32>
    %194 = arith.mulf %191, %193 : vector<8x512xf32>
    %c511_i32_94 = arith.constant 511 : i32
    %195 = tpu.dynamic_rotate %135 by %c511_i32_94 dim 1 : vector<8x512xf32>, i32 -> vector<8x512xf32>
    %c13_95 = arith.constant 13 : index
    %c0_96 = arith.constant 0 : index
    %196 = vector.load %arg2[%c13_95, %c0_96] : memref<25x512xf32, #tpu.memory_space<vmem>>, vector<1x512xf32>
    %197 = vector.broadcast %196 : vector<1x512xf32> to vector<8x512xf32>
    %198 = arith.mulf %195, %197 : vector<8x512xf32>
    %c510_i32_97 = arith.constant 510 : i32
    %199 = tpu.dynamic_rotate %135 by %c510_i32_97 dim 1 : vector<8x512xf32>, i32 -> vector<8x512xf32>
    %c14_98 = arith.constant 14 : index
    %c0_99 = arith.constant 0 : index
    %200 = vector.load %arg2[%c14_98, %c0_99] : memref<25x512xf32, #tpu.memory_space<vmem>>, vector<1x512xf32>
    %201 = vector.broadcast %200 : vector<1x512xf32> to vector<8x512xf32>
    %202 = arith.mulf %199, %201 : vector<8x512xf32>
    %203 = tpu.concatenate %190, %194, %135, %198, %202 in 0 : vector<8x512xf32>, vector<8x512xf32>, vector<8x512xf32>, vector<8x512xf32>, vector<8x512xf32> -> vector<40x512xf32>
    %204 = arith.truncf %203 : vector<40x512xf32> to vector<40x512xbf16>
    %c2_100 = arith.constant 2 : index
    %c0_101 = arith.constant 0 : index
    %c0_102 = arith.constant 0 : index
    %205 = vector.load %arg5[%c2_100, %c0_101, %c0_102] : memref<5x8x40xbf16, #tpu.memory_space<vmem>>, vector<1x8x40xbf16>
    %206 = vector.shape_cast %205 : vector<1x8x40xbf16> to vector<8x40xbf16>
    %cst_103 = arith.constant dense<0.000000e+00> : vector<8x512xf32>
    %207 = tpu.matmul %206, %204, %cst_103 {dimension_numbers = #tpu.dot_dimension_numbers<[1], [0], [0], [1], [0, 0, 1, 1], [], []>} : vector<8x40xbf16>, vector<40x512xbf16>, vector<8x512xf32> -> vector<8x512xf32>
    %208 = arith.addf %186, %207 : vector<8x512xf32>
    %c498_i32_104 = arith.constant 498 : i32
    %209 = tpu.dynamic_rotate %135 by %c498_i32_104 dim 1 : vector<8x512xf32>, i32 -> vector<8x512xf32>
    %c15_105 = arith.constant 15 : index
    %c0_106 = arith.constant 0 : index
    %210 = vector.load %arg2[%c15_105, %c0_106] : memref<25x512xf32, #tpu.memory_space<vmem>>, vector<1x512xf32>
    %211 = vector.broadcast %210 : vector<1x512xf32> to vector<8x512xf32>
    %212 = arith.mulf %209, %211 : vector<8x512xf32>
    %c497_i32_107 = arith.constant 497 : i32
    %213 = tpu.dynamic_rotate %135 by %c497_i32_107 dim 1 : vector<8x512xf32>, i32 -> vector<8x512xf32>
    %c16_108 = arith.constant 16 : index
    %c0_109 = arith.constant 0 : index
    %214 = vector.load %arg2[%c16_108, %c0_109] : memref<25x512xf32, #tpu.memory_space<vmem>>, vector<1x512xf32>
    %215 = vector.broadcast %214 : vector<1x512xf32> to vector<8x512xf32>
    %216 = arith.mulf %213, %215 : vector<8x512xf32>
    %c496_i32_110 = arith.constant 496 : i32
    %217 = tpu.dynamic_rotate %135 by %c496_i32_110 dim 1 : vector<8x512xf32>, i32 -> vector<8x512xf32>
    %c17_111 = arith.constant 17 : index
    %c0_112 = arith.constant 0 : index
    %218 = vector.load %arg2[%c17_111, %c0_112] : memref<25x512xf32, #tpu.memory_space<vmem>>, vector<1x512xf32>
    %219 = vector.broadcast %218 : vector<1x512xf32> to vector<8x512xf32>
    %220 = arith.mulf %217, %219 : vector<8x512xf32>
    %c495_i32_113 = arith.constant 495 : i32
    %221 = tpu.dynamic_rotate %135 by %c495_i32_113 dim 1 : vector<8x512xf32>, i32 -> vector<8x512xf32>
    %c18_114 = arith.constant 18 : index
    %c0_115 = arith.constant 0 : index
    %222 = vector.load %arg2[%c18_114, %c0_115] : memref<25x512xf32, #tpu.memory_space<vmem>>, vector<1x512xf32>
    %223 = vector.broadcast %222 : vector<1x512xf32> to vector<8x512xf32>
    %224 = arith.mulf %221, %223 : vector<8x512xf32>
    %c494_i32_116 = arith.constant 494 : i32
    %225 = tpu.dynamic_rotate %135 by %c494_i32_116 dim 1 : vector<8x512xf32>, i32 -> vector<8x512xf32>
    %c19_117 = arith.constant 19 : index
    %c0_118 = arith.constant 0 : index
    %226 = vector.load %arg2[%c19_117, %c0_118] : memref<25x512xf32, #tpu.memory_space<vmem>>, vector<1x512xf32>
    %227 = vector.broadcast %226 : vector<1x512xf32> to vector<8x512xf32>
    %228 = arith.mulf %225, %227 : vector<8x512xf32>
    %229 = tpu.concatenate %212, %216, %220, %224, %228 in 0 : vector<8x512xf32>, vector<8x512xf32>, vector<8x512xf32>, vector<8x512xf32>, vector<8x512xf32> -> vector<40x512xf32>
    %230 = arith.truncf %229 : vector<40x512xf32> to vector<40x512xbf16>
    %c3_119 = arith.constant 3 : index
    %c0_120 = arith.constant 0 : index
    %c0_121 = arith.constant 0 : index
    %231 = vector.load %arg5[%c3_119, %c0_120, %c0_121] : memref<5x8x40xbf16, #tpu.memory_space<vmem>>, vector<1x8x40xbf16>
    %232 = vector.shape_cast %231 : vector<1x8x40xbf16> to vector<8x40xbf16>
    %cst_122 = arith.constant dense<0.000000e+00> : vector<8x512xf32>
    %233 = tpu.matmul %232, %230, %cst_122 {dimension_numbers = #tpu.dot_dimension_numbers<[1], [0], [0], [1], [0, 0, 1, 1], [], []>} : vector<8x40xbf16>, vector<40x512xbf16>, vector<8x512xf32> -> vector<8x512xf32>
    %234 = arith.addf %208, %233 : vector<8x512xf32>
    %c482_i32_123 = arith.constant 482 : i32
    %235 = tpu.dynamic_rotate %135 by %c482_i32_123 dim 1 : vector<8x512xf32>, i32 -> vector<8x512xf32>
    %c20_124 = arith.constant 20 : index
    %c0_125 = arith.constant 0 : index
    %236 = vector.load %arg2[%c20_124, %c0_125] : memref<25x512xf32, #tpu.memory_space<vmem>>, vector<1x512xf32>
    %237 = vector.broadcast %236 : vector<1x512xf32> to vector<8x512xf32>
    %238 = arith.mulf %235, %237 : vector<8x512xf32>
    %c481_i32_126 = arith.constant 481 : i32
    %239 = tpu.dynamic_rotate %135 by %c481_i32_126 dim 1 : vector<8x512xf32>, i32 -> vector<8x512xf32>
    %c21_127 = arith.constant 21 : index
    %c0_128 = arith.constant 0 : index
    %240 = vector.load %arg2[%c21_127, %c0_128] : memref<25x512xf32, #tpu.memory_space<vmem>>, vector<1x512xf32>
    %241 = vector.broadcast %240 : vector<1x512xf32> to vector<8x512xf32>
    %242 = arith.mulf %239, %241 : vector<8x512xf32>
    %c480_i32_129 = arith.constant 480 : i32
    %243 = tpu.dynamic_rotate %135 by %c480_i32_129 dim 1 : vector<8x512xf32>, i32 -> vector<8x512xf32>
    %c22_130 = arith.constant 22 : index
    %c0_131 = arith.constant 0 : index
    %244 = vector.load %arg2[%c22_130, %c0_131] : memref<25x512xf32, #tpu.memory_space<vmem>>, vector<1x512xf32>
    %245 = vector.broadcast %244 : vector<1x512xf32> to vector<8x512xf32>
    %246 = arith.mulf %243, %245 : vector<8x512xf32>
    %c479_i32_132 = arith.constant 479 : i32
    %247 = tpu.dynamic_rotate %135 by %c479_i32_132 dim 1 : vector<8x512xf32>, i32 -> vector<8x512xf32>
    %c23_133 = arith.constant 23 : index
    %c0_134 = arith.constant 0 : index
    %248 = vector.load %arg2[%c23_133, %c0_134] : memref<25x512xf32, #tpu.memory_space<vmem>>, vector<1x512xf32>
    %249 = vector.broadcast %248 : vector<1x512xf32> to vector<8x512xf32>
    %250 = arith.mulf %247, %249 : vector<8x512xf32>
    %c478_i32_135 = arith.constant 478 : i32
    %251 = tpu.dynamic_rotate %135 by %c478_i32_135 dim 1 : vector<8x512xf32>, i32 -> vector<8x512xf32>
    %c24_136 = arith.constant 24 : index
    %c0_137 = arith.constant 0 : index
    %252 = vector.load %arg2[%c24_136, %c0_137] : memref<25x512xf32, #tpu.memory_space<vmem>>, vector<1x512xf32>
    %253 = vector.broadcast %252 : vector<1x512xf32> to vector<8x512xf32>
    %254 = arith.mulf %251, %253 : vector<8x512xf32>
    %255 = tpu.concatenate %238, %242, %246, %250, %254 in 0 : vector<8x512xf32>, vector<8x512xf32>, vector<8x512xf32>, vector<8x512xf32>, vector<8x512xf32> -> vector<40x512xf32>
    %256 = arith.truncf %255 : vector<40x512xf32> to vector<40x512xbf16>
    %c4_138 = arith.constant 4 : index
    %c0_139 = arith.constant 0 : index
    %c0_140 = arith.constant 0 : index
    %257 = vector.load %arg5[%c4_138, %c0_139, %c0_140] : memref<5x8x40xbf16, #tpu.memory_space<vmem>>, vector<1x8x40xbf16>
    %258 = vector.shape_cast %257 : vector<1x8x40xbf16> to vector<8x40xbf16>
    %cst_141 = arith.constant dense<0.000000e+00> : vector<8x512xf32>
    %259 = tpu.matmul %258, %256, %cst_141 {dimension_numbers = #tpu.dot_dimension_numbers<[1], [0], [0], [1], [0, 0, 1, 1], [], []>} : vector<8x40xbf16>, vector<40x512xbf16>, vector<8x512xf32> -> vector<8x512xf32>
    %260 = arith.addf %234, %259 : vector<8x512xf32>
    %c0_142 = arith.constant 0 : index
    %c0_143 = arith.constant 0 : index
    %261 = vector.load %arg6[%c0_142, %c0_143] : memref<8x1xf32, #tpu.memory_space<vmem>>, vector<8x1xf32>
    %262 = vector.broadcast %261 : vector<8x1xf32> to vector<8x512xf32>
    %263 = arith.addf %260, %262 : vector<8x512xf32>
    %264 = arith.addf %263, %1 : vector<8x512xf32>
    %c0_144 = arith.constant 0 : index
    %c0_145 = arith.constant 0 : index
    %c0_146 = arith.constant 0 : index
    %265 = vector.load %arg8[%c0_144, %c0_145, %c0_146] : memref<1x8x512xf32, #tpu.memory_space<vmem>>, vector<1x8x512xf32>
    %266 = vector.shape_cast %265 : vector<1x8x512xf32> to vector<8x512xf32>
    %267 = vector.shape_cast %264 : vector<8x512xf32> to vector<1x8x512xf32>
    tpu.vector_store %arg8[%c0_144, %c0_145, %c0_146], %267 {strides = array<i32>} : memref<1x8x512xf32, #tpu.memory_space<vmem>>, vector<1x8x512xf32>,
    return
  }
  func.func @transform_0(%arg0: i32) -> (i32, i32, i32) {
    %c0_i32 = arith.constant 0 : i32
    %c0_i32_0 = arith.constant 0 : i32
    %c0_i32_1 = arith.constant 0 : i32
    return %arg0, %c0_i32, %c0_i32_0 : i32, i32, i32
  }
  func.func @transform_1(%arg0: i32) -> (i32, i32) {
    %c0_i32 = arith.constant 0 : i32
    %c0_i32_0 = arith.constant 0 : i32
    %c0_i32_1 = arith.constant 0 : i32
    return %c0_i32, %c0_i32_0 : i32, i32
  }
  func.func @transform_2(%arg0: i32) -> (i32, i32, i32) {
    %c0_i32 = arith.constant 0 : i32
    %c0_i32_0 = arith.constant 0 : i32
    %c0_i32_1 = arith.constant 0 : i32
    %c0_i32_2 = arith.constant 0 : i32
    return %c0_i32, %c0_i32_0, %c0_i32_1 : i32, i32, i32
  }
  func.func @transform_3(%arg0: i32) -> (i32, i32) {
    %c0_i32 = arith.constant 0 : i32
    %c0_i32_0 = arith.constant 0 : i32
    %c0_i32_1 = arith.constant 0 : i32
    return %c0_i32, %c0_i32_0 : i32, i32
  }
  func.func @transform_4(%arg0: i32) -> (i32, i32, i32) {
    %c0_i32 = arith.constant 0 : i32
    %c0_i32_0 = arith.constant 0 : i32
    %c0_i32_1 = arith.constant 0 : i32
    %c0_i32_2 = arith.constant 0 : i32
    return %c0_i32, %c0_i32_0, %c0_i32_1 : i32, i32, i32
  }
  func.func @transform_5(%arg0: i32) -> (i32, i32) {
    %c0_i32 = arith.constant 0 : i32
    %c0_i32_0 = arith.constant 0 : i32
    %c0_i32_1 = arith.constant 0 : i32
    return %c0_i32, %c0_i32_0 : i32, i32
  }
  func.func @transform_6(%arg0: i32) -> i32 {
    %c0_i32 = arith.constant 0 : i32
    %c0_i32_0 = arith.constant 0 : i32
    return %c0_i32 : i32
  }
  func.func @transform_7(%arg0: i32) -> (i32, i32, i32) {
    %c0_i32 = arith.constant 0 : i32
    %c0_i32_0 = arith.constant 0 : i32
    %c0_i32_1 = arith.constant 0 : i32
    return %arg0, %c0_i32, %c0_i32_0 : i32, i32, i32
  }
}

</mosaic_0001>

<llo_original>
// kernel: tpu_custom_call.1
$region0: #{tpu_custom_call.1}
  #allocation0 [shape = 'u32[]', space=smem, size = 0x4, offset = 0x4, fixed_abs, tag = 'smem constant byte address 0x4 - core index']
  #allocation1 [shape = 'u32[144,128]{1,0:T(1,128)}', space=vmem, size = 0x12000, scoped, tag = 'internal scratch']
  #allocation2 [shape = 'f32[1]{0:T(128)S(6)}', space=smem, size = 0x200, scoped, tag = 'scoped memory for tpu_custom_call.1']
  %s0 = inlined_call_operand.hbm [shape: f32[2,8,512], index: 0, kind: input, shape index: {}]
  %s1 = inlined_call_operand.hbm [shape: f32[25,512], index: 1, kind: input, shape index: {}]
  %s2 = inlined_call_operand.vmem [shape: bf16[5,8,40], index: 2, kind: input, shape index: {}]
  %s3 = inlined_call_operand.vmem [shape: f32[8,1], index: 3, kind: input, shape index: {}]
  %s4 = inlined_call_operand.hbm [shape: bf16[5,8,40], index: 4, kind: input, shape index: {}]
  %s5 = inlined_call_operand.vmem [shape: f32[8,1], index: 5, kind: input, shape index: {}]
  %s6 = inlined_call_operand.<no memory space> [shape: f32[1], index: 6, kind: input, shape index: {}]
  %s7 = inlined_call_operand.hbm [shape: f32[2,8,512], index: 7, kind: output, shape index: {}]
  %s8 = sld [smem:[#allocation0]]
  $region73: #{tpu_custom_call.1} parent=0
    _
  %s10 = ssub.s32 1, %s8
  %s11 = scalar_select 0, %s10, %s8
  %12 = sst [smem:[#allocation2]] %s6
  $region1: #{tpu_custom_call.1} parent=0
    #allocation3 [shape = 'u8[32768]{0}', space=vmem, size = 0x8000, scoped, tag = 'input window, operand 0']
    #allocation4 [shape = 's32[2]{0}', space=sflag, size = 0x8, scoped, tag = 'scoped memory for tpu_custom_call.1']
    #allocation5 [shape = 's32[2]{0}', space=sflag, size = 0x8, scoped, tag = 'scoped memory for tpu_custom_call.1']
    #allocation6 [shape = 'u8[65536]{0}', space=vmem, size = 0x10000, scoped, tag = 'input window, operand 1, single buffered']
    #allocation7 [shape = 's32[1]{0}', space=sflag, size = 0x4, scoped, tag = 'scoped memory for tpu_custom_call.1']
    #allocation8 [shape = 'u8[10240]{0}', space=vmem, size = 0x2800, scoped, tag = 'input window, operand 4, single buffered']
    #allocation9 [shape = 'u8[32768]{0}', space=vmem, size = 0x8000, scoped, tag = 'output window, operand 0']
    %13 = vsyncpa [#allocation4], 0
    %s14 = scalar_lea.sflag [#allocation4], 1
    %15 = vsyncpa %s14, 0
    %16 = vsyncpa [#allocation7], 0
    %17 = vsyncpa [#allocation5], 0
    %s18 = scalar_lea.sflag [#allocation5], 1
    %19 = vsyncpa %s18, 0
    loop: start=0, step=1, limit=4
    $region2: #{tpu_custom_call.1} parent=1 // loop_pre_header
      _
    $region3: #{tpu_custom_call.1} parent=1 // loop_header
      %s21 = sphi 0, %s25
      %p22 = scmp.ge.s32.totalorder %s21, 4
      %s31 = sphi 0, %s33
      %s34 = sphi 0, %s31
      %s35 = sphi 0, %s34
      %s51 = sphi 0, %s35
      %s55 = sphi 0, %s55
      %s57 = sphi 0, %s55
      %s58 = sphi 0, %s57
      %s72 = sphi 0, %s58
      %s76 = sphi 0, %s76
      %s78 = sphi 0, %s76
      %s79 = sphi 0, %s78
      %s93 = sphi 0, %s79
      %s97 = sphi 0, %s97
      %s99 = sphi 0, %s97
      %s100 = sphi 0, %s99
      %s114 = sphi 0, %s100
      %s118 = sphi 0, %s118
      %s120 = sphi 0, %s118
      %s121 = sphi 0, %s120
      %s135 = sphi 0, %s121
      %s139 = sphi 0, %s139
      %s141 = sphi 0, %s139
      %s142 = sphi 0, %s141
      %s156 = sphi 0, %s142
      %s160 = sphi 0, %s160
      %s162 = sphi 0, %s160
      %s163 = sphi 0, %s162
      %s177 = sphi 0, %s163
      %s183 = sphi 0, %s185
      %s186 = sphi 0, %s183
      %s187 = sphi 0, %s186
      %s203 = sphi 0, %s187
    $region4: #{tpu_custom_call.1} parent=1 // loop_header_branch
      %24 = sbr.rel (%p22) target = $region8
    $region5: #{tpu_custom_call.1} parent=1 // loop_body
      %s26 = ssub.s32 %s21, 1
      %s27 = ssub.s32 %s21, 2
      %s28 = sadd.s32 %s21, 1
      %s29 = ssub.s32 %s21, %s28
      %p30 = scmp.eq.s32.totalorder %s29, 0
      %s32 = sadd.s32 %s31, 1
      %s33 = scalar_select %p30, %s31, %s32
      %p36 = pneg %p30
      %p37 = scmp.eq.s32.totalorder %s21, 1
      %p38 = por %p36, %p37
      %p39 = scmp.ne.s32.totalorder %s31, %s34
      %p40 = scmp.eq.s32.totalorder %s21, 0
      %p41 = por %p39, %p40
      %p42 = scmp.ne.s32.totalorder %s31, %s34
      %p43 = scmp.eq.s32.totalorder %s26, 1
      %p44 = por %p42, %p43
      %p45 = scmp.ne.s32.totalorder %s34, %s35
      %p46 = scmp.eq.s32.totalorder %s26, 0
      %p47 = por %p45, %p46
      %p48 = scmp.ne.s32.totalorder %s34, %s35
      %p49 = scmp.eq.s32.totalorder %s27, 1
      %p50 = por %p48, %p49
      %p52 = scmp.ne.s32.totalorder %s35, %s51
      %p53 = scmp.eq.s32.totalorder %s27, 0
      %p54 = por %p52, %p53
      %s56 = sadd.s32 %s55, 1
      %p59 = scmp.eq.s32.totalorder %s21, 1
      %p60 = scmp.ne.s32.totalorder %s55, %s57
      %p61 = scmp.eq.s32.totalorder %s21, 0
      %p62 = por %p60, %p61
      %p63 = scmp.ne.s32.totalorder %s55, %s57
      %p64 = scmp.eq.s32.totalorder %s26, 1
      %p65 = por %p63, %p64
      %p66 = scmp.ne.s32.totalorder %s57, %s58
      %p67 = scmp.eq.s32.totalorder %s26, 0
      %p68 = por %p66, %p67
      %p69 = scmp.ne.s32.totalorder %s57, %s58
      %p70 = scmp.eq.s32.totalorder %s27, 1
      %p71 = por %p69, %p70
      %p73 = scmp.ne.s32.totalorder %s58, %s72
      %p74 = scmp.eq.s32.totalorder %s27, 0
      %p75 = por %p73, %p74
      %s77 = sadd.s32 %s76, 1
      %p80 = scmp.eq.s32.totalorder %s21, 1
      %p81 = scmp.ne.s32.totalorder %s76, %s78
      %p82 = scmp.eq.s32.totalorder %s21, 0
      %p83 = por %p81, %p82
      %p84 = scmp.ne.s32.totalorder %s76, %s78
      %p85 = scmp.eq.s32.totalorder %s26, 1
      %p86 = por %p84, %p85
      %p87 = scmp.ne.s32.totalorder %s78, %s79
      %p88 = scmp.eq.s32.totalorder %s26, 0
      %p89 = por %p87, %p88
      %p90 = scmp.ne.s32.totalorder %s78, %s79
      %p91 = scmp.eq.s32.totalorder %s27, 1
      %p92 = por %p90, %p91
      %p94 = scmp.ne.s32.totalorder %s79, %s93
      %p95 = scmp.eq.s32.totalorder %s27, 0
      %p96 = por %p94, %p95
      %s98 = sadd.s32 %s97, 1
      %p101 = scmp.eq.s32.totalorder %s21, 1
      %p102 = scmp.ne.s32.totalorder %s97, %s99
      %p103 = scmp.eq.s32.totalorder %s21, 0
      %p104 = por %p102, %p103
      %p105 = scmp.ne.s32.totalorder %s97, %s99
      %p106 = scmp.eq.s32.totalorder %s26, 1
      %p107 = por %p105, %p106
      %p108 = scmp.ne.s32.totalorder %s99, %s100
      %p109 = scmp.eq.s32.totalorder %s26, 0
      %p110 = por %p108, %p109
      %p111 = scmp.ne.s32.totalorder %s99, %s100
      %p112 = scmp.eq.s32.totalorder %s27, 1
      %p113 = por %p111, %p112
      %p115 = scmp.ne.s32.totalorder %s100, %s114
      %p116 = scmp.eq.s32.totalorder %s27, 0
      %p117 = por %p115, %p116
      %s119 = sadd.s32 %s118, 1
      %p122 = scmp.eq.s32.totalorder %s21, 1
      %p123 = scmp.ne.s32.totalorder %s118, %s120
      %p124 = scmp.eq.s32.totalorder %s21, 0
      %p125 = por %p123, %p124
      %p126 = scmp.ne.s32.totalorder %s118, %s120
      %p127 = scmp.eq.s32.totalorder %s26, 1
      %p128 = por %p126, %p127
      %p129 = scmp.ne.s32.totalorder %s120, %s121
      %p130 = scmp.eq.s32.totalorder %s26, 0
      %p131 = por %p129, %p130
      %p132 = scmp.ne.s32.totalorder %s120, %s121
      %p133 = scmp.eq.s32.totalorder %s27, 1
      %p134 = por %p132, %p133
      %p136 = scmp.ne.s32.totalorder %s121, %s135
      %p137 = scmp.eq.s32.totalorder %s27, 0
      %p138 = por %p136, %p137
      %s140 = sadd.s32 %s139, 1
      %p143 = scmp.eq.s32.totalorder %s21, 1
      %p144 = scmp.ne.s32.totalorder %s139, %s141
      %p145 = scmp.eq.s32.totalorder %s21, 0
      %p146 = por %p144, %p145
      %p147 = scmp.ne.s32.totalorder %s139, %s141
      %p148 = scmp.eq.s32.totalorder %s26, 1
      %p149 = por %p147, %p148
      %p150 = scmp.ne.s32.totalorder %s141, %s142
      %p151 = scmp.eq.s32.totalorder %s26, 0
      %p152 = por %p150, %p151
      %p153 = scmp.ne.s32.totalorder %s141, %s142
      %p154 = scmp.eq.s32.totalorder %s27, 1
      %p155 = por %p153, %p154
      %p157 = scmp.ne.s32.totalorder %s142, %s156
      %p158 = scmp.eq.s32.totalorder %s27, 0
      %p159 = por %p157, %p158
      %s161 = sadd.s32 %s160, 1
      %p164 = scmp.eq.s32.totalorder %s21, 1
      %p165 = scmp.ne.s32.totalorder %s160, %s162
      %p166 = scmp.eq.s32.totalorder %s21, 0
      %p167 = por %p165, %p166
      %p168 = scmp.ne.s32.totalorder %s160, %s162
      %p169 = scmp.eq.s32.totalorder %s26, 1
      %p170 = por %p168, %p169
      %p171 = scmp.ne.s32.totalorder %s162, %s163
      %p172 = scmp.eq.s32.totalorder %s26, 0
      %p173 = por %p171, %p172
      %p174 = scmp.ne.s32.totalorder %s162, %s163
      %p175 = scmp.eq.s32.totalorder %s27, 1
      %p176 = por %p174, %p175
      %p178 = scmp.ne.s32.totalorder %s163, %s177
      %p179 = scmp.eq.s32.totalorder %s27, 0
      %p180 = por %p178, %p179
      %s181 = ssub.s32 %s21, %s28
      %p182 = scmp.eq.s32.totalorder %s181, 0
      %s184 = sadd.s32 %s183, 1
      %s185 = scalar_select %p182, %s183, %s184
      %p188 = pneg %p182
      %p189 = scmp.eq.s32.totalorder %s21, 1
      %p190 = por %p188, %p189
      %p191 = scmp.ne.s32.totalorder %s183, %s186
      %p192 = scmp.eq.s32.totalorder %s21, 0
      %p193 = por %p191, %p192
      %p194 = scmp.ne.s32.totalorder %s183, %s186
      %p195 = scmp.eq.s32.totalorder %s26, 1
      %p196 = por %p194, %p195
      %p197 = scmp.ne.s32.totalorder %s186, %s187
      %p198 = scmp.eq.s32.totalorder %s26, 0
      %p199 = por %p197, %p198
      %p200 = scmp.ne.s32.totalorder %s186, %s187
      %p201 = scmp.eq.s32.totalorder %s27, 1
      %p202 = por %p200, %p201
      %p204 = scmp.ne.s32.totalorder %s187, %s203
      %p205 = scmp.eq.s32.totalorder %s27, 0
      %p206 = por %p204, %p205
      %p207 = scmp.le.s32.totalorder 1, %s21
      %p208 = scmp.lt.s32.totalorder %s21, 3
      %p209 = pnand %p207, %p208
      %p210 = pneg %p209
      // Predicated region
      $region9: #{tpu_custom_call.1} parent=5 // pred_check
        _
      $region10: #{tpu_custom_call.1} parent=5 // pred_check_branch
        %212 = sbr.rel (%p209) target = $region12
      $region11: #{tpu_custom_call.1} parent=5 // pred_region
        %s213 = ssub.s32 %s21, 1
        // Predicated region
        $region13: #{tpu_custom_call.1} parent=11 // pred_check
          %p214 = pneg %p68
        $region14: #{tpu_custom_call.1} parent=11 // pred_check_branch
          %216 = sbr.rel (%p214) target = $region16
        $region15: #{tpu_custom_call.1} parent=11 // pred_region
          %s218 = ssub.s32 2048, 2048
          %219 = vsyncadd [#allocation7], %s218
          %s220 = sshll.u32 [#allocation6], 4
          %s221 = int_to_ptr.vmem [resolvable:$true] %s220
          %226 = dma.hbm_to_vmem [thread:$0]  %s1, 2048, %s221, [#allocation7], 512, 512, 32
        $region16: #{tpu_custom_call.1} parent=11 // pred_fallthru
          _
        // Predicated region
        $region17: #{tpu_custom_call.1} parent=11 // pred_check
          %p227 = pneg %p89
        $region18: #{tpu_custom_call.1} parent=11 // pred_check_branch
          %229 = sbr.rel (%p227) target = $region20
        $region19: #{tpu_custom_call.1} parent=11 // pred_region
          _
        $region20: #{tpu_custom_call.1} parent=11 // pred_fallthru
          _
        // Predicated region
        $region21: #{tpu_custom_call.1} parent=11 // pred_check
          %p230 = pneg %p110
        $region22: #{tpu_custom_call.1} parent=11 // pred_check_branch
          %232 = sbr.rel (%p230) target = $region24
        $region23: #{tpu_custom_call.1} parent=11 // pred_region
          _
        $region24: #{tpu_custom_call.1} parent=11 // pred_fallthru
          _
        // Predicated region
        $region25: #{tpu_custom_call.1} parent=11 // pred_check
          %p233 = pneg %p131
        $region26: #{tpu_custom_call.1} parent=11 // pred_check_branch
          %235 = sbr.rel (%p233) target = $region28
        $region27: #{tpu_custom_call.1} parent=11 // pred_region
          %s237 = ssub.s32 320, 320
          %238 = vsyncadd [#allocation7], %s237
          %s239 = sshll.u32 [#allocation8], 4
          %s240 = int_to_ptr.vmem [resolvable:$true] %s239
          %245 = dma.hbm_to_vmem [thread:$0]  %s4, 320, %s240, [#allocation7], 64, 64, 4
        $region28: #{tpu_custom_call.1} parent=11 // pred_fallthru
          _
        // Predicated region
        $region29: #{tpu_custom_call.1} parent=11 // pred_check
          %p246 = pneg %p152
        $region30: #{tpu_custom_call.1} parent=11 // pred_check_branch
          %248 = sbr.rel (%p246) target = $region32
        $region31: #{tpu_custom_call.1} parent=11 // pred_region
          _
        $region32: #{tpu_custom_call.1} parent=11 // pred_fallthru
          _
        // Predicated region
        $region33: #{tpu_custom_call.1} parent=11 // pred_check
          %p249 = pneg %p173
        $region34: #{tpu_custom_call.1} parent=11 // pred_check_branch
          %251 = sbr.rel (%p249) target = $region36
        $region35: #{tpu_custom_call.1} parent=11 // pred_region
          _
        $region36: #{tpu_custom_call.1} parent=11 // pred_fallthru
          _
      $region12: #{tpu_custom_call.1} parent=5 // pred_fallthru
        _
      %p252 = scmp.lt.s32.totalorder %s21, 2
      // Predicated region
      $region37: #{tpu_custom_call.1} parent=5 // pred_check
        %p253 = pneg %p252
      $region38: #{tpu_custom_call.1} parent=5 // pred_check_branch
        %255 = sbr.rel (%p253) target = $region40
      $region39: #{tpu_custom_call.1} parent=5 // pred_region
        // Predicated region
        $region41: #{tpu_custom_call.1} parent=39 // pred_check
          %p256 = pneg %p41
        $region42: #{tpu_custom_call.1} parent=39 // pred_check_branch
          %258 = sbr.rel (%p256) target = $region44
        $region43: #{tpu_custom_call.1} parent=39 // pred_region
          %s259 = sand.u32 %s31, 1
          %s260 = scalar_lea.sflag [#allocation4], %s259
          %s261 = sand.u32 %s31, 1
          %s262 = smul.addr %s261, 32
          %s263 = scalar_lea.vmem [#allocation3], %s262
          %s265 = ssub.s32 512, 512
          %266 = vsyncadd %s260, %s265
          %s267 = smul.addr %s21, 4
          %s268 = smul.addr %s267, 128
          %s269 = scalar_lea.hbm %s0, %s268
          %s271 = sshll.u32 %s263, 4
          %s272 = int_to_ptr.vmem [resolvable:$true] %s271
          %274 = dma.hbm_to_vmem [thread:$0]  %s269, 512, %s272, %s260
        $region44: #{tpu_custom_call.1} parent=39 // pred_fallthru
          _
      $region40: #{tpu_custom_call.1} parent=5 // pred_fallthru
        _
      %p275 = scmp.le.s32.totalorder 1, %s21
      %p276 = scmp.lt.s32.totalorder %s21, 3
      %p277 = pnand %p275, %p276
      %p278 = pneg %p277
      // Predicated region
      $region45: #{tpu_custom_call.1} parent=5 // pred_check
        _
      $region46: #{tpu_custom_call.1} parent=5 // pred_check_branch
        %280 = sbr.rel (%p277) target = $region48
      $region47: #{tpu_custom_call.1} parent=5 // pred_region
        %s281 = ssub.s32 %s21, 1
        %s282 = sand.u32 %s34, 1
        %s283 = scalar_lea.sflag [#allocation4], %s282
        %s284 = sand.u32 %s34, 1
        %s285 = smul.addr %s284, 32
        %s286 = scalar_lea.vmem [#allocation3], %s285
        // Predicated region
        $region49: #{tpu_custom_call.1} parent=47 // pred_check
          %p287 = pneg %p47
        $region50: #{tpu_custom_call.1} parent=47 // pred_check_branch
          %289 = sbr.rel (%p287) target = $region52
        $region51: #{tpu_custom_call.1} parent=47 // pred_region
          %290 = dma.done %s283, 512
        $region52: #{tpu_custom_call.1} parent=47 // pred_fallthru
          _
        // Predicated region
        $region53: #{tpu_custom_call.1} parent=47 // pred_check
          %p291 = pneg %p68
        $region54: #{tpu_custom_call.1} parent=47 // pred_check_branch
          %293 = sbr.rel (%p291) target = $region56
        $region55: #{tpu_custom_call.1} parent=47 // pred_region
          %294 = dma.done [#allocation7], 2048
        $region56: #{tpu_custom_call.1} parent=47 // pred_fallthru
          _
        // Predicated region
        $region57: #{tpu_custom_call.1} parent=47 // pred_check
          %p295 = pneg %p131
        $region58: #{tpu_custom_call.1} parent=47 // pred_check_branch
          %297 = sbr.rel (%p295) target = $region60
        $region59: #{tpu_custom_call.1} parent=47 // pred_region
          %298 = dma.done [#allocation7], 320
        $region60: #{tpu_custom_call.1} parent=47 // pred_fallthru
          _
        %s299 = sand.u32 %s34, 1
        %s300 = scalar_lea.sflag [#allocation4], %s299
        %s301 = sand.u32 %s34, 1
        %s302 = smul.addr %s301, 32
        %s303 = scalar_lea.vmem [#allocation3], %s302
        %p304 = pneg %p47
        %p305 = pneg %p44
        %p306 = pneg %p68
        %p307 = pneg %p65
        %p308 = pneg %p89
        %p309 = pneg %p86
        %p310 = pneg %p110
        %p311 = pneg %p107
        %p312 = pneg %p131
        %p313 = pneg %p128
        %p314 = pneg %p152
        %p315 = pneg %p149
        %p316 = pneg %p173
        %p317 = pneg %p170
        %p318 = pneg %p199
        %p319 = pneg %p196
        %s320 = sand.u32 %s186, 1
        %s321 = scalar_lea.sflag [#allocation5], %s320
        %s322 = sand.u32 %s186, 1
        %s323 = smul.addr %s322, 32
        %s324 = scalar_lea.vmem [#allocation9], %s323
        %v326 = vld [vmem:[%s286] sm:$0xff]
        %v327 = vld [vmem:[%s286 + $0x8] sm:$0xff]
        %v328 = vld [vmem:[%s286 + $0x10] sm:$0xff]
        %v329 = vld [vmem:[%s286 + $0x18] sm:$0xff]
        %330 = vrot.lane.b32.xlu0 %v326, 34
        %v331 = vpop.permute.xlu0 %330
        %332 = vrot.lane.b32.xlu0 %v327, 34
        %v333 = vpop.permute.xlu0 %332
        %334 = vrot.lane.b32.xlu0 %v328, 34
        %v335 = vpop.permute.xlu0 %334
        %336 = vrot.lane.b32.xlu0 %v329, 34
        %v337 = vpop.permute.xlu0 %336
        %v338 = vlaneseq
        %v339 = vand.u32 %v338, 127
        %vm340 = vcmp.lt.s32.totalorder %v339, 34
        %v341 = vsel %vm340, %v335, %v337
        %v342 = vsel %vm340, %v333, %v335
        %v343 = vsel %vm340, %v331, %v333
        %v344 = vsel %vm340, %v337, %v331
        %v345 = vld [vmem:[#allocation6] ss:$8 sm:$0xf]
        %v347 = vlaneseq
        %v348 = vshrl.u32 %v347, 7
        %v349 = vsub.s32 0, %v348
        %v350 = vrot.slane %v345, %v349
        %v351 = vlaneseq
        %v352 = vshrl.u32 %v351, 7
        %v353 = vsub.s32 1, %v352
        %v354 = vrot.slane %v345, %v353
        %v355 = vlaneseq
        %v356 = vshrl.u32 %v355, 7
        %v357 = vsub.s32 2, %v356
        %v358 = vrot.slane %v345, %v357
        %v359 = vlaneseq
        %v360 = vshrl.u32 %v359, 7
        %v361 = vsub.s32 3, %v360
        %v362 = vrot.slane %v345, %v361
        %v367 = vmul.f32 %v344, %v350
        %v368 = vmul.f32 %v343, %v354
        %v369 = vmul.f32 %v342, %v358
        %v370 = vmul.f32 %v341, %v362
        %371 = vrot.lane.b32.xlu0 %v326, 33
        %v372 = vpop.permute.xlu0 %371
        %373 = vrot.lane.b32.xlu0 %v327, 33
        %v374 = vpop.permute.xlu0 %373
        %375 = vrot.lane.b32.xlu0 %v328, 33
        %v376 = vpop.permute.xlu0 %375
        %377 = vrot.lane.b32.xlu0 %v329, 33
        %v378 = vpop.permute.xlu0 %377
        %vm379 = vcmp.lt.s32.totalorder %v339, 33
        %v380 = vsel %vm379, %v376, %v378
        %v381 = vsel %vm379, %v374, %v376
        %v382 = vsel %vm379, %v372, %v374
        %v383 = vsel %vm379, %v378, %v372
        %s384 = scalar_lea.vmem [#allocation6], 1
        %v385 = vld [vmem:[%s384] ss:$8 sm:$0xf]
        %v387 = vlaneseq
        %v388 = vshrl.u32 %v387, 7
        %v389 = vsub.s32 0, %v388
        %v390 = vrot.slane %v385, %v389
        %v391 = vlaneseq
        %v392 = vshrl.u32 %v391, 7
        %v393 = vsub.s32 1, %v392
        %v394 = vrot.slane %v385, %v393
        %v395 = vlaneseq
        %v396 = vshrl.u32 %v395, 7
        %v397 = vsub.s32 2, %v396
        %v398 = vrot.slane %v385, %v397
        %v399 = vlaneseq
        %v400 = vshrl.u32 %v399, 7
        %v401 = vsub.s32 3, %v400
        %v402 = vrot.slane %v385, %v401
        %v407 = vmul.f32 %v383, %v390
        %v408 = vmul.f32 %v382, %v394
        %v409 = vmul.f32 %v381, %v398
        %v410 = vmul.f32 %v380, %v402
        %411 = vrot.lane.b32.xlu0 %v326, 32
        %v412 = vpop.permute.xlu0 %411
        %413 = vrot.lane.b32.xlu0 %v327, 32
        %v414 = vpop.permute.xlu0 %413
        %415 = vrot.lane.b32.xlu0 %v328, 32
        %v416 = vpop.permute.xlu0 %415
        %417 = vrot.lane.b32.xlu0 %v329, 32
        %v418 = vpop.permute.xlu0 %417
        %vm419 = vcmp.lt.s32.totalorder %v339, 32
        %v420 = vsel %vm419, %v416, %v418
        %v421 = vsel %vm419, %v414, %v416
        %v422 = vsel %vm419, %v412, %v414
        %v423 = vsel %vm419, %v418, %v412
        %s424 = scalar_lea.vmem [#allocation6], 2
        %v425 = vld [vmem:[%s424] ss:$8 sm:$0xf]
        %v427 = vlaneseq
        %v428 = vshrl.u32 %v427, 7
        %v429 = vsub.s32 0, %v428
        %v430 = vrot.slane %v425, %v429
        %v431 = vlaneseq
        %v432 = vshrl.u32 %v431, 7
        %v433 = vsub.s32 1, %v432
        %v434 = vrot.slane %v425, %v433
        %v435 = vlaneseq
        %v436 = vshrl.u32 %v435, 7
        %v437 = vsub.s32 2, %v436
        %v438 = vrot.slane %v425, %v437
        %v439 = vlaneseq
        %v440 = vshrl.u32 %v439, 7
        %v441 = vsub.s32 3, %v440
        %v442 = vrot.slane %v425, %v441
        %v447 = vmul.f32 %v423, %v430
        %v448 = vmul.f32 %v422, %v434
        %v449 = vmul.f32 %v421, %v438
        %v450 = vmul.f32 %v420, %v442
        %451 = vrot.lane.b32.xlu0 %v326, 31
        %v452 = vpop.permute.xlu0 %451
        %453 = vrot.lane.b32.xlu0 %v327, 31
        %v454 = vpop.permute.xlu0 %453
        %455 = vrot.lane.b32.xlu0 %v328, 31
        %v456 = vpop.permute.xlu0 %455
        %457 = vrot.lane.b32.xlu0 %v329, 31
        %v458 = vpop.permute.xlu0 %457
        %vm459 = vcmp.lt.s32.totalorder %v339, 31
        %v460 = vsel %vm459, %v456, %v458
        %v461 = vsel %vm459, %v454, %v456
        %v462 = vsel %vm459, %v452, %v454
        %v463 = vsel %vm459, %v458, %v452
        %s464 = scalar_lea.vmem [#allocation6], 3
        %v465 = vld [vmem:[%s464] ss:$8 sm:$0xf]
        %v467 = vlaneseq
        %v468 = vshrl.u32 %v467, 7
        %v469 = vsub.s32 0, %v468
        %v470 = vrot.slane %v465, %v469
        %v471 = vlaneseq
        %v472 = vshrl.u32 %v471, 7
        %v473 = vsub.s32 1, %v472
        %v474 = vrot.slane %v465, %v473
        %v475 = vlaneseq
        %v476 = vshrl.u32 %v475, 7
        %v477 = vsub.s32 2, %v476
        %v478 = vrot.slane %v465, %v477
        %v479 = vlaneseq
        %v480 = vshrl.u32 %v479, 7
        %v481 = vsub.s32 3, %v480
        %v482 = vrot.slane %v465, %v481
        %v487 = vmul.f32 %v463, %v470
        %v488 = vmul.f32 %v462, %v474
        %v489 = vmul.f32 %v461, %v478
        %v490 = vmul.f32 %v460, %v482
        %491 = vrot.lane.b32.xlu0 %v326, 30
        %v492 = vpop.permute.xlu0 %491
        %493 = vrot.lane.b32.xlu0 %v327, 30
        %v494 = vpop.permute.xlu0 %493
        %495 = vrot.lane.b32.xlu0 %v328, 30
        %v496 = vpop.permute.xlu0 %495
        %497 = vrot.lane.b32.xlu0 %v329, 30
        %v498 = vpop.permute.xlu0 %497
        %vm499 = vcmp.lt.s32.totalorder %v339, 30
        %v500 = vsel %vm499, %v496, %v498
        %v501 = vsel %vm499, %v494, %v496
        %v502 = vsel %vm499, %v492, %v494
        %v503 = vsel %vm499, %v498, %v492
        %s504 = scalar_lea.vmem [#allocation6], 4
        %v505 = vld [vmem:[%s504] ss:$8 sm:$0xf]
        %v507 = vlaneseq
        %v508 = vshrl.u32 %v507, 7
        %v509 = vsub.s32 0, %v508
        %v510 = vrot.slane %v505, %v509
        %v511 = vlaneseq
        %v512 = vshrl.u32 %v511, 7
        %v513 = vsub.s32 1, %v512
        %v514 = vrot.slane %v505, %v513
        %v515 = vlaneseq
        %v516 = vshrl.u32 %v515, 7
        %v517 = vsub.s32 2, %v516
        %v518 = vrot.slane %v505, %v517
        %v519 = vlaneseq
        %v520 = vshrl.u32 %v519, 7
        %v521 = vsub.s32 3, %v520
        %v522 = vrot.slane %v505, %v521
        %v527 = vmul.f32 %v503, %v510
        %v528 = vmul.f32 %v502, %v514
        %v529 = vmul.f32 %v501, %v518
        %v530 = vmul.f32 %v500, %v522
        %v531 = vpack.c.bf16 %v407, %v367
        %v532 = vpack.c.bf16 %v408, %v368
        %v533 = vpack.c.bf16 %v409, %v369
        %v534 = vpack.c.bf16 %v410, %v370
        %v535 = vpack.c.bf16 %v487, %v447
        %v536 = vpack.c.bf16 %v488, %v448
        %v537 = vpack.c.bf16 %v489, %v449
        %v538 = vpack.c.bf16 %v490, %v450
        %v539 = vpack.c.bf16 %v527, %v527
        %v540 = vpack.c.bf16 %v528, %v528
        %v541 = vpack.c.bf16 %v529, %v529
        %v542 = vpack.c.bf16 %v530, %v530
        %v543 = vld [vmem:[%s2] sm:$0xf]
        %544 = vrot.lane.b32.xlu0 %v326, 18
        %v545 = vpop.permute.xlu0 %544
        %546 = vrot.lane.b32.xlu0 %v327, 18
        %v547 = vpop.permute.xlu0 %546
        %548 = vrot.lane.b32.xlu0 %v328, 18
        %v549 = vpop.permute.xlu0 %548
        %550 = vrot.lane.b32.xlu0 %v329, 18
        %v551 = vpop.permute.xlu0 %550
        %vm552 = vcmp.lt.s32.totalorder %v339, 18
        %v553 = vsel %vm552, %v549, %v551
        %v554 = vsel %vm552, %v547, %v549
        %v555 = vsel %vm552, %v545, %v547
        %v556 = vsel %vm552, %v551, %v545
        %s557 = scalar_lea.vmem [#allocation6], 5
        %v558 = vld [vmem:[%s557] ss:$8 sm:$0xf]
        %v560 = vlaneseq
        %v561 = vshrl.u32 %v560, 7
        %v562 = vsub.s32 0, %v561
        %v563 = vrot.slane %v558, %v562
        %v564 = vlaneseq
        %v565 = vshrl.u32 %v564, 7
        %v566 = vsub.s32 1, %v565
        %v567 = vrot.slane %v558, %v566
        %v568 = vlaneseq
        %v569 = vshrl.u32 %v568, 7
        %v570 = vsub.s32 2, %v569
        %v571 = vrot.slane %v558, %v570
        %v572 = vlaneseq
        %v573 = vshrl.u32 %v572, 7
        %v574 = vsub.s32 3, %v573
        %v575 = vrot.slane %v558, %v574
        %v580 = vmul.f32 %v556, %v563
        %v581 = vmul.f32 %v555, %v567
        %v582 = vmul.f32 %v554, %v571
        %v583 = vmul.f32 %v553, %v575
        %584 = vrot.lane.b32.xlu0 %v326, 17
        %v585 = vpop.permute.xlu0 %584
        %586 = vrot.lane.b32.xlu0 %v327, 17
        %v587 = vpop.permute.xlu0 %586
        %588 = vrot.lane.b32.xlu0 %v328, 17
        %v589 = vpop.permute.xlu0 %588
        %590 = vrot.lane.b32.xlu0 %v329, 17
        %v591 = vpop.permute.xlu0 %590
        %vm592 = vcmp.lt.s32.totalorder %v339, 17
        %v593 = vsel %vm592, %v589, %v591
        %v594 = vsel %vm592, %v587, %v589
        %v595 = vsel %vm592, %v585, %v587
        %v596 = vsel %vm592, %v591, %v585
        %s597 = scalar_lea.vmem [#allocation6], 6
        %v598 = vld [vmem:[%s597] ss:$8 sm:$0xf]
        %v600 = vlaneseq
        %v601 = vshrl.u32 %v600, 7
        %v602 = vsub.s32 0, %v601
        %v603 = vrot.slane %v598, %v602
        %v604 = vlaneseq
        %v605 = vshrl.u32 %v604, 7
        %v606 = vsub.s32 1, %v605
        %v607 = vrot.slane %v598, %v606
        %v608 = vlaneseq
        %v609 = vshrl.u32 %v608, 7
        %v610 = vsub.s32 2, %v609
        %v611 = vrot.slane %v598, %v610
        %v612 = vlaneseq
        %v613 = vshrl.u32 %v612, 7
        %v614 = vsub.s32 3, %v613
        %v615 = vrot.slane %v598, %v614
        %v620 = vmul.f32 %v596, %v603
        %v621 = vmul.f32 %v595, %v607
        %v622 = vmul.f32 %v594, %v611
        %v623 = vmul.f32 %v593, %v615
        %624 = vrot.lane.b32.xlu0 %v326, 16
        %v625 = vpop.permute.xlu0 %624
        %626 = vrot.lane.b32.xlu0 %v327, 16
        %v627 = vpop.permute.xlu0 %626
        %628 = vrot.lane.b32.xlu0 %v328, 16
        %v629 = vpop.permute.xlu0 %628
        %630 = vrot.lane.b32.xlu0 %v329, 16
        %v631 = vpop.permute.xlu0 %630
        %vm632 = vcmp.lt.s32.totalorder %v339, 16
        %v633 = vsel %vm632, %v629, %v631
        %v634 = vsel %vm632, %v627, %v629
        %v635 = vsel %vm632, %v625, %v627
        %v636 = vsel %vm632, %v631, %v625
        %s637 = scalar_lea.vmem [#allocation6], 7
        %v638 = vld [vmem:[%s637] ss:$8 sm:$0xf]
        %v640 = vlaneseq
        %v641 = vshrl.u32 %v640, 7
        %v642 = vsub.s32 0, %v641
        %v643 = vrot.slane %v638, %v642
        %v644 = vlaneseq
        %v645 = vshrl.u32 %v644, 7
        %v646 = vsub.s32 1, %v645
        %v647 = vrot.slane %v638, %v646
        %v648 = vlaneseq
        %v649 = vshrl.u32 %v648, 7
        %v650 = vsub.s32 2, %v649
        %v651 = vrot.slane %v638, %v650
        %v652 = vlaneseq
        %v653 = vshrl.u32 %v652, 7
        %v654 = vsub.s32 3, %v653
        %v655 = vrot.slane %v638, %v654
        %v660 = vmul.f32 %v636, %v643
        %v661 = vmul.f32 %v635, %v647
        %v662 = vmul.f32 %v634, %v651
        %v663 = vmul.f32 %v633, %v655
        %664 = vrot.lane.b32.xlu0 %v326, 15
        %v665 = vpop.permute.xlu0 %664
        %666 = vrot.lane.b32.xlu0 %v327, 15
        %v667 = vpop.permute.xlu0 %666
        %668 = vrot.lane.b32.xlu0 %v328, 15
        %v669 = vpop.permute.xlu0 %668
        %670 = vrot.lane.b32.xlu0 %v329, 15
        %v671 = vpop.permute.xlu0 %670
        %vm672 = vcmp.lt.s32.totalorder %v339, 15
        %v673 = vsel %vm672, %v669, %v671
        %v674 = vsel %vm672, %v667, %v669
        %v675 = vsel %vm672, %v665, %v667
        %v676 = vsel %vm672, %v671, %v665
        %s677 = scalar_lea.vmem [#allocation6], 32
        %v678 = vld [vmem:[%s677] ss:$8 sm:$0xf]
        %v680 = vlaneseq
        %v681 = vshrl.u32 %v680, 7
        %v682 = vsub.s32 0, %v681
        %v683 = vrot.slane %v678, %v682
        %v684 = vlaneseq
        %v685 = vshrl.u32 %v684, 7
        %v686 = vsub.s32 1, %v685
        %v687 = vrot.slane %v678, %v686
        %v688 = vlaneseq
        %v689 = vshrl.u32 %v688, 7
        %v690 = vsub.s32 2, %v689
        %v691 = vrot.slane %v678, %v690
        %v692 = vlaneseq
        %v693 = vshrl.u32 %v692, 7
        %v694 = vsub.s32 3, %v693
        %v695 = vrot.slane %v678, %v694
        %v700 = vmul.f32 %v676, %v683
        %v701 = vmul.f32 %v675, %v687
        %v702 = vmul.f32 %v674, %v691
        %v703 = vmul.f32 %v673, %v695
        %704 = vrot.lane.b32.xlu0 %v326, 14
        %v705 = vpop.permute.xlu0 %704
        %706 = vrot.lane.b32.xlu0 %v327, 14
        %v707 = vpop.permute.xlu0 %706
        %708 = vrot.lane.b32.xlu0 %v328, 14
        %v709 = vpop.permute.xlu0 %708
        %710 = vrot.lane.b32.xlu0 %v329, 14
        %v711 = vpop.permute.xlu0 %710
        %vm712 = vcmp.lt.s32.totalorder %v339, 14
        %v713 = vsel %vm712, %v709, %v711
        %v714 = vsel %vm712, %v707, %v709
        %v715 = vsel %vm712, %v705, %v707
        %v716 = vsel %vm712, %v711, %v705
        %s717 = scalar_lea.vmem [#allocation6], 33
        %v718 = vld [vmem:[%s717] ss:$8 sm:$0xf]
        %v720 = vlaneseq
        %v721 = vshrl.u32 %v720, 7
        %v722 = vsub.s32 0, %v721
        %v723 = vrot.slane %v718, %v722
        %v724 = vlaneseq
        %v725 = vshrl.u32 %v724, 7
        %v726 = vsub.s32 1, %v725
        %v727 = vrot.slane %v718, %v726
        %v728 = vlaneseq
        %v729 = vshrl.u32 %v728, 7
        %v730 = vsub.s32 2, %v729
        %v731 = vrot.slane %v718, %v730
        %v732 = vlaneseq
        %v733 = vshrl.u32 %v732, 7
        %v734 = vsub.s32 3, %v733
        %v735 = vrot.slane %v718, %v734
        %v740 = vmul.f32 %v716, %v723
        %v741 = vmul.f32 %v715, %v727
        %v742 = vmul.f32 %v714, %v731
        %v743 = vmul.f32 %v713, %v735
        %v744 = vpack.c.bf16 %v620, %v580
        %v745 = vpack.c.bf16 %v621, %v581
        %v746 = vpack.c.bf16 %v622, %v582
        %v747 = vpack.c.bf16 %v623, %v583
        %v748 = vpack.c.bf16 %v700, %v660
        %v749 = vpack.c.bf16 %v701, %v661
        %v750 = vpack.c.bf16 %v702, %v662
        %v751 = vpack.c.bf16 %v703, %v663
        %v752 = vpack.c.bf16 %v740, %v740
        %v753 = vpack.c.bf16 %v741, %v741
        %v754 = vpack.c.bf16 %v742, %v742
        %v755 = vpack.c.bf16 %v743, %v743
        %s756 = scalar_lea.vmem %s2, 4
        %v757 = vld [vmem:[%s756] sm:$0xf]
        %vm758 = vcmask 326656
        %v760 = vsel %vm758, %v757, 0
        %vm762 = vcmask 1043456
        %v764 = vsel %vm762, %v752, 0
        %v767 = vsel %vm762, %v753, 0
        %v770 = vsel %vm762, %v754, 0
        %v773 = vsel %vm762, %v755, 0
        %775 = vmatprep.subr.bf16.mxu0 %v745
        %776 = vmatpush1.bf16.msra.mxu0 %v744
        %777 = vmatprep.subr.bf16.mxu0 %v749
        %778 = vmatpush1.bf16.msra.mxu0 %v748
        %779 = vmatprep.subr.bf16.mxu0 %v767
        %780 = vmatpush1.bf16.msra.mxu0 %v764
        %781 = vmatprep.subr.bf16.mxu0 0
        %782 = vmatpush1.bf16.msra.mxu0 0
        %783 = vmatprep.subr.bf16.mxu0 0
        %784 = vmatpush1.bf16.msra.mxu0 0
        %785 = vmatprep.subr.bf16.mxu0 0
        %786 = vmatpush1.bf16.msra.mxu0 0
        %787 = vmatprep.subr.bf16.mxu0 0
        %788 = vmatpush1.bf16.msra.mxu0 0
        %789 = vmatprep.subr.bf16.mxu0 0
        %790 = vmatpush1.bf16.msra.mxu0 0
        %791 = vmatprep.subr.bf16.mxu0 0
        %792 = vmatpush1.bf16.msra.mxu0 0
        %793 = vmatprep.subr.bf16.mxu0 0
        %794 = vmatpush1.bf16.msra.mxu0 0
        %795 = vmatprep.subr.bf16.mxu0 0
        %796 = vmatpush1.bf16.msra.mxu0 0
        %797 = vmatprep.subr.bf16.mxu0 0
        %798 = vmatpush1.bf16.msra.mxu0 0
        %799 = vmatprep.subr.bf16.mxu0 0
        %800 = vmatpush1.bf16.msra.mxu0 0
        %801 = vmatprep.subr.bf16.mxu0 0
        %802 = vmatpush1.bf16.msra.mxu0 0
        %803 = vmatprep.subr.bf16.mxu0 0
        %804 = vmatpush1.bf16.msra.mxu0 0
        %805 = vmatprep.subr.bf16.mxu0 0
        %806 = vmatpush1.bf16.msra.mxu0 0
        %807 = vmatprep.mubr.bf16.mxu0 0
        %808 = vmatmul.mubr.bf16.gmra.mrb[0].mxu0 %v760
        %v809 = vpop.f32.mrb[0].mxu0
        %v810 = vadd.f32 0.0, %v809
        %v811 = vpop.f32.mrb[0].mxu0
        %v812 = vadd.f32 0.0, %v811
        %v813 = vpop.f32.mrb[0].mxu0
        %v814 = vpop.f32.mrb[0].mxu0
        %815 = vdwg.mxu0
        %816 = vmatprep.subr.bf16.mxu0 %v747
        %817 = vmatpush1.bf16.msra.mxu0 %v746
        %818 = vmatprep.subr.bf16.mxu0 %v751
        %819 = vmatpush1.bf16.msra.mxu0 %v750
        %820 = vmatprep.subr.bf16.mxu0 %v773
        %821 = vmatpush1.bf16.msra.mxu0 %v770
        %822 = vmatprep.subr.bf16.mxu0 0
        %823 = vmatpush1.bf16.msra.mxu0 0
        %824 = vmatprep.subr.bf16.mxu0 0
        %825 = vmatpush1.bf16.msra.mxu0 0
        %826 = vmatprep.subr.bf16.mxu0 0
        %827 = vmatpush1.bf16.msra.mxu0 0
        %828 = vmatprep.subr.bf16.mxu0 0
        %829 = vmatpush1.bf16.msra.mxu0 0
        %830 = vmatprep.subr.bf16.mxu0 0
        %831 = vmatpush1.bf16.msra.mxu0 0
        %832 = vmatprep.subr.bf16.mxu0 0
        %833 = vmatpush1.bf16.msra.mxu0 0
        %834 = vmatprep.subr.bf16.mxu0 0
        %835 = vmatpush1.bf16.msra.mxu0 0
        %836 = vmatprep.subr.bf16.mxu0 0
        %837 = vmatpush1.bf16.msra.mxu0 0
        %838 = vmatprep.subr.bf16.mxu0 0
        %839 = vmatpush1.bf16.msra.mxu0 0
        %840 = vmatprep.subr.bf16.mxu0 0
        %841 = vmatpush1.bf16.msra.mxu0 0
        %842 = vmatprep.subr.bf16.mxu0 0
        %843 = vmatpush1.bf16.msra.mxu0 0
        %844 = vmatprep.subr.bf16.mxu0 0
        %845 = vmatpush1.bf16.msra.mxu0 0
        %846 = vmatprep.subr.bf16.mxu0 0
        %847 = vmatpush1.bf16.msra.mxu0 0
        %848 = vmatprep.mubr.bf16.mxu0 0
        %849 = vmatmul.mubr.bf16.gmra.mrb[0].mxu0 %v760
        %v850 = vpop.f32.mrb[0].mxu0
        %v851 = vadd.f32 0.0, %v850
        %v852 = vpop.f32.mrb[0].mxu0
        %v853 = vadd.f32 0.0, %v852
        %v854 = vpop.f32.mrb[0].mxu0
        %v855 = vpop.f32.mrb[0].mxu0
        %856 = vdwg.mxu0
        %v858 = vsel %vm758, %v543, 0
        %v861 = vsel %vm762, %v539, 0
        %v864 = vsel %vm762, %v540, 0
        %v867 = vsel %vm762, %v541, 0
        %v870 = vsel %vm762, %v542, 0
        %872 = vmatprep.subr.bf16.mxu0 %v532
        %873 = vmatpush1.bf16.msra.mxu0 %v531
        %874 = vmatprep.subr.bf16.mxu0 %v536
        %875 = vmatpush1.bf16.msra.mxu0 %v535
        %876 = vmatprep.subr.bf16.mxu0 %v864
        %877 = vmatpush1.bf16.msra.mxu0 %v861
        %878 = vmatprep.subr.bf16.mxu0 0
        %879 = vmatpush1.bf16.msra.mxu0 0
        %880 = vmatprep.subr.bf16.mxu0 0
        %881 = vmatpush1.bf16.msra.mxu0 0
        %882 = vmatprep.subr.bf16.mxu0 0
        %883 = vmatpush1.bf16.msra.mxu0 0
        %884 = vmatprep.subr.bf16.mxu0 0
        %885 = vmatpush1.bf16.msra.mxu0 0
        %886 = vmatprep.subr.bf16.mxu0 0
        %887 = vmatpush1.bf16.msra.mxu0 0
        %888 = vmatprep.subr.bf16.mxu0 0
        %889 = vmatpush1.bf16.msra.mxu0 0
        %890 = vmatprep.subr.bf16.mxu0 0
        %891 = vmatpush1.bf16.msra.mxu0 0
        %892 = vmatprep.subr.bf16.mxu0 0
        %893 = vmatpush1.bf16.msra.mxu0 0
        %894 = vmatprep.subr.bf16.mxu0 0
        %895 = vmatpush1.bf16.msra.mxu0 0
        %896 = vmatprep.subr.bf16.mxu0 0
        %897 = vmatpush1.bf16.msra.mxu0 0
        %898 = vmatprep.subr.bf16.mxu0 0
        %899 = vmatpush1.bf16.msra.mxu0 0
        %900 = vmatprep.subr.bf16.mxu0 0
        %901 = vmatpush1.bf16.msra.mxu0 0
        %902 = vmatprep.subr.bf16.mxu0 0
        %903 = vmatpush1.bf16.msra.mxu0 0
        %904 = vmatprep.mubr.bf16.mxu0 0
        %905 = vmatmul.mubr.bf16.gmra.mrb[0].mxu0 %v858
        %v906 = vpop.f32.mrb[0].mxu0
        %v907 = vadd.f32 %v810, %v906
        %v908 = vpop.f32.mrb[0].mxu0
        %v909 = vadd.f32 %v812, %v908
        %v910 = vpop.f32.mrb[0].mxu0
        %v911 = vpop.f32.mrb[0].mxu0
        %912 = vdwg.mxu0
        %913 = vmatprep.subr.bf16.mxu0 %v534
        %914 = vmatpush1.bf16.msra.mxu0 %v533
        %915 = vmatprep.subr.bf16.mxu0 %v538
        %916 = vmatpush1.bf16.msra.mxu0 %v537
        %917 = vmatprep.subr.bf16.mxu0 %v870
        %918 = vmatpush1.bf16.msra.mxu0 %v867
        %919 = vmatprep.subr.bf16.mxu0 0
        %920 = vmatpush1.bf16.msra.mxu0 0
        %921 = vmatprep.subr.bf16.mxu0 0
        %922 = vmatpush1.bf16.msra.mxu0 0
        %923 = vmatprep.subr.bf16.mxu0 0
        %924 = vmatpush1.bf16.msra.mxu0 0
        %925 = vmatprep.subr.bf16.mxu0 0
        %926 = vmatpush1.bf16.msra.mxu0 0
        %927 = vmatprep.subr.bf16.mxu0 0
        %928 = vmatpush1.bf16.msra.mxu0 0
        %929 = vmatprep.subr.bf16.mxu0 0
        %930 = vmatpush1.bf16.msra.mxu0 0
        %931 = vmatprep.subr.bf16.mxu0 0
        %932 = vmatpush1.bf16.msra.mxu0 0
        %933 = vmatprep.subr.bf16.mxu0 0
        %934 = vmatpush1.bf16.msra.mxu0 0
        %935 = vmatprep.subr.bf16.mxu0 0
        %936 = vmatpush1.bf16.msra.mxu0 0
        %937 = vmatprep.subr.bf16.mxu0 0
        %938 = vmatpush1.bf16.msra.mxu0 0
        %939 = vmatprep.subr.bf16.mxu0 0
        %940 = vmatpush1.bf16.msra.mxu0 0
        %941 = vmatprep.subr.bf16.mxu0 0
        %942 = vmatpush1.bf16.msra.mxu0 0
        %943 = vmatprep.subr.bf16.mxu0 0
        %944 = vmatpush1.bf16.msra.mxu0 0
        %945 = vmatprep.mubr.bf16.mxu0 0
        %946 = vmatmul.mubr.bf16.gmra.mrb[0].mxu0 %v858
        %v947 = vpop.f32.mrb[0].mxu0
        %v948 = vadd.f32 %v851, %v947
        %v949 = vpop.f32.mrb[0].mxu0
        %v950 = vadd.f32 %v853, %v949
        %v951 = vpop.f32.mrb[0].mxu0
        %v952 = vpop.f32.mrb[0].mxu0
        %953 = vdwg.mxu0
        %954 = vrot.lane.b32.xlu0 %v326, 2
        %v955 = vpop.permute.xlu0 %954
        %956 = vrot.lane.b32.xlu0 %v327, 2
        %v957 = vpop.permute.xlu0 %956
        %958 = vrot.lane.b32.xlu0 %v328, 2
        %v959 = vpop.permute.xlu0 %958
        %960 = vrot.lane.b32.xlu0 %v329, 2
        %v961 = vpop.permute.xlu0 %960
        %vm962 = vcmp.lt.s32.totalorder %v339, 2
        %v963 = vsel %vm962, %v959, %v961
        %v964 = vsel %vm962, %v957, %v959
        %v965 = vsel %vm962, %v955, %v957
        %v966 = vsel %vm962, %v961, %v955
        %s967 = scalar_lea.vmem [#allocation6], 34
        %v968 = vld [vmem:[%s967] ss:$8 sm:$0xf]
        %v970 = vlaneseq
        %v971 = vshrl.u32 %v970, 7
        %v972 = vsub.s32 0, %v971
        %v973 = vrot.slane %v968, %v972
        %v974 = vlaneseq
        %v975 = vshrl.u32 %v974, 7
        %v976 = vsub.s32 1, %v975
        %v977 = vrot.slane %v968, %v976
        %v978 = vlaneseq
        %v979 = vshrl.u32 %v978, 7
        %v980 = vsub.s32 2, %v979
        %v981 = vrot.slane %v968, %v980
        %v982 = vlaneseq
        %v983 = vshrl.u32 %v982, 7
        %v984 = vsub.s32 3, %v983
        %v985 = vrot.slane %v968, %v984
        %v990 = vmul.f32 %v966, %v973
        %v991 = vmul.f32 %v965, %v977
        %v992 = vmul.f32 %v964, %v981
        %v993 = vmul.f32 %v963, %v985
        %994 = vrot.lane.b32.xlu0 %v326, 1
        %v995 = vpop.permute.xlu0 %994
        %996 = vrot.lane.b32.xlu0 %v327, 1
        %v997 = vpop.permute.xlu0 %996
        %998 = vrot.lane.b32.xlu0 %v328, 1
        %v999 = vpop.permute.xlu0 %998
        %1000 = vrot.lane.b32.xlu0 %v329, 1
        %v1001 = vpop.permute.xlu0 %1000
        %vm1002 = vcmp.lt.s32.totalorder %v339, 1
        %v1003 = vsel %vm1002, %v999, %v1001
        %v1004 = vsel %vm1002, %v997, %v999
        %v1005 = vsel %vm1002, %v995, %v997
        %v1006 = vsel %vm1002, %v1001, %v995
        %s1007 = scalar_lea.vmem [#allocation6], 35
        %v1008 = vld [vmem:[%s1007] ss:$8 sm:$0xf]
        %v1010 = vlaneseq
        %v1011 = vshrl.u32 %v1010, 7
        %v1012 = vsub.s32 0, %v1011
        %v1013 = vrot.slane %v1008, %v1012
        %v1014 = vlaneseq
        %v1015 = vshrl.u32 %v1014, 7
        %v1016 = vsub.s32 1, %v1015
        %v1017 = vrot.slane %v1008, %v1016
        %v1018 = vlaneseq
        %v1019 = vshrl.u32 %v1018, 7
        %v1020 = vsub.s32 2, %v1019
        %v1021 = vrot.slane %v1008, %v1020
        %v1022 = vlaneseq
        %v1023 = vshrl.u32 %v1022, 7
        %v1024 = vsub.s32 3, %v1023
        %v1025 = vrot.slane %v1008, %v1024
        %v1030 = vmul.f32 %v1006, %v1013
        %v1031 = vmul.f32 %v1005, %v1017
        %v1032 = vmul.f32 %v1004, %v1021
        %v1033 = vmul.f32 %v1003, %v1025
        %1034 = vrot.lane.b32.xlu0 %v326, 127
        %v1035 = vpop.permute.xlu0 %1034
        %1036 = vrot.lane.b32.xlu0 %v327, 127
        %v1037 = vpop.permute.xlu0 %1036
        %1038 = vrot.lane.b32.xlu0 %v328, 127
        %v1039 = vpop.permute.xlu0 %1038
        %1040 = vrot.lane.b32.xlu0 %v329, 127
        %v1041 = vpop.permute.xlu0 %1040
        %vm1042 = vcmp.lt.s32.totalorder %v339, 127
        %v1043 = vsel %vm1042, %v1039, %v1041
        %v1044 = vsel %vm1042, %v1037, %v1039
        %v1045 = vsel %vm1042, %v1035, %v1037
        %v1046 = vsel %vm1042, %v1041, %v1035
        %s1047 = scalar_lea.vmem [#allocation6], 37
        %v1048 = vld [vmem:[%s1047] ss:$8 sm:$0xf]
        %v1050 = vlaneseq
        %v1051 = vshrl.u32 %v1050, 7
        %v1052 = vsub.s32 0, %v1051
        %v1053 = vrot.slane %v1048, %v1052
        %v1054 = vlaneseq
        %v1055 = vshrl.u32 %v1054, 7
        %v1056 = vsub.s32 1, %v1055
        %v1057 = vrot.slane %v1048, %v1056
        %v1058 = vlaneseq
        %v1059 = vshrl.u32 %v1058, 7
        %v1060 = vsub.s32 2, %v1059
        %v1061 = vrot.slane %v1048, %v1060
        %v1062 = vlaneseq
        %v1063 = vshrl.u32 %v1062, 7
        %v1064 = vsub.s32 3, %v1063
        %v1065 = vrot.slane %v1048, %v1064
        %v1070 = vmul.f32 %v1045, %v1053
        %v1071 = vmul.f32 %v1044, %v1057
        %v1072 = vmul.f32 %v1043, %v1061
        %v1073 = vmul.f32 %v1046, %v1065
        %1074 = vrot.lane.b32.xlu0 %v326, 126
        %v1075 = vpop.permute.xlu0 %1074
        %1076 = vrot.lane.b32.xlu0 %v327, 126
        %v1077 = vpop.permute.xlu0 %1076
        %1078 = vrot.lane.b32.xlu0 %v328, 126
        %v1079 = vpop.permute.xlu0 %1078
        %1080 = vrot.lane.b32.xlu0 %v329, 126
        %v1081 = vpop.permute.xlu0 %1080
        %vm1082 = vcmp.lt.s32.totalorder %v339, 126
        %v1083 = vsel %vm1082, %v1079, %v1081
        %v1084 = vsel %vm1082, %v1077, %v1079
        %v1085 = vsel %vm1082, %v1075, %v1077
        %v1086 = vsel %vm1082, %v1081, %v1075
        %s1087 = scalar_lea.vmem [#allocation6], 38
        %v1088 = vld [vmem:[%s1087] ss:$8 sm:$0xf]
        %v1090 = vlaneseq
        %v1091 = vshrl.u32 %v1090, 7
        %v1092 = vsub.s32 0, %v1091
        %v1093 = vrot.slane %v1088, %v1092
        %v1094 = vlaneseq
        %v1095 = vshrl.u32 %v1094, 7
        %v1096 = vsub.s32 1, %v1095
        %v1097 = vrot.slane %v1088, %v1096
        %v1098 = vlaneseq
        %v1099 = vshrl.u32 %v1098, 7
        %v1100 = vsub.s32 2, %v1099
        %v1101 = vrot.slane %v1088, %v1100
        %v1102 = vlaneseq
        %v1103 = vshrl.u32 %v1102, 7
        %v1104 = vsub.s32 3, %v1103
        %v1105 = vrot.slane %v1088, %v1104
        %v1110 = vmul.f32 %v1085, %v1093
        %v1111 = vmul.f32 %v1084, %v1097
        %v1112 = vmul.f32 %v1083, %v1101
        %v1113 = vmul.f32 %v1086, %v1105
        %v1114 = vpack.c.bf16 %v1030, %v990
        %v1115 = vpack.c.bf16 %v1031, %v991
        %v1116 = vpack.c.bf16 %v1032, %v992
        %v1117 = vpack.c.bf16 %v1033, %v993
        %v1118 = vpack.c.bf16 %v1070, %v326
        %v1119 = vpack.c.bf16 %v1071, %v327
        %v1120 = vpack.c.bf16 %v1072, %v328
        %v1121 = vpack.c.bf16 %v1073, %v329
        %v1122 = vpack.c.bf16 %v1110, %v1110
        %v1123 = vpack.c.bf16 %v1111, %v1111
        %v1124 = vpack.c.bf16 %v1112, %v1112
        %v1125 = vpack.c.bf16 %v1113, %v1113
        %s1126 = scalar_lea.vmem %s2, 8
        %v1127 = vld [vmem:[%s1126] sm:$0xf]
        %v1129 = vsel %vm758, %v1127, 0
        %v1132 = vsel %vm762, %v1122, 0
        %v1135 = vsel %vm762, %v1123, 0
        %v1138 = vsel %vm762, %v1124, 0
        %v1141 = vsel %vm762, %v1125, 0
        %1143 = vmatprep.subr.bf16.mxu0 %v1115
        %1144 = vmatpush1.bf16.msra.mxu0 %v1114
        %1145 = vmatprep.subr.bf16.mxu0 %v1119
        %1146 = vmatpush1.bf16.msra.mxu0 %v1118
        %1147 = vmatprep.subr.bf16.mxu0 %v1135
        %1148 = vmatpush1.bf16.msra.mxu0 %v1132
        %1149 = vmatprep.subr.bf16.mxu0 0
        %1150 = vmatpush1.bf16.msra.mxu0 0
        %1151 = vmatprep.subr.bf16.mxu0 0
        %1152 = vmatpush1.bf16.msra.mxu0 0
        %1153 = vmatprep.subr.bf16.mxu0 0
        %1154 = vmatpush1.bf16.msra.mxu0 0
        %1155 = vmatprep.subr.bf16.mxu0 0
        %1156 = vmatpush1.bf16.msra.mxu0 0
        %1157 = vmatprep.subr.bf16.mxu0 0
        %1158 = vmatpush1.bf16.msra.mxu0 0
        %1159 = vmatprep.subr.bf16.mxu0 0
        %1160 = vmatpush1.bf16.msra.mxu0 0
        %1161 = vmatprep.subr.bf16.mxu0 0
        %1162 = vmatpush1.bf16.msra.mxu0 0
        %1163 = vmatprep.subr.bf16.mxu0 0
        %1164 = vmatpush1.bf16.msra.mxu0 0
        %1165 = vmatprep.subr.bf16.mxu0 0
        %1166 = vmatpush1.bf16.msra.mxu0 0
        %1167 = vmatprep.subr.bf16.mxu0 0
        %1168 = vmatpush1.bf16.msra.mxu0 0
        %1169 = vmatprep.subr.bf16.mxu0 0
        %1170 = vmatpush1.bf16.msra.mxu0 0
        %1171 = vmatprep.subr.bf16.mxu0 0
        %1172 = vmatpush1.bf16.msra.mxu0 0
        %1173 = vmatprep.subr.bf16.mxu0 0
        %1174 = vmatpush1.bf16.msra.mxu0 0
        %1175 = vmatprep.mubr.bf16.mxu0 0
        %1176 = vmatmul.mubr.bf16.gmra.mrb[0].mxu0 %v1129
        %v1177 = vpop.f32.mrb[0].mxu0
        %v1178 = vadd.f32 0.0, %v1177
        %v1179 = vpop.f32.mrb[0].mxu0
        %v1180 = vadd.f32 0.0, %v1179
        %v1181 = vpop.f32.mrb[0].mxu0
        %v1182 = vpop.f32.mrb[0].mxu0
        %1183 = vdwg.mxu0
        %1184 = vmatprep.subr.bf16.mxu0 %v1117
        %1185 = vmatpush1.bf16.msra.mxu0 %v1116
        %1186 = vmatprep.subr.bf16.mxu0 %v1121
        %1187 = vmatpush1.bf16.msra.mxu0 %v1120
        %1188 = vmatprep.subr.bf16.mxu0 %v1141
        %1189 = vmatpush1.bf16.msra.mxu0 %v1138
        %1190 = vmatprep.subr.bf16.mxu0 0
        %1191 = vmatpush1.bf16.msra.mxu0 0
        %1192 = vmatprep.subr.bf16.mxu0 0
        %1193 = vmatpush1.bf16.msra.mxu0 0
        %1194 = vmatprep.subr.bf16.mxu0 0
        %1195 = vmatpush1.bf16.msra.mxu0 0
        %1196 = vmatprep.subr.bf16.mxu0 0
        %1197 = vmatpush1.bf16.msra.mxu0 0
        %1198 = vmatprep.subr.bf16.mxu0 0
        %1199 = vmatpush1.bf16.msra.mxu0 0
        %1200 = vmatprep.subr.bf16.mxu0 0
        %1201 = vmatpush1.bf16.msra.mxu0 0
        %1202 = vmatprep.subr.bf16.mxu0 0
        %1203 = vmatpush1.bf16.msra.mxu0 0
        %1204 = vmatprep.subr.bf16.mxu0 0
        %1205 = vmatpush1.bf16.msra.mxu0 0
        %1206 = vmatprep.subr.bf16.mxu0 0
        %1207 = vmatpush1.bf16.msra.mxu0 0
        %1208 = vmatprep.subr.bf16.mxu0 0
        %1209 = vmatpush1.bf16.msra.mxu0 0
        %1210 = vmatprep.subr.bf16.mxu0 0
        %1211 = vmatpush1.bf16.msra.mxu0 0
        %1212 = vmatprep.subr.bf16.mxu0 0
        %1213 = vmatpush1.bf16.msra.mxu0 0
        %1214 = vmatprep.subr.bf16.mxu0 0
        %1215 = vmatpush1.bf16.msra.mxu0 0
        %1216 = vmatprep.mubr.bf16.mxu0 0
        %1217 = vmatmul.mubr.bf16.gmra.mrb[0].mxu0 %v1129
        %v1218 = vpop.f32.mrb[0].mxu0
        %v1219 = vadd.f32 0.0, %v1218
        %v1220 = vpop.f32.mrb[0].mxu0
        %v1221 = vadd.f32 0.0, %v1220
        %v1222 = vpop.f32.mrb[0].mxu0
        %v1223 = vpop.f32.mrb[0].mxu0
        %1224 = vdwg.mxu0
        %v1225 = vadd.f32 %v907, %v1178
        %v1226 = vadd.f32 %v909, %v1180
        %v1227 = vadd.f32 %v948, %v1219
        %v1228 = vadd.f32 %v950, %v1221
        %1229 = vrot.lane.b32.xlu0 %v326, 114
        %v1230 = vpop.permute.xlu0 %1229
        %1231 = vrot.lane.b32.xlu0 %v327, 114
        %v1232 = vpop.permute.xlu0 %1231
        %1233 = vrot.lane.b32.xlu0 %v328, 114
        %v1234 = vpop.permute.xlu0 %1233
        %1235 = vrot.lane.b32.xlu0 %v329, 114
        %v1236 = vpop.permute.xlu0 %1235
        %vm1237 = vcmp.lt.s32.totalorder %v339, 114
        %v1238 = vsel %vm1237, %v1234, %v1236
        %v1239 = vsel %vm1237, %v1232, %v1234
        %v1240 = vsel %vm1237, %v1230, %v1232
        %v1241 = vsel %vm1237, %v1236, %v1230
        %s1242 = scalar_lea.vmem [#allocation6], 39
        %v1243 = vld [vmem:[%s1242] ss:$8 sm:$0xf]
        %v1245 = vlaneseq
        %v1246 = vshrl.u32 %v1245, 7
        %v1247 = vsub.s32 0, %v1246
        %v1248 = vrot.slane %v1243, %v1247
        %v1249 = vlaneseq
        %v1250 = vshrl.u32 %v1249, 7
        %v1251 = vsub.s32 1, %v1250
        %v1252 = vrot.slane %v1243, %v1251
        %v1253 = vlaneseq
        %v1254 = vshrl.u32 %v1253, 7
        %v1255 = vsub.s32 2, %v1254
        %v1256 = vrot.slane %v1243, %v1255
        %v1257 = vlaneseq
        %v1258 = vshrl.u32 %v1257, 7
        %v1259 = vsub.s32 3, %v1258
        %v1260 = vrot.slane %v1243, %v1259
        %v1265 = vmul.f32 %v1240, %v1248
        %v1266 = vmul.f32 %v1239, %v1252
        %v1267 = vmul.f32 %v1238, %v1256
        %v1268 = vmul.f32 %v1241, %v1260
        %1269 = vrot.lane.b32.xlu0 %v326, 113
        %v1270 = vpop.permute.xlu0 %1269
        %1271 = vrot.lane.b32.xlu0 %v327, 113
        %v1272 = vpop.permute.xlu0 %1271
        %1273 = vrot.lane.b32.xlu0 %v328, 113
        %v1274 = vpop.permute.xlu0 %1273
        %1275 = vrot.lane.b32.xlu0 %v329, 113
        %v1276 = vpop.permute.xlu0 %1275
        %vm1277 = vcmp.lt.s32.totalorder %v339, 113
        %v1278 = vsel %vm1277, %v1274, %v1276
        %v1279 = vsel %vm1277, %v1272, %v1274
        %v1280 = vsel %vm1277, %v1270, %v1272
        %v1281 = vsel %vm1277, %v1276, %v1270
        %s1282 = scalar_lea.vmem [#allocation6], 64
        %v1283 = vld [vmem:[%s1282] ss:$8 sm:$0xf]
        %v1285 = vlaneseq
        %v1286 = vshrl.u32 %v1285, 7
        %v1287 = vsub.s32 0, %v1286
        %v1288 = vrot.slane %v1283, %v1287
        %v1289 = vlaneseq
        %v1290 = vshrl.u32 %v1289, 7
        %v1291 = vsub.s32 1, %v1290
        %v1292 = vrot.slane %v1283, %v1291
        %v1293 = vlaneseq
        %v1294 = vshrl.u32 %v1293, 7
        %v1295 = vsub.s32 2, %v1294
        %v1296 = vrot.slane %v1283, %v1295
        %v1297 = vlaneseq
        %v1298 = vshrl.u32 %v1297, 7
        %v1299 = vsub.s32 3, %v1298
        %v1300 = vrot.slane %v1283, %v1299
        %v1305 = vmul.f32 %v1280, %v1288
        %v1306 = vmul.f32 %v1279, %v1292
        %v1307 = vmul.f32 %v1278, %v1296
        %v1308 = vmul.f32 %v1281, %v1300
        %1309 = vrot.lane.b32.xlu0 %v326, 112
        %v1310 = vpop.permute.xlu0 %1309
        %1311 = vrot.lane.b32.xlu0 %v327, 112
        %v1312 = vpop.permute.xlu0 %1311
        %1313 = vrot.lane.b32.xlu0 %v328, 112
        %v1314 = vpop.permute.xlu0 %1313
        %1315 = vrot.lane.b32.xlu0 %v329, 112
        %v1316 = vpop.permute.xlu0 %1315
        %vm1317 = vcmp.lt.s32.totalorder %v339, 112
        %v1318 = vsel %vm1317, %v1314, %v1316
        %v1319 = vsel %vm1317, %v1312, %v1314
        %v1320 = vsel %vm1317, %v1310, %v1312
        %v1321 = vsel %vm1317, %v1316, %v1310
        %s1322 = scalar_lea.vmem [#allocation6], 65
        %v1323 = vld [vmem:[%s1322] ss:$8 sm:$0xf]
        %v1325 = vlaneseq
        %v1326 = vshrl.u32 %v1325, 7
        %v1327 = vsub.s32 0, %v1326
        %v1328 = vrot.slane %v1323, %v1327
        %v1329 = vlaneseq
        %v1330 = vshrl.u32 %v1329, 7
        %v1331 = vsub.s32 1, %v1330
        %v1332 = vrot.slane %v1323, %v1331
        %v1333 = vlaneseq
        %v1334 = vshrl.u32 %v1333, 7
        %v1335 = vsub.s32 2, %v1334
        %v1336 = vrot.slane %v1323, %v1335
        %v1337 = vlaneseq
        %v1338 = vshrl.u32 %v1337, 7
        %v1339 = vsub.s32 3, %v1338
        %v1340 = vrot.slane %v1323, %v1339
        %v1345 = vmul.f32 %v1320, %v1328
        %v1346 = vmul.f32 %v1319, %v1332
        %v1347 = vmul.f32 %v1318, %v1336
        %v1348 = vmul.f32 %v1321, %v1340
        %1349 = vrot.lane.b32.xlu0 %v326, 111
        %v1350 = vpop.permute.xlu0 %1349
        %1351 = vrot.lane.b32.xlu0 %v327, 111
        %v1352 = vpop.permute.xlu0 %1351
        %1353 = vrot.lane.b32.xlu0 %v328, 111
        %v1354 = vpop.permute.xlu0 %1353
        %1355 = vrot.lane.b32.xlu0 %v329, 111
        %v1356 = vpop.permute.xlu0 %1355
        %vm1357 = vcmp.lt.s32.totalorder %v339, 111
        %v1358 = vsel %vm1357, %v1354, %v1356
        %v1359 = vsel %vm1357, %v1352, %v1354
        %v1360 = vsel %vm1357, %v1350, %v1352
        %v1361 = vsel %vm1357, %v1356, %v1350
        %s1362 = scalar_lea.vmem [#allocation6], 66
        %v1363 = vld [vmem:[%s1362] ss:$8 sm:$0xf]
        %v1365 = vlaneseq
        %v1366 = vshrl.u32 %v1365, 7
        %v1367 = vsub.s32 0, %v1366
        %v1368 = vrot.slane %v1363, %v1367
        %v1369 = vlaneseq
        %v1370 = vshrl.u32 %v1369, 7
        %v1371 = vsub.s32 1, %v1370
        %v1372 = vrot.slane %v1363, %v1371
        %v1373 = vlaneseq
        %v1374 = vshrl.u32 %v1373, 7
        %v1375 = vsub.s32 2, %v1374
        %v1376 = vrot.slane %v1363, %v1375
        %v1377 = vlaneseq
        %v1378 = vshrl.u32 %v1377, 7
        %v1379 = vsub.s32 3, %v1378
        %v1380 = vrot.slane %v1363, %v1379
        %v1385 = vmul.f32 %v1360, %v1368
        %v1386 = vmul.f32 %v1359, %v1372
        %v1387 = vmul.f32 %v1358, %v1376
        %v1388 = vmul.f32 %v1361, %v1380
        %1389 = vrot.lane.b32.xlu0 %v326, 110
        %v1390 = vpop.permute.xlu0 %1389
        %1391 = vrot.lane.b32.xlu0 %v327, 110
        %v1392 = vpop.permute.xlu0 %1391
        %1393 = vrot.lane.b32.xlu0 %v328, 110
        %v1394 = vpop.permute.xlu0 %1393
        %1395 = vrot.lane.b32.xlu0 %v329, 110
        %v1396 = vpop.permute.xlu0 %1395
        %vm1397 = vcmp.lt.s32.totalorder %v339, 110
        %v1398 = vsel %vm1397, %v1394, %v1396
        %v1399 = vsel %vm1397, %v1392, %v1394
        %v1400 = vsel %vm1397, %v1390, %v1392
        %v1401 = vsel %vm1397, %v1396, %v1390
        %s1402 = scalar_lea.vmem [#allocation6], 67
        %v1403 = vld [vmem:[%s1402] ss:$8 sm:$0xf]
        %v1405 = vlaneseq
        %v1406 = vshrl.u32 %v1405, 7
        %v1407 = vsub.s32 0, %v1406
        %v1408 = vrot.slane %v1403, %v1407
        %v1409 = vlaneseq
        %v1410 = vshrl.u32 %v1409, 7
        %v1411 = vsub.s32 1, %v1410
        %v1412 = vrot.slane %v1403, %v1411
        %v1413 = vlaneseq
        %v1414 = vshrl.u32 %v1413, 7
        %v1415 = vsub.s32 2, %v1414
        %v1416 = vrot.slane %v1403, %v1415
        %v1417 = vlaneseq
        %v1418 = vshrl.u32 %v1417, 7
        %v1419 = vsub.s32 3, %v1418
        %v1420 = vrot.slane %v1403, %v1419
        %v1425 = vmul.f32 %v1400, %v1408
        %v1426 = vmul.f32 %v1399, %v1412
        %v1427 = vmul.f32 %v1398, %v1416
        %v1428 = vmul.f32 %v1401, %v1420
        %v1429 = vpack.c.bf16 %v1305, %v1265
        %v1430 = vpack.c.bf16 %v1306, %v1266
        %v1431 = vpack.c.bf16 %v1307, %v1267
        %v1432 = vpack.c.bf16 %v1308, %v1268
        %v1433 = vpack.c.bf16 %v1385, %v1345
        %v1434 = vpack.c.bf16 %v1386, %v1346
        %v1435 = vpack.c.bf16 %v1387, %v1347
        %v1436 = vpack.c.bf16 %v1388, %v1348
        %v1437 = vpack.c.bf16 %v1425, %v1425
        %v1438 = vpack.c.bf16 %v1426, %v1426
        %v1439 = vpack.c.bf16 %v1427, %v1427
        %v1440 = vpack.c.bf16 %v1428, %v1428
        %s1441 = scalar_lea.vmem %s2, 12
        %v1442 = vld [vmem:[%s1441] sm:$0xf]
        %v1444 = vsel %vm758, %v1442, 0
        %v1447 = vsel %vm762, %v1437, 0
        %v1450 = vsel %vm762, %v1438, 0
        %v1453 = vsel %vm762, %v1439, 0
        %v1456 = vsel %vm762, %v1440, 0
        %1458 = vmatprep.subr.bf16.mxu0 %v1430
        %1459 = vmatpush1.bf16.msra.mxu0 %v1429
        %1460 = vmatprep.subr.bf16.mxu0 %v1434
        %1461 = vmatpush1.bf16.msra.mxu0 %v1433
        %1462 = vmatprep.subr.bf16.mxu0 %v1450
        %1463 = vmatpush1.bf16.msra.mxu0 %v1447
        %1464 = vmatprep.subr.bf16.mxu0 0
        %1465 = vmatpush1.bf16.msra.mxu0 0
        %1466 = vmatprep.subr.bf16.mxu0 0
        %1467 = vmatpush1.bf16.msra.mxu0 0
        %1468 = vmatprep.subr.bf16.mxu0 0
        %1469 = vmatpush1.bf16.msra.mxu0 0
        %1470 = vmatprep.subr.bf16.mxu0 0
        %1471 = vmatpush1.bf16.msra.mxu0 0
        %1472 = vmatprep.subr.bf16.mxu0 0
        %1473 = vmatpush1.bf16.msra.mxu0 0
        %1474 = vmatprep.subr.bf16.mxu0 0
        %1475 = vmatpush1.bf16.msra.mxu0 0
        %1476 = vmatprep.subr.bf16.mxu0 0
        %1477 = vmatpush1.bf16.msra.mxu0 0
        %1478 = vmatprep.subr.bf16.mxu0 0
        %1479 = vmatpush1.bf16.msra.mxu0 0
        %1480 = vmatprep.subr.bf16.mxu0 0
        %1481 = vmatpush1.bf16.msra.mxu0 0
        %1482 = vmatprep.subr.bf16.mxu0 0
        %1483 = vmatpush1.bf16.msra.mxu0 0
        %1484 = vmatprep.subr.bf16.mxu0 0
        %1485 = vmatpush1.bf16.msra.mxu0 0
        %1486 = vmatprep.subr.bf16.mxu0 0
        %1487 = vmatpush1.bf16.msra.mxu0 0
        %1488 = vmatprep.subr.bf16.mxu0 0
        %1489 = vmatpush1.bf16.msra.mxu0 0
        %1490 = vmatprep.mubr.bf16.mxu0 0
        %1491 = vmatmul.mubr.bf16.gmra.mrb[0].mxu0 %v1444
        %v1492 = vpop.f32.mrb[0].mxu0
        %v1493 = vadd.f32 0.0, %v1492
        %v1494 = vpop.f32.mrb[0].mxu0
        %v1495 = vadd.f32 0.0, %v1494
        %v1496 = vpop.f32.mrb[0].mxu0
        %v1497 = vpop.f32.mrb[0].mxu0
        %1498 = vdwg.mxu0
        %1499 = vmatprep.subr.bf16.mxu0 %v1432
        %1500 = vmatpush1.bf16.msra.mxu0 %v1431
        %1501 = vmatprep.subr.bf16.mxu0 %v1436
        %1502 = vmatpush1.bf16.msra.mxu0 %v1435
        %1503 = vmatprep.subr.bf16.mxu0 %v1456
        %1504 = vmatpush1.bf16.msra.mxu0 %v1453
        %1505 = vmatprep.subr.bf16.mxu0 0
        %1506 = vmatpush1.bf16.msra.mxu0 0
        %1507 = vmatprep.subr.bf16.mxu0 0
        %1508 = vmatpush1.bf16.msra.mxu0 0
        %1509 = vmatprep.subr.bf16.mxu0 0
        %1510 = vmatpush1.bf16.msra.mxu0 0
        %1511 = vmatprep.subr.bf16.mxu0 0
        %1512 = vmatpush1.bf16.msra.mxu0 0
        %1513 = vmatprep.subr.bf16.mxu0 0
        %1514 = vmatpush1.bf16.msra.mxu0 0
        %1515 = vmatprep.subr.bf16.mxu0 0
        %1516 = vmatpush1.bf16.msra.mxu0 0
        %1517 = vmatprep.subr.bf16.mxu0 0
        %1518 = vmatpush1.bf16.msra.mxu0 0
        %1519 = vmatprep.subr.bf16.mxu0 0
        %1520 = vmatpush1.bf16.msra.mxu0 0
        %1521 = vmatprep.subr.bf16.mxu0 0
        %1522 = vmatpush1.bf16.msra.mxu0 0
        %1523 = vmatprep.subr.bf16.mxu0 0
        %1524 = vmatpush1.bf16.msra.mxu0 0
        %1525 = vmatprep.subr.bf16.mxu0 0
        %1526 = vmatpush1.bf16.msra.mxu0 0
        %1527 = vmatprep.subr.bf16.mxu0 0
        %1528 = vmatpush1.bf16.msra.mxu0 0
        %1529 = vmatprep.subr.bf16.mxu0 0
        %1530 = vmatpush1.bf16.msra.mxu0 0
        %1531 = vmatprep.mubr.bf16.mxu0 0
        %1532 = vmatmul.mubr.bf16.gmra.mrb[0].mxu0 %v1444
        %v1533 = vpop.f32.mrb[0].mxu0
        %v1534 = vadd.f32 0.0, %v1533
        %v1535 = vpop.f32.mrb[0].mxu0
        %v1536 = vadd.f32 0.0, %v1535
        %v1537 = vpop.f32.mrb[0].mxu0
        %v1538 = vpop.f32.mrb[0].mxu0
        %1539 = vdwg.mxu0
        %v1540 = vadd.f32 %v1225, %v1493
        %v1541 = vadd.f32 %v1226, %v1495
        %v1542 = vadd.f32 %v1227, %v1534
        %v1543 = vadd.f32 %v1228, %v1536
        %1544 = vrot.lane.b32.xlu0 %v326, 98
        %v1545 = vpop.permute.xlu0 %1544
        %1546 = vrot.lane.b32.xlu0 %v327, 98
        %v1547 = vpop.permute.xlu0 %1546
        %1548 = vrot.lane.b32.xlu0 %v328, 98
        %v1549 = vpop.permute.xlu0 %1548
        %1550 = vrot.lane.b32.xlu0 %v329, 98
        %v1551 = vpop.permute.xlu0 %1550
        %vm1552 = vcmp.lt.s32.totalorder %v339, 98
        %v1553 = vsel %vm1552, %v1549, %v1551
        %v1554 = vsel %vm1552, %v1547, %v1549
        %v1555 = vsel %vm1552, %v1545, %v1547
        %v1556 = vsel %vm1552, %v1551, %v1545
        %s1557 = scalar_lea.vmem [#allocation6], 68
        %v1558 = vld [vmem:[%s1557] ss:$8 sm:$0xf]
        %v1560 = vlaneseq
        %v1561 = vshrl.u32 %v1560, 7
        %v1562 = vsub.s32 0, %v1561
        %v1563 = vrot.slane %v1558, %v1562
        %v1564 = vlaneseq
        %v1565 = vshrl.u32 %v1564, 7
        %v1566 = vsub.s32 1, %v1565
        %v1567 = vrot.slane %v1558, %v1566
        %v1568 = vlaneseq
        %v1569 = vshrl.u32 %v1568, 7
        %v1570 = vsub.s32 2, %v1569
        %v1571 = vrot.slane %v1558, %v1570
        %v1572 = vlaneseq
        %v1573 = vshrl.u32 %v1572, 7
        %v1574 = vsub.s32 3, %v1573
        %v1575 = vrot.slane %v1558, %v1574
        %v1580 = vmul.f32 %v1555, %v1563
        %v1581 = vmul.f32 %v1554, %v1567
        %v1582 = vmul.f32 %v1553, %v1571
        %v1583 = vmul.f32 %v1556, %v1575
        %1584 = vrot.lane.b32.xlu0 %v326, 97
        %v1585 = vpop.permute.xlu0 %1584
        %1586 = vrot.lane.b32.xlu0 %v327, 97
        %v1587 = vpop.permute.xlu0 %1586
        %1588 = vrot.lane.b32.xlu0 %v328, 97
        %v1589 = vpop.permute.xlu0 %1588
        %1590 = vrot.lane.b32.xlu0 %v329, 97
        %v1591 = vpop.permute.xlu0 %1590
        %vm1592 = vcmp.lt.s32.totalorder %v339, 97
        %v1593 = vsel %vm1592, %v1589, %v1591
        %v1594 = vsel %vm1592, %v1587, %v1589
        %v1595 = vsel %vm1592, %v1585, %v1587
        %v1596 = vsel %vm1592, %v1591, %v1585
        %s1597 = scalar_lea.vmem [#allocation6], 69
        %v1598 = vld [vmem:[%s1597] ss:$8 sm:$0xf]
        %v1600 = vlaneseq
        %v1601 = vshrl.u32 %v1600, 7
        %v1602 = vsub.s32 0, %v1601
        %v1603 = vrot.slane %v1598, %v1602
        %v1604 = vlaneseq
        %v1605 = vshrl.u32 %v1604, 7
        %v1606 = vsub.s32 1, %v1605
        %v1607 = vrot.slane %v1598, %v1606
        %v1608 = vlaneseq
        %v1609 = vshrl.u32 %v1608, 7
        %v1610 = vsub.s32 2, %v1609
        %v1611 = vrot.slane %v1598, %v1610
        %v1612 = vlaneseq
        %v1613 = vshrl.u32 %v1612, 7
        %v1614 = vsub.s32 3, %v1613
        %v1615 = vrot.slane %v1598, %v1614
        %v1620 = vmul.f32 %v1595, %v1603
        %v1621 = vmul.f32 %v1594, %v1607
        %v1622 = vmul.f32 %v1593, %v1611
        %v1623 = vmul.f32 %v1596, %v1615
        %1624 = vrot.lane.b32.xlu0 %v326, 96
        %v1625 = vpop.permute.xlu0 %1624
        %1626 = vrot.lane.b32.xlu0 %v327, 96
        %v1627 = vpop.permute.xlu0 %1626
        %1628 = vrot.lane.b32.xlu0 %v328, 96
        %v1629 = vpop.permute.xlu0 %1628
        %1630 = vrot.lane.b32.xlu0 %v329, 96
        %v1631 = vpop.permute.xlu0 %1630
        %vm1632 = vcmp.lt.s32.totalorder %v339, 96
        %v1633 = vsel %vm1632, %v1629, %v1631
        %v1634 = vsel %vm1632, %v1627, %v1629
        %v1635 = vsel %vm1632, %v1625, %v1627
        %v1636 = vsel %vm1632, %v1631, %v1625
        %s1637 = scalar_lea.vmem [#allocation6], 70
        %v1638 = vld [vmem:[%s1637] ss:$8 sm:$0xf]
        %v1640 = vlaneseq
        %v1641 = vshrl.u32 %v1640, 7
        %v1642 = vsub.s32 0, %v1641
        %v1643 = vrot.slane %v1638, %v1642
        %v1644 = vlaneseq
        %v1645 = vshrl.u32 %v1644, 7
        %v1646 = vsub.s32 1, %v1645
        %v1647 = vrot.slane %v1638, %v1646
        %v1648 = vlaneseq
        %v1649 = vshrl.u32 %v1648, 7
        %v1650 = vsub.s32 2, %v1649
        %v1651 = vrot.slane %v1638, %v1650
        %v1652 = vlaneseq
        %v1653 = vshrl.u32 %v1652, 7
        %v1654 = vsub.s32 3, %v1653
        %v1655 = vrot.slane %v1638, %v1654
        %v1660 = vmul.f32 %v1635, %v1643
        %v1661 = vmul.f32 %v1634, %v1647
        %v1662 = vmul.f32 %v1633, %v1651
        %v1663 = vmul.f32 %v1636, %v1655
        %1664 = vrot.lane.b32.xlu0 %v326, 95
        %v1665 = vpop.permute.xlu0 %1664
        %1666 = vrot.lane.b32.xlu0 %v327, 95
        %v1667 = vpop.permute.xlu0 %1666
        %1668 = vrot.lane.b32.xlu0 %v328, 95
        %v1669 = vpop.permute.xlu0 %1668
        %1670 = vrot.lane.b32.xlu0 %v329, 95
        %v1671 = vpop.permute.xlu0 %1670
        %vm1672 = vcmp.lt.s32.totalorder %v339, 95
        %v1673 = vsel %vm1672, %v1669, %v1671
        %v1674 = vsel %vm1672, %v1667, %v1669
        %v1675 = vsel %vm1672, %v1665, %v1667
        %v1676 = vsel %vm1672, %v1671, %v1665
        %s1677 = scalar_lea.vmem [#allocation6], 71
        %v1678 = vld [vmem:[%s1677] ss:$8 sm:$0xf]
        %v1680 = vlaneseq
        %v1681 = vshrl.u32 %v1680, 7
        %v1682 = vsub.s32 0, %v1681
        %v1683 = vrot.slane %v1678, %v1682
        %v1684 = vlaneseq
        %v1685 = vshrl.u32 %v1684, 7
        %v1686 = vsub.s32 1, %v1685
        %v1687 = vrot.slane %v1678, %v1686
        %v1688 = vlaneseq
        %v1689 = vshrl.u32 %v1688, 7
        %v1690 = vsub.s32 2, %v1689
        %v1691 = vrot.slane %v1678, %v1690
        %v1692 = vlaneseq
        %v1693 = vshrl.u32 %v1692, 7
        %v1694 = vsub.s32 3, %v1693
        %v1695 = vrot.slane %v1678, %v1694
        %v1700 = vmul.f32 %v1675, %v1683
        %v1701 = vmul.f32 %v1674, %v1687
        %v1702 = vmul.f32 %v1673, %v1691
        %v1703 = vmul.f32 %v1676, %v1695
        %1704 = vrot.lane.b32.xlu0 %v326, 94
        %v1705 = vpop.permute.xlu0 %1704
        %1706 = vrot.lane.b32.xlu0 %v327, 94
        %v1707 = vpop.permute.xlu0 %1706
        %1708 = vrot.lane.b32.xlu0 %v328, 94
        %v1709 = vpop.permute.xlu0 %1708
        %1710 = vrot.lane.b32.xlu0 %v329, 94
        %v1711 = vpop.permute.xlu0 %1710
        %vm1712 = vcmp.lt.s32.totalorder %v339, 94
        %v1713 = vsel %vm1712, %v1709, %v1711
        %v1714 = vsel %vm1712, %v1707, %v1709
        %v1715 = vsel %vm1712, %v1705, %v1707
        %v1716 = vsel %vm1712, %v1711, %v1705
        %s1717 = scalar_lea.vmem [#allocation6], 96
        %v1718 = vld [vmem:[%s1717] ss:$8 sm:$0xf]
        %v1720 = vlaneseq
        %v1721 = vshrl.u32 %v1720, 7
        %v1722 = vsub.s32 0, %v1721
        %v1723 = vrot.slane %v1718, %v1722
        %v1724 = vlaneseq
        %v1725 = vshrl.u32 %v1724, 7
        %v1726 = vsub.s32 1, %v1725
        %v1727 = vrot.slane %v1718, %v1726
        %v1728 = vlaneseq
        %v1729 = vshrl.u32 %v1728, 7
        %v1730 = vsub.s32 2, %v1729
        %v1731 = vrot.slane %v1718, %v1730
        %v1732 = vlaneseq
        %v1733 = vshrl.u32 %v1732, 7
        %v1734 = vsub.s32 3, %v1733
        %v1735 = vrot.slane %v1718, %v1734
        %v1740 = vmul.f32 %v1715, %v1723
        %v1741 = vmul.f32 %v1714, %v1727
        %v1742 = vmul.f32 %v1713, %v1731
        %v1743 = vmul.f32 %v1716, %v1735
        %v1744 = vpack.c.bf16 %v1620, %v1580
        %v1745 = vpack.c.bf16 %v1621, %v1581
        %v1746 = vpack.c.bf16 %v1622, %v1582
        %v1747 = vpack.c.bf16 %v1623, %v1583
        %v1748 = vpack.c.bf16 %v1700, %v1660
        %v1749 = vpack.c.bf16 %v1701, %v1661
        %v1750 = vpack.c.bf16 %v1702, %v1662
        %v1751 = vpack.c.bf16 %v1703, %v1663
        %v1752 = vpack.c.bf16 %v1740, %v1740
        %v1753 = vpack.c.bf16 %v1741, %v1741
        %v1754 = vpack.c.bf16 %v1742, %v1742
        %v1755 = vpack.c.bf16 %v1743, %v1743
        %s1756 = scalar_lea.vmem %s2, 16
        %v1757 = vld [vmem:[%s1756] sm:$0xf]
        %v1759 = vsel %vm758, %v1757, 0
        %v1762 = vsel %vm762, %v1752, 0
        %v1765 = vsel %vm762, %v1753, 0
        %v1768 = vsel %vm762, %v1754, 0
        %v1771 = vsel %vm762, %v1755, 0
        %1773 = vmatprep.subr.bf16.mxu0 %v1745
        %1774 = vmatpush1.bf16.msra.mxu0 %v1744
        %1775 = vmatprep.subr.bf16.mxu0 %v1749
        %1776 = vmatpush1.bf16.msra.mxu0 %v1748
        %1777 = vmatprep.subr.bf16.mxu0 %v1765
        %1778 = vmatpush1.bf16.msra.mxu0 %v1762
        %1779 = vmatprep.subr.bf16.mxu0 0
        %1780 = vmatpush1.bf16.msra.mxu0 0
        %1781 = vmatprep.subr.bf16.mxu0 0
        %1782 = vmatpush1.bf16.msra.mxu0 0
        %1783 = vmatprep.subr.bf16.mxu0 0
        %1784 = vmatpush1.bf16.msra.mxu0 0
        %1785 = vmatprep.subr.bf16.mxu0 0
        %1786 = vmatpush1.bf16.msra.mxu0 0
        %1787 = vmatprep.subr.bf16.mxu0 0
        %1788 = vmatpush1.bf16.msra.mxu0 0
        %1789 = vmatprep.subr.bf16.mxu0 0
        %1790 = vmatpush1.bf16.msra.mxu0 0
        %1791 = vmatprep.subr.bf16.mxu0 0
        %1792 = vmatpush1.bf16.msra.mxu0 0
        %1793 = vmatprep.subr.bf16.mxu0 0
        %1794 = vmatpush1.bf16.msra.mxu0 0
        %1795 = vmatprep.subr.bf16.mxu0 0
        %1796 = vmatpush1.bf16.msra.mxu0 0
        %1797 = vmatprep.subr.bf16.mxu0 0
        %1798 = vmatpush1.bf16.msra.mxu0 0
        %1799 = vmatprep.subr.bf16.mxu0 0
        %1800 = vmatpush1.bf16.msra.mxu0 0
        %1801 = vmatprep.subr.bf16.mxu0 0
        %1802 = vmatpush1.bf16.msra.mxu0 0
        %1803 = vmatprep.subr.bf16.mxu0 0
        %1804 = vmatpush1.bf16.msra.mxu0 0
        %1805 = vmatprep.mubr.bf16.mxu0 0
        %1806 = vmatmul.mubr.bf16.gmra.mrb[0].mxu0 %v1759
        %v1807 = vpop.f32.mrb[0].mxu0
        %v1808 = vadd.f32 0.0, %v1807
        %v1809 = vpop.f32.mrb[0].mxu0
        %v1810 = vadd.f32 0.0, %v1809
        %v1811 = vpop.f32.mrb[0].mxu0
        %v1812 = vpop.f32.mrb[0].mxu0
        %1813 = vdwg.mxu0
        %1814 = vmatprep.subr.bf16.mxu0 %v1747
        %1815 = vmatpush1.bf16.msra.mxu0 %v1746
        %1816 = vmatprep.subr.bf16.mxu0 %v1751
        %1817 = vmatpush1.bf16.msra.mxu0 %v1750
        %1818 = vmatprep.subr.bf16.mxu0 %v1771
        %1819 = vmatpush1.bf16.msra.mxu0 %v1768
        %1820 = vmatprep.subr.bf16.mxu0 0
        %1821 = vmatpush1.bf16.msra.mxu0 0
        %1822 = vmatprep.subr.bf16.mxu0 0
        %1823 = vmatpush1.bf16.msra.mxu0 0
        %1824 = vmatprep.subr.bf16.mxu0 0
        %1825 = vmatpush1.bf16.msra.mxu0 0
        %1826 = vmatprep.subr.bf16.mxu0 0
        %1827 = vmatpush1.bf16.msra.mxu0 0
        %1828 = vmatprep.subr.bf16.mxu0 0
        %1829 = vmatpush1.bf16.msra.mxu0 0
        %1830 = vmatprep.subr.bf16.mxu0 0
        %1831 = vmatpush1.bf16.msra.mxu0 0
        %1832 = vmatprep.subr.bf16.mxu0 0
        %1833 = vmatpush1.bf16.msra.mxu0 0
        %1834 = vmatprep.subr.bf16.mxu0 0
        %1835 = vmatpush1.bf16.msra.mxu0 0
        %1836 = vmatprep.subr.bf16.mxu0 0
        %1837 = vmatpush1.bf16.msra.mxu0 0
        %1838 = vmatprep.subr.bf16.mxu0 0
        %1839 = vmatpush1.bf16.msra.mxu0 0
        %1840 = vmatprep.subr.bf16.mxu0 0
        %1841 = vmatpush1.bf16.msra.mxu0 0
        %1842 = vmatprep.subr.bf16.mxu0 0
        %1843 = vmatpush1.bf16.msra.mxu0 0
        %1844 = vmatprep.subr.bf16.mxu0 0
        %1845 = vmatpush1.bf16.msra.mxu0 0
        %1846 = vmatprep.mubr.bf16.mxu0 0
        %1847 = vmatmul.mubr.bf16.gmra.mrb[0].mxu0 %v1759
        %v1848 = vpop.f32.mrb[0].mxu0
        %v1849 = vadd.f32 0.0, %v1848
        %v1850 = vpop.f32.mrb[0].mxu0
        %v1851 = vadd.f32 0.0, %v1850
        %v1852 = vpop.f32.mrb[0].mxu0
        %v1853 = vpop.f32.mrb[0].mxu0
        %1854 = vdwg.mxu0
        %v1855 = vadd.f32 %v1540, %v1808
        %v1856 = vadd.f32 %v1541, %v1810
        %v1857 = vadd.f32 %v1542, %v1849
        %v1858 = vadd.f32 %v1543, %v1851
        %v1859 = vld [vmem:[%s3] sm:$0xff]
        %1861 = vset.pattern.permute.xlu0 0
        %1862 = vperm.xlu0 %1861, %v1859
        %v1863 = vpop.permute.xlu0 %1862
        %v1865 = vadd.f32 %v1855, %v1863
        %v1866 = vadd.f32 %v1856, %v1863
        %v1867 = vadd.f32 %v1857, %v1863
        %v1868 = vadd.f32 %v1858, %v1863
        %s1869 = sld [smem:[#allocation2]]
        %vm1870 = vcmp.gt.f32.partialorder %v1865, 0.0
        %vm1871 = vcmp.gt.f32.partialorder %v1866, 0.0
        %vm1872 = vcmp.gt.f32.partialorder %v1867, 0.0
        %vm1873 = vcmp.gt.f32.partialorder %v1868, 0.0
        %v1874 = vstv %s1869
        %v1875 = vmul.f32 %v1874, %v1865
        %v1876 = vmul.f32 %v1874, %v1866
        %v1877 = vmul.f32 %v1874, %v1867
        %v1878 = vmul.f32 %v1874, %v1868
        %v1879 = vsel %vm1870, %v1865, %v1875
        %v1880 = vsel %vm1871, %v1866, %v1876
        %v1881 = vsel %vm1872, %v1867, %v1877
        %v1882 = vsel %vm1873, %v1868, %v1878
        %1883 = vrot.lane.b32.xlu0 %v1879, 34
        %v1884 = vpop.permute.xlu0 %1883
        %1885 = vrot.lane.b32.xlu0 %v1880, 34
        %v1886 = vpop.permute.xlu0 %1885
        %1887 = vrot.lane.b32.xlu0 %v1881, 34
        %v1888 = vpop.permute.xlu0 %1887
        %1889 = vrot.lane.b32.xlu0 %v1882, 34
        %v1890 = vpop.permute.xlu0 %1889
        %v1891 = vsel %vm340, %v1888, %v1890
        %v1892 = vsel %vm340, %v1886, %v1888
        %v1893 = vsel %vm340, %v1884, %v1886
        %v1894 = vsel %vm340, %v1890, %v1884
        %v1895 = vmul.f32 %v1894, %v350
        %v1896 = vmul.f32 %v1893, %v354
        %v1897 = vmul.f32 %v1892, %v358
        %v1898 = vmul.f32 %v1891, %v362
        %1899 = vrot.lane.b32.xlu0 %v1879, 33
        %v1900 = vpop.permute.xlu0 %1899
        %1901 = vrot.lane.b32.xlu0 %v1880, 33
        %v1902 = vpop.permute.xlu0 %1901
        %1903 = vrot.lane.b32.xlu0 %v1881, 33
        %v1904 = vpop.permute.xlu0 %1903
        %1905 = vrot.lane.b32.xlu0 %v1882, 33
        %v1906 = vpop.permute.xlu0 %1905
        %v1907 = vsel %vm379, %v1904, %v1906
        %v1908 = vsel %vm379, %v1902, %v1904
        %v1909 = vsel %vm379, %v1900, %v1902
        %v1910 = vsel %vm379, %v1906, %v1900
        %v1911 = vmul.f32 %v1910, %v390
        %v1912 = vmul.f32 %v1909, %v394
        %v1913 = vmul.f32 %v1908, %v398
        %v1914 = vmul.f32 %v1907, %v402
        %1915 = vrot.lane.b32.xlu0 %v1879, 32
        %v1916 = vpop.permute.xlu0 %1915
        %1917 = vrot.lane.b32.xlu0 %v1880, 32
        %v1918 = vpop.permute.xlu0 %1917
        %1919 = vrot.lane.b32.xlu0 %v1881, 32
        %v1920 = vpop.permute.xlu0 %1919
        %1921 = vrot.lane.b32.xlu0 %v1882, 32
        %v1922 = vpop.permute.xlu0 %1921
        %v1923 = vsel %vm419, %v1920, %v1922
        %v1924 = vsel %vm419, %v1918, %v1920
        %v1925 = vsel %vm419, %v1916, %v1918
        %v1926 = vsel %vm419, %v1922, %v1916
        %v1927 = vmul.f32 %v1926, %v430
        %v1928 = vmul.f32 %v1925, %v434
        %v1929 = vmul.f32 %v1924, %v438
        %v1930 = vmul.f32 %v1923, %v442
        %1931 = vrot.lane.b32.xlu0 %v1879, 31
        %v1932 = vpop.permute.xlu0 %1931
        %1933 = vrot.lane.b32.xlu0 %v1880, 31
        %v1934 = vpop.permute.xlu0 %1933
        %1935 = vrot.lane.b32.xlu0 %v1881, 31
        %v1936 = vpop.permute.xlu0 %1935
        %1937 = vrot.lane.b32.xlu0 %v1882, 31
        %v1938 = vpop.permute.xlu0 %1937
        %v1939 = vsel %vm459, %v1936, %v1938
        %v1940 = vsel %vm459, %v1934, %v1936
        %v1941 = vsel %vm459, %v1932, %v1934
        %v1942 = vsel %vm459, %v1938, %v1932
        %v1943 = vmul.f32 %v1942, %v470
        %v1944 = vmul.f32 %v1941, %v474
        %v1945 = vmul.f32 %v1940, %v478
        %v1946 = vmul.f32 %v1939, %v482
        %1947 = vrot.lane.b32.xlu0 %v1879, 30
        %v1948 = vpop.permute.xlu0 %1947
        %1949 = vrot.lane.b32.xlu0 %v1880, 30
        %v1950 = vpop.permute.xlu0 %1949
        %1951 = vrot.lane.b32.xlu0 %v1881, 30
        %v1952 = vpop.permute.xlu0 %1951
        %1953 = vrot.lane.b32.xlu0 %v1882, 30
        %v1954 = vpop.permute.xlu0 %1953
        %v1955 = vsel %vm499, %v1952, %v1954
        %v1956 = vsel %vm499, %v1950, %v1952
        %v1957 = vsel %vm499, %v1948, %v1950
        %v1958 = vsel %vm499, %v1954, %v1948
        %v1959 = vmul.f32 %v1958, %v510
        %v1960 = vmul.f32 %v1957, %v514
        %v1961 = vmul.f32 %v1956, %v518
        %v1962 = vmul.f32 %v1955, %v522
        %v1963 = vpack.c.bf16 %v1911, %v1895
        %v1964 = vpack.c.bf16 %v1912, %v1896
        %v1965 = vpack.c.bf16 %v1913, %v1897
        %v1966 = vpack.c.bf16 %v1914, %v1898
        %v1967 = vpack.c.bf16 %v1943, %v1927
        %v1968 = vpack.c.bf16 %v1944, %v1928
        %v1969 = vpack.c.bf16 %v1945, %v1929
        %v1970 = vpack.c.bf16 %v1946, %v1930
        %v1971 = vpack.c.bf16 %v1959, %v1959
        %v1972 = vpack.c.bf16 %v1960, %v1960
        %v1973 = vpack.c.bf16 %v1961, %v1961
        %v1974 = vpack.c.bf16 %v1962, %v1962
        %v1975 = vld [vmem:[#allocation8] sm:$0xf]
        %1976 = vrot.lane.b32.xlu0 %v1879, 18
        %v1977 = vpop.permute.xlu0 %1976
        %1978 = vrot.lane.b32.xlu0 %v1880, 18
        %v1979 = vpop.permute.xlu0 %1978
        %1980 = vrot.lane.b32.xlu0 %v1881, 18
        %v1981 = vpop.permute.xlu0 %1980
        %1982 = vrot.lane.b32.xlu0 %v1882, 18
        %v1983 = vpop.permute.xlu0 %1982
        %v1984 = vsel %vm552, %v1981, %v1983
        %v1985 = vsel %vm552, %v1979, %v1981
        %v1986 = vsel %vm552, %v1977, %v1979
        %v1987 = vsel %vm552, %v1983, %v1977
        %v1988 = vmul.f32 %v1987, %v563
        %v1989 = vmul.f32 %v1986, %v567
        %v1990 = vmul.f32 %v1985, %v571
        %v1991 = vmul.f32 %v1984, %v575
        %1992 = vrot.lane.b32.xlu0 %v1879, 17
        %v1993 = vpop.permute.xlu0 %1992
        %1994 = vrot.lane.b32.xlu0 %v1880, 17
        %v1995 = vpop.permute.xlu0 %1994
        %1996 = vrot.lane.b32.xlu0 %v1881, 17
        %v1997 = vpop.permute.xlu0 %1996
        %1998 = vrot.lane.b32.xlu0 %v1882, 17
        %v1999 = vpop.permute.xlu0 %1998
        %v2000 = vsel %vm592, %v1997, %v1999
        %v2001 = vsel %vm592, %v1995, %v1997
        %v2002 = vsel %vm592, %v1993, %v1995
        %v2003 = vsel %vm592, %v1999, %v1993
        %v2004 = vmul.f32 %v2003, %v603
        %v2005 = vmul.f32 %v2002, %v607
        %v2006 = vmul.f32 %v2001, %v611
        %v2007 = vmul.f32 %v2000, %v615
        %2008 = vrot.lane.b32.xlu0 %v1879, 16
        %v2009 = vpop.permute.xlu0 %2008
        %2010 = vrot.lane.b32.xlu0 %v1880, 16
        %v2011 = vpop.permute.xlu0 %2010
        %2012 = vrot.lane.b32.xlu0 %v1881, 16
        %v2013 = vpop.permute.xlu0 %2012
        %2014 = vrot.lane.b32.xlu0 %v1882, 16
        %v2015 = vpop.permute.xlu0 %2014
        %v2016 = vsel %vm632, %v2013, %v2015
        %v2017 = vsel %vm632, %v2011, %v2013
        %v2018 = vsel %vm632, %v2009, %v2011
        %v2019 = vsel %vm632, %v2015, %v2009
        %v2020 = vmul.f32 %v2019, %v643
        %v2021 = vmul.f32 %v2018, %v647
        %v2022 = vmul.f32 %v2017, %v651
        %v2023 = vmul.f32 %v2016, %v655
        %2024 = vrot.lane.b32.xlu0 %v1879, 15
        %v2025 = vpop.permute.xlu0 %2024
        %2026 = vrot.lane.b32.xlu0 %v1880, 15
        %v2027 = vpop.permute.xlu0 %2026
        %2028 = vrot.lane.b32.xlu0 %v1881, 15
        %v2029 = vpop.permute.xlu0 %2028
        %2030 = vrot.lane.b32.xlu0 %v1882, 15
        %v2031 = vpop.permute.xlu0 %2030
        %v2032 = vsel %vm672, %v2029, %v2031
        %v2033 = vsel %vm672, %v2027, %v2029
        %v2034 = vsel %vm672, %v2025, %v2027
        %v2035 = vsel %vm672, %v2031, %v2025
        %v2036 = vmul.f32 %v2035, %v683
        %v2037 = vmul.f32 %v2034, %v687
        %v2038 = vmul.f32 %v2033, %v691
        %v2039 = vmul.f32 %v2032, %v695
        %2040 = vrot.lane.b32.xlu0 %v1879, 14
        %v2041 = vpop.permute.xlu0 %2040
        %2042 = vrot.lane.b32.xlu0 %v1880, 14
        %v2043 = vpop.permute.xlu0 %2042
        %2044 = vrot.lane.b32.xlu0 %v1881, 14
        %v2045 = vpop.permute.xlu0 %2044
        %2046 = vrot.lane.b32.xlu0 %v1882, 14
        %v2047 = vpop.permute.xlu0 %2046
        %v2048 = vsel %vm712, %v2045, %v2047
        %v2049 = vsel %vm712, %v2043, %v2045
        %v2050 = vsel %vm712, %v2041, %v2043
        %v2051 = vsel %vm712, %v2047, %v2041
        %v2052 = vmul.f32 %v2051, %v723
        %v2053 = vmul.f32 %v2050, %v727
        %v2054 = vmul.f32 %v2049, %v731
        %v2055 = vmul.f32 %v2048, %v735
        %v2056 = vpack.c.bf16 %v2004, %v1988
        %v2057 = vpack.c.bf16 %v2005, %v1989
        %v2058 = vpack.c.bf16 %v2006, %v1990
        %v2059 = vpack.c.bf16 %v2007, %v1991
        %v2060 = vpack.c.bf16 %v2036, %v2020
        %v2061 = vpack.c.bf16 %v2037, %v2021
        %v2062 = vpack.c.bf16 %v2038, %v2022
        %v2063 = vpack.c.bf16 %v2039, %v2023
        %v2064 = vpack.c.bf16 %v2052, %v2052
        %v2065 = vpack.c.bf16 %v2053, %v2053
        %v2066 = vpack.c.bf16 %v2054, %v2054
        %v2067 = vpack.c.bf16 %v2055, %v2055
        %s2068 = scalar_lea.vmem [#allocation8], 4
        %v2069 = vld [vmem:[%s2068] sm:$0xf]
        %v2071 = vsel %vm758, %v2069, 0
        %v2074 = vsel %vm762, %v2064, 0
        %v2077 = vsel %vm762, %v2065, 0
        %v2080 = vsel %vm762, %v2066, 0
        %v2083 = vsel %vm762, %v2067, 0
        %2085 = vmatprep.subr.bf16.mxu0 %v2057
        %2086 = vmatpush1.bf16.msra.mxu0 %v2056
        %2087 = vmatprep.subr.bf16.mxu0 %v2061
        %2088 = vmatpush1.bf16.msra.mxu0 %v2060
        %2089 = vmatprep.subr.bf16.mxu0 %v2077
        %2090 = vmatpush1.bf16.msra.mxu0 %v2074
        %2091 = vmatprep.subr.bf16.mxu0 0
        %2092 = vmatpush1.bf16.msra.mxu0 0
        %2093 = vmatprep.subr.bf16.mxu0 0
        %2094 = vmatpush1.bf16.msra.mxu0 0
        %2095 = vmatprep.subr.bf16.mxu0 0
        %2096 = vmatpush1.bf16.msra.mxu0 0
        %2097 = vmatprep.subr.bf16.mxu0 0
        %2098 = vmatpush1.bf16.msra.mxu0 0
        %2099 = vmatprep.subr.bf16.mxu0 0
        %2100 = vmatpush1.bf16.msra.mxu0 0
        %2101 = vmatprep.subr.bf16.mxu0 0
        %2102 = vmatpush1.bf16.msra.mxu0 0
        %2103 = vmatprep.subr.bf16.mxu0 0
        %2104 = vmatpush1.bf16.msra.mxu0 0
        %2105 = vmatprep.subr.bf16.mxu0 0
        %2106 = vmatpush1.bf16.msra.mxu0 0
        %2107 = vmatprep.subr.bf16.mxu0 0
        %2108 = vmatpush1.bf16.msra.mxu0 0
        %2109 = vmatprep.subr.bf16.mxu0 0
        %2110 = vmatpush1.bf16.msra.mxu0 0
        %2111 = vmatprep.subr.bf16.mxu0 0
        %2112 = vmatpush1.bf16.msra.mxu0 0
        %2113 = vmatprep.subr.bf16.mxu0 0
        %2114 = vmatpush1.bf16.msra.mxu0 0
        %2115 = vmatprep.subr.bf16.mxu0 0
        %2116 = vmatpush1.bf16.msra.mxu0 0
        %2117 = vmatprep.mubr.bf16.mxu0 0
        %2118 = vmatmul.mubr.bf16.gmra.mrb[0].mxu0 %v2071
        %v2119 = vpop.f32.mrb[0].mxu0
        %v2120 = vadd.f32 0.0, %v2119
        %v2121 = vpop.f32.mrb[0].mxu0
        %v2122 = vadd.f32 0.0, %v2121
        %v2123 = vpop.f32.mrb[0].mxu0
        %v2124 = vpop.f32.mrb[0].mxu0
        %2125 = vdwg.mxu0
        %2126 = vmatprep.subr.bf16.mxu0 %v2059
        %2127 = vmatpush1.bf16.msra.mxu0 %v2058
        %2128 = vmatprep.subr.bf16.mxu0 %v2063
        %2129 = vmatpush1.bf16.msra.mxu0 %v2062
        %2130 = vmatprep.subr.bf16.mxu0 %v2083
        %2131 = vmatpush1.bf16.msra.mxu0 %v2080
        %2132 = vmatprep.subr.bf16.mxu0 0
        %2133 = vmatpush1.bf16.msra.mxu0 0
        %2134 = vmatprep.subr.bf16.mxu0 0
        %2135 = vmatpush1.bf16.msra.mxu0 0
        %2136 = vmatprep.subr.bf16.mxu0 0
        %2137 = vmatpush1.bf16.msra.mxu0 0
        %2138 = vmatprep.subr.bf16.mxu0 0
        %2139 = vmatpush1.bf16.msra.mxu0 0
        %2140 = vmatprep.subr.bf16.mxu0 0
        %2141 = vmatpush1.bf16.msra.mxu0 0
        %2142 = vmatprep.subr.bf16.mxu0 0
        %2143 = vmatpush1.bf16.msra.mxu0 0
        %2144 = vmatprep.subr.bf16.mxu0 0
        %2145 = vmatpush1.bf16.msra.mxu0 0
        %2146 = vmatprep.subr.bf16.mxu0 0
        %2147 = vmatpush1.bf16.msra.mxu0 0
        %2148 = vmatprep.subr.bf16.mxu0 0
        %2149 = vmatpush1.bf16.msra.mxu0 0
        %2150 = vmatprep.subr.bf16.mxu0 0
        %2151 = vmatpush1.bf16.msra.mxu0 0
        %2152 = vmatprep.subr.bf16.mxu0 0
        %2153 = vmatpush1.bf16.msra.mxu0 0
        %2154 = vmatprep.subr.bf16.mxu0 0
        %2155 = vmatpush1.bf16.msra.mxu0 0
        %2156 = vmatprep.subr.bf16.mxu0 0
        %2157 = vmatpush1.bf16.msra.mxu0 0
        %2158 = vmatprep.mubr.bf16.mxu0 0
        %2159 = vmatmul.mubr.bf16.gmra.mrb[0].mxu0 %v2071
        %v2160 = vpop.f32.mrb[0].mxu0
        %v2161 = vadd.f32 0.0, %v2160
        %v2162 = vpop.f32.mrb[0].mxu0
        %v2163 = vadd.f32 0.0, %v2162
        %v2164 = vpop.f32.mrb[0].mxu0
        %v2165 = vpop.f32.mrb[0].mxu0
        %2166 = vdwg.mxu0
        %v2168 = vsel %vm758, %v1975, 0
        %v2171 = vsel %vm762, %v1971, 0
        %v2174 = vsel %vm762, %v1972, 0
        %v2177 = vsel %vm762, %v1973, 0
        %v2180 = vsel %vm762, %v1974, 0
        %2182 = vmatprep.subr.bf16.mxu0 %v1964
        %2183 = vmatpush1.bf16.msra.mxu0 %v1963
        %2184 = vmatprep.subr.bf16.mxu0 %v1968
        %2185 = vmatpush1.bf16.msra.mxu0 %v1967
        %2186 = vmatprep.subr.bf16.mxu0 %v2174
        %2187 = vmatpush1.bf16.msra.mxu0 %v2171
        %2188 = vmatprep.subr.bf16.mxu0 0
        %2189 = vmatpush1.bf16.msra.mxu0 0
        %2190 = vmatprep.subr.bf16.mxu0 0
        %2191 = vmatpush1.bf16.msra.mxu0 0
        %2192 = vmatprep.subr.bf16.mxu0 0
        %2193 = vmatpush1.bf16.msra.mxu0 0
        %2194 = vmatprep.subr.bf16.mxu0 0
        %2195 = vmatpush1.bf16.msra.mxu0 0
        %2196 = vmatprep.subr.bf16.mxu0 0
        %2197 = vmatpush1.bf16.msra.mxu0 0
        %2198 = vmatprep.subr.bf16.mxu0 0
        %2199 = vmatpush1.bf16.msra.mxu0 0
        %2200 = vmatprep.subr.bf16.mxu0 0
        %2201 = vmatpush1.bf16.msra.mxu0 0
        %2202 = vmatprep.subr.bf16.mxu0 0
        %2203 = vmatpush1.bf16.msra.mxu0 0
        %2204 = vmatprep.subr.bf16.mxu0 0
        %2205 = vmatpush1.bf16.msra.mxu0 0
        %2206 = vmatprep.subr.bf16.mxu0 0
        %2207 = vmatpush1.bf16.msra.mxu0 0
        %2208 = vmatprep.subr.bf16.mxu0 0
        %2209 = vmatpush1.bf16.msra.mxu0 0
        %2210 = vmatprep.subr.bf16.mxu0 0
        %2211 = vmatpush1.bf16.msra.mxu0 0
        %2212 = vmatprep.subr.bf16.mxu0 0
        %2213 = vmatpush1.bf16.msra.mxu0 0
        %2214 = vmatprep.mubr.bf16.mxu0 0
        %2215 = vmatmul.mubr.bf16.gmra.mrb[0].mxu0 %v2168
        %v2216 = vpop.f32.mrb[0].mxu0
        %v2217 = vadd.f32 %v2120, %v2216
        %v2218 = vpop.f32.mrb[0].mxu0
        %v2219 = vadd.f32 %v2122, %v2218
        %v2220 = vpop.f32.mrb[0].mxu0
        %v2221 = vpop.f32.mrb[0].mxu0
        %2222 = vdwg.mxu0
        %2223 = vmatprep.subr.bf16.mxu0 %v1966
        %2224 = vmatpush1.bf16.msra.mxu0 %v1965
        %2225 = vmatprep.subr.bf16.mxu0 %v1970
        %2226 = vmatpush1.bf16.msra.mxu0 %v1969
        %2227 = vmatprep.subr.bf16.mxu0 %v2180
        %2228 = vmatpush1.bf16.msra.mxu0 %v2177
        %2229 = vmatprep.subr.bf16.mxu0 0
        %2230 = vmatpush1.bf16.msra.mxu0 0
        %2231 = vmatprep.subr.bf16.mxu0 0
        %2232 = vmatpush1.bf16.msra.mxu0 0
        %2233 = vmatprep.subr.bf16.mxu0 0
        %2234 = vmatpush1.bf16.msra.mxu0 0
        %2235 = vmatprep.subr.bf16.mxu0 0
        %2236 = vmatpush1.bf16.msra.mxu0 0
        %2237 = vmatprep.subr.bf16.mxu0 0
        %2238 = vmatpush1.bf16.msra.mxu0 0
        %2239 = vmatprep.subr.bf16.mxu0 0
        %2240 = vmatpush1.bf16.msra.mxu0 0
        %2241 = vmatprep.subr.bf16.mxu0 0
        %2242 = vmatpush1.bf16.msra.mxu0 0
        %2243 = vmatprep.subr.bf16.mxu0 0
        %2244 = vmatpush1.bf16.msra.mxu0 0
        %2245 = vmatprep.subr.bf16.mxu0 0
        %2246 = vmatpush1.bf16.msra.mxu0 0
        %2247 = vmatprep.subr.bf16.mxu0 0
        %2248 = vmatpush1.bf16.msra.mxu0 0
        %2249 = vmatprep.subr.bf16.mxu0 0
        %2250 = vmatpush1.bf16.msra.mxu0 0
        %2251 = vmatprep.subr.bf16.mxu0 0
        %2252 = vmatpush1.bf16.msra.mxu0 0
        %2253 = vmatprep.subr.bf16.mxu0 0
        %2254 = vmatpush1.bf16.msra.mxu0 0
        %2255 = vmatprep.mubr.bf16.mxu0 0
        %2256 = vmatmul.mubr.bf16.gmra.mrb[0].mxu0 %v2168
        %v2257 = vpop.f32.mrb[0].mxu0
        %v2258 = vadd.f32 %v2161, %v2257
        %v2259 = vpop.f32.mrb[0].mxu0
        %v2260 = vadd.f32 %v2163, %v2259
        %v2261 = vpop.f32.mrb[0].mxu0
        %v2262 = vpop.f32.mrb[0].mxu0
        %2263 = vdwg.mxu0
        %2264 = vrot.lane.b32.xlu0 %v1879, 2
        %v2265 = vpop.permute.xlu0 %2264
        %2266 = vrot.lane.b32.xlu0 %v1880, 2
        %v2267 = vpop.permute.xlu0 %2266
        %2268 = vrot.lane.b32.xlu0 %v1881, 2
        %v2269 = vpop.permute.xlu0 %2268
        %2270 = vrot.lane.b32.xlu0 %v1882, 2
        %v2271 = vpop.permute.xlu0 %2270
        %v2272 = vsel %vm962, %v2269, %v2271
        %v2273 = vsel %vm962, %v2267, %v2269
        %v2274 = vsel %vm962, %v2265, %v2267
        %v2275 = vsel %vm962, %v2271, %v2265
        %v2276 = vmul.f32 %v2275, %v973
        %v2277 = vmul.f32 %v2274, %v977
        %v2278 = vmul.f32 %v2273, %v981
        %v2279 = vmul.f32 %v2272, %v985
        %2280 = vrot.lane.b32.xlu0 %v1879, 1
        %v2281 = vpop.permute.xlu0 %2280
        %2282 = vrot.lane.b32.xlu0 %v1880, 1
        %v2283 = vpop.permute.xlu0 %2282
        %2284 = vrot.lane.b32.xlu0 %v1881, 1
        %v2285 = vpop.permute.xlu0 %2284
        %2286 = vrot.lane.b32.xlu0 %v1882, 1
        %v2287 = vpop.permute.xlu0 %2286
        %v2288 = vsel %vm1002, %v2285, %v2287
        %v2289 = vsel %vm1002, %v2283, %v2285
        %v2290 = vsel %vm1002, %v2281, %v2283
        %v2291 = vsel %vm1002, %v2287, %v2281
        %v2292 = vmul.f32 %v2291, %v1013
        %v2293 = vmul.f32 %v2290, %v1017
        %v2294 = vmul.f32 %v2289, %v1021
        %v2295 = vmul.f32 %v2288, %v1025
        %2296 = vrot.lane.b32.xlu0 %v1879, 127
        %v2297 = vpop.permute.xlu0 %2296
        %2298 = vrot.lane.b32.xlu0 %v1880, 127
        %v2299 = vpop.permute.xlu0 %2298
        %2300 = vrot.lane.b32.xlu0 %v1881, 127
        %v2301 = vpop.permute.xlu0 %2300
        %2302 = vrot.lane.b32.xlu0 %v1882, 127
        %v2303 = vpop.permute.xlu0 %2302
        %v2304 = vsel %vm1042, %v2301, %v2303
        %v2305 = vsel %vm1042, %v2299, %v2301
        %v2306 = vsel %vm1042, %v2297, %v2299
        %v2307 = vsel %vm1042, %v2303, %v2297
        %v2308 = vmul.f32 %v2306, %v1053
        %v2309 = vmul.f32 %v2305, %v1057
        %v2310 = vmul.f32 %v2304, %v1061
        %v2311 = vmul.f32 %v2307, %v1065
        %2312 = vrot.lane.b32.xlu0 %v1879, 126
        %v2313 = vpop.permute.xlu0 %2312
        %2314 = vrot.lane.b32.xlu0 %v1880, 126
        %v2315 = vpop.permute.xlu0 %2314
        %2316 = vrot.lane.b32.xlu0 %v1881, 126
        %v2317 = vpop.permute.xlu0 %2316
        %2318 = vrot.lane.b32.xlu0 %v1882, 126
        %v2319 = vpop.permute.xlu0 %2318
        %v2320 = vsel %vm1082, %v2317, %v2319
        %v2321 = vsel %vm1082, %v2315, %v2317
        %v2322 = vsel %vm1082, %v2313, %v2315
        %v2323 = vsel %vm1082, %v2319, %v2313
        %v2324 = vmul.f32 %v2322, %v1093
        %v2325 = vmul.f32 %v2321, %v1097
        %v2326 = vmul.f32 %v2320, %v1101
        %v2327 = vmul.f32 %v2323, %v1105
        %v2328 = vpack.c.bf16 %v2292, %v2276
        %v2329 = vpack.c.bf16 %v2293, %v2277
        %v2330 = vpack.c.bf16 %v2294, %v2278
        %v2331 = vpack.c.bf16 %v2295, %v2279
        %v2332 = vpack.c.bf16 %v2308, %v1879
        %v2333 = vpack.c.bf16 %v2309, %v1880
        %v2334 = vpack.c.bf16 %v2310, %v1881
        %v2335 = vpack.c.bf16 %v2311, %v1882
        %v2336 = vpack.c.bf16 %v2324, %v2324
        %v2337 = vpack.c.bf16 %v2325, %v2325
        %v2338 = vpack.c.bf16 %v2326, %v2326
        %v2339 = vpack.c.bf16 %v2327, %v2327
        %s2340 = scalar_lea.vmem [#allocation8], 8
        %v2341 = vld [vmem:[%s2340] sm:$0xf]
        %v2343 = vsel %vm758, %v2341, 0
        %v2346 = vsel %vm762, %v2336, 0
        %v2349 = vsel %vm762, %v2337, 0
        %v2352 = vsel %vm762, %v2338, 0
        %v2355 = vsel %vm762, %v2339, 0
        %2357 = vmatprep.subr.bf16.mxu0 %v2329
        %2358 = vmatpush1.bf16.msra.mxu0 %v2328
        %2359 = vmatprep.subr.bf16.mxu0 %v2333
        %2360 = vmatpush1.bf16.msra.mxu0 %v2332
        %2361 = vmatprep.subr.bf16.mxu0 %v2349
        %2362 = vmatpush1.bf16.msra.mxu0 %v2346
        %2363 = vmatprep.subr.bf16.mxu0 0
        %2364 = vmatpush1.bf16.msra.mxu0 0
        %2365 = vmatprep.subr.bf16.mxu0 0
        %2366 = vmatpush1.bf16.msra.mxu0 0
        %2367 = vmatprep.subr.bf16.mxu0 0
        %2368 = vmatpush1.bf16.msra.mxu0 0
        %2369 = vmatprep.subr.bf16.mxu0 0
        %2370 = vmatpush1.bf16.msra.mxu0 0
        %2371 = vmatprep.subr.bf16.mxu0 0
        %2372 = vmatpush1.bf16.msra.mxu0 0
        %2373 = vmatprep.subr.bf16.mxu0 0
        %2374 = vmatpush1.bf16.msra.mxu0 0
        %2375 = vmatprep.subr.bf16.mxu0 0
        %2376 = vmatpush1.bf16.msra.mxu0 0
        %2377 = vmatprep.subr.bf16.mxu0 0
        %2378 = vmatpush1.bf16.msra.mxu0 0
        %2379 = vmatprep.subr.bf16.mxu0 0
        %2380 = vmatpush1.bf16.msra.mxu0 0
        %2381 = vmatprep.subr.bf16.mxu0 0
        %2382 = vmatpush1.bf16.msra.mxu0 0
        %2383 = vmatprep.subr.bf16.mxu0 0
        %2384 = vmatpush1.bf16.msra.mxu0 0
        %2385 = vmatprep.subr.bf16.mxu0 0
        %2386 = vmatpush1.bf16.msra.mxu0 0
        %2387 = vmatprep.subr.bf16.mxu0 0
        %2388 = vmatpush1.bf16.msra.mxu0 0
        %2389 = vmatprep.mubr.bf16.mxu0 0
        %2390 = vmatmul.mubr.bf16.gmra.mrb[0].mxu0 %v2343
        %v2391 = vpop.f32.mrb[0].mxu0
        %v2392 = vadd.f32 0.0, %v2391
        %v2393 = vpop.f32.mrb[0].mxu0
        %v2394 = vadd.f32 0.0, %v2393
        %v2395 = vpop.f32.mrb[0].mxu0
        %v2396 = vpop.f32.mrb[0].mxu0
        %2397 = vdwg.mxu0
        %2398 = vmatprep.subr.bf16.mxu0 %v2331
        %2399 = vmatpush1.bf16.msra.mxu0 %v2330
        %2400 = vmatprep.subr.bf16.mxu0 %v2335
        %2401 = vmatpush1.bf16.msra.mxu0 %v2334
        %2402 = vmatprep.subr.bf16.mxu0 %v2355
        %2403 = vmatpush1.bf16.msra.mxu0 %v2352
        %2404 = vmatprep.subr.bf16.mxu0 0
        %2405 = vmatpush1.bf16.msra.mxu0 0
        %2406 = vmatprep.subr.bf16.mxu0 0
        %2407 = vmatpush1.bf16.msra.mxu0 0
        %2408 = vmatprep.subr.bf16.mxu0 0
        %2409 = vmatpush1.bf16.msra.mxu0 0
        %2410 = vmatprep.subr.bf16.mxu0 0
        %2411 = vmatpush1.bf16.msra.mxu0 0
        %2412 = vmatprep.subr.bf16.mxu0 0
        %2413 = vmatpush1.bf16.msra.mxu0 0
        %2414 = vmatprep.subr.bf16.mxu0 0
        %2415 = vmatpush1.bf16.msra.mxu0 0
        %2416 = vmatprep.subr.bf16.mxu0 0
        %2417 = vmatpush1.bf16.msra.mxu0 0
        %2418 = vmatprep.subr.bf16.mxu0 0
        %2419 = vmatpush1.bf16.msra.mxu0 0
        %2420 = vmatprep.subr.bf16.mxu0 0
        %2421 = vmatpush1.bf16.msra.mxu0 0
        %2422 = vmatprep.subr.bf16.mxu0 0
        %2423 = vmatpush1.bf16.msra.mxu0 0
        %2424 = vmatprep.subr.bf16.mxu0 0
        %2425 = vmatpush1.bf16.msra.mxu0 0
        %2426 = vmatprep.subr.bf16.mxu0 0
        %2427 = vmatpush1.bf16.msra.mxu0 0
        %2428 = vmatprep.subr.bf16.mxu0 0
        %2429 = vmatpush1.bf16.msra.mxu0 0
        %2430 = vmatprep.mubr.bf16.mxu0 0
        %2431 = vmatmul.mubr.bf16.gmra.mrb[0].mxu0 %v2343
        %v2432 = vpop.f32.mrb[0].mxu0
        %v2433 = vadd.f32 0.0, %v2432
        %v2434 = vpop.f32.mrb[0].mxu0
        %v2435 = vadd.f32 0.0, %v2434
        %v2436 = vpop.f32.mrb[0].mxu0
        %v2437 = vpop.f32.mrb[0].mxu0
        %2438 = vdwg.mxu0
        %v2439 = vadd.f32 %v2217, %v2392
        %v2440 = vadd.f32 %v2219, %v2394
        %v2441 = vadd.f32 %v2258, %v2433
        %v2442 = vadd.f32 %v2260, %v2435
        %2443 = vrot.lane.b32.xlu0 %v1879, 114
        %v2444 = vpop.permute.xlu0 %2443
        %2445 = vrot.lane.b32.xlu0 %v1880, 114
        %v2446 = vpop.permute.xlu0 %2445
        %2447 = vrot.lane.b32.xlu0 %v1881, 114
        %v2448 = vpop.permute.xlu0 %2447
        %2449 = vrot.lane.b32.xlu0 %v1882, 114
        %v2450 = vpop.permute.xlu0 %2449
        %v2451 = vsel %vm1237, %v2448, %v2450
        %v2452 = vsel %vm1237, %v2446, %v2448
        %v2453 = vsel %vm1237, %v2444, %v2446
        %v2454 = vsel %vm1237, %v2450, %v2444
        %v2455 = vmul.f32 %v2453, %v1248
        %v2456 = vmul.f32 %v2452, %v1252
        %v2457 = vmul.f32 %v2451, %v1256
        %v2458 = vmul.f32 %v2454, %v1260
        %2459 = vrot.lane.b32.xlu0 %v1879, 113
        %v2460 = vpop.permute.xlu0 %2459
        %2461 = vrot.lane.b32.xlu0 %v1880, 113
        %v2462 = vpop.permute.xlu0 %2461
        %2463 = vrot.lane.b32.xlu0 %v1881, 113
        %v2464 = vpop.permute.xlu0 %2463
        %2465 = vrot.lane.b32.xlu0 %v1882, 113
        %v2466 = vpop.permute.xlu0 %2465
        %v2467 = vsel %vm1277, %v2464, %v2466
        %v2468 = vsel %vm1277, %v2462, %v2464
        %v2469 = vsel %vm1277, %v2460, %v2462
        %v2470 = vsel %vm1277, %v2466, %v2460
        %v2471 = vmul.f32 %v2469, %v1288
        %v2472 = vmul.f32 %v2468, %v1292
        %v2473 = vmul.f32 %v2467, %v1296
        %v2474 = vmul.f32 %v2470, %v1300
        %2475 = vrot.lane.b32.xlu0 %v1879, 112
        %v2476 = vpop.permute.xlu0 %2475
        %2477 = vrot.lane.b32.xlu0 %v1880, 112
        %v2478 = vpop.permute.xlu0 %2477
        %2479 = vrot.lane.b32.xlu0 %v1881, 112
        %v2480 = vpop.permute.xlu0 %2479
        %2481 = vrot.lane.b32.xlu0 %v1882, 112
        %v2482 = vpop.permute.xlu0 %2481
        %v2483 = vsel %vm1317, %v2480, %v2482
        %v2484 = vsel %vm1317, %v2478, %v2480
        %v2485 = vsel %vm1317, %v2476, %v2478
        %v2486 = vsel %vm1317, %v2482, %v2476
        %v2487 = vmul.f32 %v2485, %v1328
        %v2488 = vmul.f32 %v2484, %v1332
        %v2489 = vmul.f32 %v2483, %v1336
        %v2490 = vmul.f32 %v2486, %v1340
        %2491 = vrot.lane.b32.xlu0 %v1879, 111
        %v2492 = vpop.permute.xlu0 %2491
        %2493 = vrot.lane.b32.xlu0 %v1880, 111
        %v2494 = vpop.permute.xlu0 %2493
        %2495 = vrot.lane.b32.xlu0 %v1881, 111
        %v2496 = vpop.permute.xlu0 %2495
        %2497 = vrot.lane.b32.xlu0 %v1882, 111
        %v2498 = vpop.permute.xlu0 %2497
        %v2499 = vsel %vm1357, %v2496, %v2498
        %v2500 = vsel %vm1357, %v2494, %v2496
        %v2501 = vsel %vm1357, %v2492, %v2494
        %v2502 = vsel %vm1357, %v2498, %v2492
        %v2503 = vmul.f32 %v2501, %v1368
        %v2504 = vmul.f32 %v2500, %v1372
        %v2505 = vmul.f32 %v2499, %v1376
        %v2506 = vmul.f32 %v2502, %v1380
        %2507 = vrot.lane.b32.xlu0 %v1879, 110
        %v2508 = vpop.permute.xlu0 %2507
        %2509 = vrot.lane.b32.xlu0 %v1880, 110
        %v2510 = vpop.permute.xlu0 %2509
        %2511 = vrot.lane.b32.xlu0 %v1881, 110
        %v2512 = vpop.permute.xlu0 %2511
        %2513 = vrot.lane.b32.xlu0 %v1882, 110
        %v2514 = vpop.permute.xlu0 %2513
        %v2515 = vsel %vm1397, %v2512, %v2514
        %v2516 = vsel %vm1397, %v2510, %v2512
        %v2517 = vsel %vm1397, %v2508, %v2510
        %v2518 = vsel %vm1397, %v2514, %v2508
        %v2519 = vmul.f32 %v2517, %v1408
        %v2520 = vmul.f32 %v2516, %v1412
        %v2521 = vmul.f32 %v2515, %v1416
        %v2522 = vmul.f32 %v2518, %v1420
        %v2523 = vpack.c.bf16 %v2471, %v2455
        %v2524 = vpack.c.bf16 %v2472, %v2456
        %v2525 = vpack.c.bf16 %v2473, %v2457
        %v2526 = vpack.c.bf16 %v2474, %v2458
        %v2527 = vpack.c.bf16 %v2503, %v2487
        %v2528 = vpack.c.bf16 %v2504, %v2488
        %v2529 = vpack.c.bf16 %v2505, %v2489
        %v2530 = vpack.c.bf16 %v2506, %v2490
        %v2531 = vpack.c.bf16 %v2519, %v2519
        %v2532 = vpack.c.bf16 %v2520, %v2520
        %v2533 = vpack.c.bf16 %v2521, %v2521
        %v2534 = vpack.c.bf16 %v2522, %v2522
        %s2535 = scalar_lea.vmem [#allocation8], 12
        %v2536 = vld [vmem:[%s2535] sm:$0xf]
        %v2538 = vsel %vm758, %v2536, 0
        %v2541 = vsel %vm762, %v2531, 0
        %v2544 = vsel %vm762, %v2532, 0
        %v2547 = vsel %vm762, %v2533, 0
        %v2550 = vsel %vm762, %v2534, 0
        %2552 = vmatprep.subr.bf16.mxu0 %v2524
        %2553 = vmatpush1.bf16.msra.mxu0 %v2523
        %2554 = vmatprep.subr.bf16.mxu0 %v2528
        %2555 = vmatpush1.bf16.msra.mxu0 %v2527
        %2556 = vmatprep.subr.bf16.mxu0 %v2544
        %2557 = vmatpush1.bf16.msra.mxu0 %v2541
        %2558 = vmatprep.subr.bf16.mxu0 0
        %2559 = vmatpush1.bf16.msra.mxu0 0
        %2560 = vmatprep.subr.bf16.mxu0 0
        %2561 = vmatpush1.bf16.msra.mxu0 0
        %2562 = vmatprep.subr.bf16.mxu0 0
        %2563 = vmatpush1.bf16.msra.mxu0 0
        %2564 = vmatprep.subr.bf16.mxu0 0
        %2565 = vmatpush1.bf16.msra.mxu0 0
        %2566 = vmatprep.subr.bf16.mxu0 0
        %2567 = vmatpush1.bf16.msra.mxu0 0
        %2568 = vmatprep.subr.bf16.mxu0 0
        %2569 = vmatpush1.bf16.msra.mxu0 0
        %2570 = vmatprep.subr.bf16.mxu0 0
        %2571 = vmatpush1.bf16.msra.mxu0 0
        %2572 = vmatprep.subr.bf16.mxu0 0
        %2573 = vmatpush1.bf16.msra.mxu0 0
        %2574 = vmatprep.subr.bf16.mxu0 0
        %2575 = vmatpush1.bf16.msra.mxu0 0
        %2576 = vmatprep.subr.bf16.mxu0 0
        %2577 = vmatpush1.bf16.msra.mxu0 0
        %2578 = vmatprep.subr.bf16.mxu0 0
        %2579 = vmatpush1.bf16.msra.mxu0 0
        %2580 = vmatprep.subr.bf16.mxu0 0
        %2581 = vmatpush1.bf16.msra.mxu0 0
        %2582 = vmatprep.subr.bf16.mxu0 0
        %2583 = vmatpush1.bf16.msra.mxu0 0
        %2584 = vmatprep.mubr.bf16.mxu0 0
        %2585 = vmatmul.mubr.bf16.gmra.mrb[0].mxu0 %v2538
        %v2586 = vpop.f32.mrb[0].mxu0
        %v2587 = vadd.f32 0.0, %v2586
        %v2588 = vpop.f32.mrb[0].mxu0
        %v2589 = vadd.f32 0.0, %v2588
        %v2590 = vpop.f32.mrb[0].mxu0
        %v2591 = vpop.f32.mrb[0].mxu0
        %2592 = vdwg.mxu0
        %2593 = vmatprep.subr.bf16.mxu0 %v2526
        %2594 = vmatpush1.bf16.msra.mxu0 %v2525
        %2595 = vmatprep.subr.bf16.mxu0 %v2530
        %2596 = vmatpush1.bf16.msra.mxu0 %v2529
        %2597 = vmatprep.subr.bf16.mxu0 %v2550
        %2598 = vmatpush1.bf16.msra.mxu0 %v2547
        %2599 = vmatprep.subr.bf16.mxu0 0
        %2600 = vmatpush1.bf16.msra.mxu0 0
        %2601 = vmatprep.subr.bf16.mxu0 0
        %2602 = vmatpush1.bf16.msra.mxu0 0
        %2603 = vmatprep.subr.bf16.mxu0 0
        %2604 = vmatpush1.bf16.msra.mxu0 0
        %2605 = vmatprep.subr.bf16.mxu0 0
        %2606 = vmatpush1.bf16.msra.mxu0 0
        %2607 = vmatprep.subr.bf16.mxu0 0
        %2608 = vmatpush1.bf16.msra.mxu0 0
        %2609 = vmatprep.subr.bf16.mxu0 0
        %2610 = vmatpush1.bf16.msra.mxu0 0
        %2611 = vmatprep.subr.bf16.mxu0 0
        %2612 = vmatpush1.bf16.msra.mxu0 0
        %2613 = vmatprep.subr.bf16.mxu0 0
        %2614 = vmatpush1.bf16.msra.mxu0 0
        %2615 = vmatprep.subr.bf16.mxu0 0
        %2616 = vmatpush1.bf16.msra.mxu0 0
        %2617 = vmatprep.subr.bf16.mxu0 0
        %2618 = vmatpush1.bf16.msra.mxu0 0
        %2619 = vmatprep.subr.bf16.mxu0 0
        %2620 = vmatpush1.bf16.msra.mxu0 0
        %2621 = vmatprep.subr.bf16.mxu0 0
        %2622 = vmatpush1.bf16.msra.mxu0 0
        %2623 = vmatprep.subr.bf16.mxu0 0
        %2624 = vmatpush1.bf16.msra.mxu0 0
        %2625 = vmatprep.mubr.bf16.mxu0 0
        %2626 = vmatmul.mubr.bf16.gmra.mrb[0].mxu0 %v2538
        %v2627 = vpop.f32.mrb[0].mxu0
        %v2628 = vadd.f32 0.0, %v2627
        %v2629 = vpop.f32.mrb[0].mxu0
        %v2630 = vadd.f32 0.0, %v2629
        %v2631 = vpop.f32.mrb[0].mxu0
        %v2632 = vpop.f32.mrb[0].mxu0
        %2633 = vdwg.mxu0
        %v2634 = vadd.f32 %v2439, %v2587
        %v2635 = vadd.f32 %v2440, %v2589
        %v2636 = vadd.f32 %v2441, %v2628
        %v2637 = vadd.f32 %v2442, %v2630
        %2638 = vrot.lane.b32.xlu0 %v1879, 98
        %v2639 = vpop.permute.xlu0 %2638
        %2640 = vrot.lane.b32.xlu0 %v1880, 98
        %v2641 = vpop.permute.xlu0 %2640
        %2642 = vrot.lane.b32.xlu0 %v1881, 98
        %v2643 = vpop.permute.xlu0 %2642
        %2644 = vrot.lane.b32.xlu0 %v1882, 98
        %v2645 = vpop.permute.xlu0 %2644
        %v2646 = vsel %vm1552, %v2643, %v2645
        %v2647 = vsel %vm1552, %v2641, %v2643
        %v2648 = vsel %vm1552, %v2639, %v2641
        %v2649 = vsel %vm1552, %v2645, %v2639
        %v2650 = vmul.f32 %v2648, %v1563
        %v2651 = vmul.f32 %v2647, %v1567
        %v2652 = vmul.f32 %v2646, %v1571
        %v2653 = vmul.f32 %v2649, %v1575
        %2654 = vrot.lane.b32.xlu0 %v1879, 97
        %v2655 = vpop.permute.xlu0 %2654
        %2656 = vrot.lane.b32.xlu0 %v1880, 97
        %v2657 = vpop.permute.xlu0 %2656
        %2658 = vrot.lane.b32.xlu0 %v1881, 97
        %v2659 = vpop.permute.xlu0 %2658
        %2660 = vrot.lane.b32.xlu0 %v1882, 97
        %v2661 = vpop.permute.xlu0 %2660
        %v2662 = vsel %vm1592, %v2659, %v2661
        %v2663 = vsel %vm1592, %v2657, %v2659
        %v2664 = vsel %vm1592, %v2655, %v2657
        %v2665 = vsel %vm1592, %v2661, %v2655
        %v2666 = vmul.f32 %v2664, %v1603
        %v2667 = vmul.f32 %v2663, %v1607
        %v2668 = vmul.f32 %v2662, %v1611
        %v2669 = vmul.f32 %v2665, %v1615
        %2670 = vrot.lane.b32.xlu0 %v1879, 96
        %v2671 = vpop.permute.xlu0 %2670
        %2672 = vrot.lane.b32.xlu0 %v1880, 96
        %v2673 = vpop.permute.xlu0 %2672
        %2674 = vrot.lane.b32.xlu0 %v1881, 96
        %v2675 = vpop.permute.xlu0 %2674
        %2676 = vrot.lane.b32.xlu0 %v1882, 96
        %v2677 = vpop.permute.xlu0 %2676
        %v2678 = vsel %vm1632, %v2675, %v2677
        %v2679 = vsel %vm1632, %v2673, %v2675
        %v2680 = vsel %vm1632, %v2671, %v2673
        %v2681 = vsel %vm1632, %v2677, %v2671
        %v2682 = vmul.f32 %v2680, %v1643
        %v2683 = vmul.f32 %v2679, %v1647
        %v2684 = vmul.f32 %v2678, %v1651
        %v2685 = vmul.f32 %v2681, %v1655
        %2686 = vrot.lane.b32.xlu0 %v1879, 95
        %v2687 = vpop.permute.xlu0 %2686
        %2688 = vrot.lane.b32.xlu0 %v1880, 95
        %v2689 = vpop.permute.xlu0 %2688
        %2690 = vrot.lane.b32.xlu0 %v1881, 95
        %v2691 = vpop.permute.xlu0 %2690
        %2692 = vrot.lane.b32.xlu0 %v1882, 95
        %v2693 = vpop.permute.xlu0 %2692
        %v2694 = vsel %vm1672, %v2691, %v2693
        %v2695 = vsel %vm1672, %v2689, %v2691
        %v2696 = vsel %vm1672, %v2687, %v2689
        %v2697 = vsel %vm1672, %v2693, %v2687
        %v2698 = vmul.f32 %v2696, %v1683
        %v2699 = vmul.f32 %v2695, %v1687
        %v2700 = vmul.f32 %v2694, %v1691
        %v2701 = vmul.f32 %v2697, %v1695
        %2702 = vrot.lane.b32.xlu0 %v1879, 94
        %v2703 = vpop.permute.xlu0 %2702
        %2704 = vrot.lane.b32.xlu0 %v1880, 94
        %v2705 = vpop.permute.xlu0 %2704
        %2706 = vrot.lane.b32.xlu0 %v1881, 94
        %v2707 = vpop.permute.xlu0 %2706
        %2708 = vrot.lane.b32.xlu0 %v1882, 94
        %v2709 = vpop.permute.xlu0 %2708
        %v2710 = vsel %vm1712, %v2707, %v2709
        %v2711 = vsel %vm1712, %v2705, %v2707
        %v2712 = vsel %vm1712, %v2703, %v2705
        %v2713 = vsel %vm1712, %v2709, %v2703
        %v2714 = vmul.f32 %v2712, %v1723
        %v2715 = vmul.f32 %v2711, %v1727
        %v2716 = vmul.f32 %v2710, %v1731
        %v2717 = vmul.f32 %v2713, %v1735
        %v2718 = vpack.c.bf16 %v2666, %v2650
        %v2719 = vpack.c.bf16 %v2667, %v2651
        %v2720 = vpack.c.bf16 %v2668, %v2652
        %v2721 = vpack.c.bf16 %v2669, %v2653
        %v2722 = vpack.c.bf16 %v2698, %v2682
        %v2723 = vpack.c.bf16 %v2699, %v2683
        %v2724 = vpack.c.bf16 %v2700, %v2684
        %v2725 = vpack.c.bf16 %v2701, %v2685
        %v2726 = vpack.c.bf16 %v2714, %v2714
        %v2727 = vpack.c.bf16 %v2715, %v2715
        %v2728 = vpack.c.bf16 %v2716, %v2716
        %v2729 = vpack.c.bf16 %v2717, %v2717
        %s2730 = scalar_lea.vmem [#allocation8], 16
        %v2731 = vld [vmem:[%s2730] sm:$0xf]
        %v2733 = vsel %vm758, %v2731, 0
        %v2736 = vsel %vm762, %v2726, 0
        %v2739 = vsel %vm762, %v2727, 0
        %v2742 = vsel %vm762, %v2728, 0
        %v2745 = vsel %vm762, %v2729, 0
        %2747 = vmatprep.subr.bf16.mxu0 %v2719
        %2748 = vmatpush1.bf16.msra.mxu0 %v2718
        %2749 = vmatprep.subr.bf16.mxu0 %v2723
        %2750 = vmatpush1.bf16.msra.mxu0 %v2722
        %2751 = vmatprep.subr.bf16.mxu0 %v2739
        %2752 = vmatpush1.bf16.msra.mxu0 %v2736
        %2753 = vmatprep.subr.bf16.mxu0 0
        %2754 = vmatpush1.bf16.msra.mxu0 0
        %2755 = vmatprep.subr.bf16.mxu0 0
        %2756 = vmatpush1.bf16.msra.mxu0 0
        %2757 = vmatprep.subr.bf16.mxu0 0
        %2758 = vmatpush1.bf16.msra.mxu0 0
        %2759 = vmatprep.subr.bf16.mxu0 0
        %2760 = vmatpush1.bf16.msra.mxu0 0
        %2761 = vmatprep.subr.bf16.mxu0 0
        %2762 = vmatpush1.bf16.msra.mxu0 0
        %2763 = vmatprep.subr.bf16.mxu0 0
        %2764 = vmatpush1.bf16.msra.mxu0 0
        %2765 = vmatprep.subr.bf16.mxu0 0
        %2766 = vmatpush1.bf16.msra.mxu0 0
        %2767 = vmatprep.subr.bf16.mxu0 0
        %2768 = vmatpush1.bf16.msra.mxu0 0
        %2769 = vmatprep.subr.bf16.mxu0 0
        %2770 = vmatpush1.bf16.msra.mxu0 0
        %2771 = vmatprep.subr.bf16.mxu0 0
        %2772 = vmatpush1.bf16.msra.mxu0 0
        %2773 = vmatprep.subr.bf16.mxu0 0
        %2774 = vmatpush1.bf16.msra.mxu0 0
        %2775 = vmatprep.subr.bf16.mxu0 0
        %2776 = vmatpush1.bf16.msra.mxu0 0
        %2777 = vmatprep.subr.bf16.mxu0 0
        %2778 = vmatpush1.bf16.msra.mxu0 0
        %2779 = vmatprep.mubr.bf16.mxu0 0
        %2780 = vmatmul.mubr.bf16.gmra.mrb[0].mxu0 %v2733
        %v2781 = vpop.f32.mrb[0].mxu0
        %v2782 = vadd.f32 0.0, %v2781
        %v2783 = vpop.f32.mrb[0].mxu0
        %v2784 = vadd.f32 0.0, %v2783
        %v2785 = vpop.f32.mrb[0].mxu0
        %v2786 = vpop.f32.mrb[0].mxu0
        %2787 = vdwg.mxu0
        %2788 = vmatprep.subr.bf16.mxu0 %v2721
        %2789 = vmatpush1.bf16.msra.mxu0 %v2720
        %2790 = vmatprep.subr.bf16.mxu0 %v2725
        %2791 = vmatpush1.bf16.msra.mxu0 %v2724
        %2792 = vmatprep.subr.bf16.mxu0 %v2745
        %2793 = vmatpush1.bf16.msra.mxu0 %v2742
        %2794 = vmatprep.subr.bf16.mxu0 0
        %2795 = vmatpush1.bf16.msra.mxu0 0
        %2796 = vmatprep.subr.bf16.mxu0 0
        %2797 = vmatpush1.bf16.msra.mxu0 0
        %2798 = vmatprep.subr.bf16.mxu0 0
        %2799 = vmatpush1.bf16.msra.mxu0 0
        %2800 = vmatprep.subr.bf16.mxu0 0
        %2801 = vmatpush1.bf16.msra.mxu0 0
        %2802 = vmatprep.subr.bf16.mxu0 0
        %2803 = vmatpush1.bf16.msra.mxu0 0
        %2804 = vmatprep.subr.bf16.mxu0 0
        %2805 = vmatpush1.bf16.msra.mxu0 0
        %2806 = vmatprep.subr.bf16.mxu0 0
        %2807 = vmatpush1.bf16.msra.mxu0 0
        %2808 = vmatprep.subr.bf16.mxu0 0
        %2809 = vmatpush1.bf16.msra.mxu0 0
        %2810 = vmatprep.subr.bf16.mxu0 0
        %2811 = vmatpush1.bf16.msra.mxu0 0
        %2812 = vmatprep.subr.bf16.mxu0 0
        %2813 = vmatpush1.bf16.msra.mxu0 0
        %2814 = vmatprep.subr.bf16.mxu0 0
        %2815 = vmatpush1.bf16.msra.mxu0 0
        %2816 = vmatprep.subr.bf16.mxu0 0
        %2817 = vmatpush1.bf16.msra.mxu0 0
        %2818 = vmatprep.subr.bf16.mxu0 0
        %2819 = vmatpush1.bf16.msra.mxu0 0
        %2820 = vmatprep.mubr.bf16.mxu0 0
        %2821 = vmatmul.mubr.bf16.gmra.mrb[0].mxu0 %v2733
        %v2822 = vpop.f32.mrb[0].mxu0
        %v2823 = vadd.f32 0.0, %v2822
        %v2824 = vpop.f32.mrb[0].mxu0
        %v2825 = vadd.f32 0.0, %v2824
        %v2826 = vpop.f32.mrb[0].mxu0
        %v2827 = vpop.f32.mrb[0].mxu0
        %2828 = vdwg.mxu0
        %v2829 = vadd.f32 %v2634, %v2782
        %v2830 = vadd.f32 %v2635, %v2784
        %v2831 = vadd.f32 %v2636, %v2823
        %v2832 = vadd.f32 %v2637, %v2825
        %v2833 = vld [vmem:[%s5] sm:$0xff]
        %2835 = vset.pattern.permute.xlu0 0
        %2836 = vperm.xlu0 %2835, %v2833
        %v2837 = vpop.permute.xlu0 %2836
        %v2839 = vadd.f32 %v2829, %v2837
        %v2840 = vadd.f32 %v2830, %v2837
        %v2841 = vadd.f32 %v2831, %v2837
        %v2842 = vadd.f32 %v2832, %v2837
        %v2843 = vadd.f32 %v2839, %v326
        %v2844 = vadd.f32 %v2840, %v327
        %v2845 = vadd.f32 %v2841, %v328
        %v2846 = vadd.f32 %v2842, %v329
        %2847 = vst [vmem:[%s324] sm:$0xff] %v2843
        %2848 = vst [vmem:[%s324 + $0x8] sm:$0xff] %v2844
        %2849 = vst [vmem:[%s324 + $0x10] sm:$0xff] %v2845
        %2850 = vst [vmem:[%s324 + $0x18] sm:$0xff] %v2846
        %s2851 = sand.u32 %s186, 1
        %s2852 = scalar_lea.sflag [#allocation5], %s2851
        %s2853 = sand.u32 %s186, 1
        %s2854 = smul.addr %s2853, 32
        %s2855 = scalar_lea.vmem [#allocation9], %s2854
        // Predicated region
        $region61: #{tpu_custom_call.1} parent=47 // pred_check
          %p2856 = pneg %p196
        $region62: #{tpu_custom_call.1} parent=47 // pred_check_branch
          %2858 = sbr.rel (%p2856) target = $region64
        $region63: #{tpu_custom_call.1} parent=47 // pred_region
          %s2860 = ssub.s32 512, 512
          %2861 = vsyncadd %s2852, %s2860
          %s2862 = smul.addr %s26, 4
          %s2863 = smul.addr %s2862, 128
          %s2864 = scalar_lea.hbm %s7, %s2863
          %s2866 = sshll.u32 %s2855, 4
          %s2867 = int_to_ptr.vmem [resolvable:$true] %s2866
          %2869 = dma.vmem_to_hbm [thread:$0]  %s2867, 512, %s2864, %s2852
        $region64: #{tpu_custom_call.1} parent=47 // pred_fallthru
          _
      $region48: #{tpu_custom_call.1} parent=5 // pred_fallthru
        _
      %p2870 = scmp.le.s32.totalorder 2, %s21
      // Predicated region
      $region65: #{tpu_custom_call.1} parent=5 // pred_check
        %p2871 = pneg %p2870
      $region66: #{tpu_custom_call.1} parent=5 // pred_check_branch
        %2873 = sbr.rel (%p2871) target = $region68
      $region67: #{tpu_custom_call.1} parent=5 // pred_region
        %s2874 = ssub.s32 %s21, 2
        // Predicated region
        $region69: #{tpu_custom_call.1} parent=67 // pred_check
          %p2875 = pneg %p202
        $region70: #{tpu_custom_call.1} parent=67 // pred_check_branch
          %2877 = sbr.rel (%p2875) target = $region72
        $region71: #{tpu_custom_call.1} parent=67 // pred_region
          %s2878 = sand.u32 %s187, 1
          %s2879 = scalar_lea.sflag [#allocation5], %s2878
          %s2880 = sand.u32 %s187, 1
          %s2881 = smul.addr %s2880, 32
          %s2882 = scalar_lea.vmem [#allocation9], %s2881
          %2883 = dma.done %s2879, 512
        $region72: #{tpu_custom_call.1} parent=67 // pred_fallthru
          _
      $region68: #{tpu_custom_call.1} parent=5 // pred_fallthru
        _
    $region6: #{tpu_custom_call.1} parent=1 // loop_footer
      %s25 = sadd.s32 1, %s21
    $region7: #{tpu_custom_call.1} parent=1 // loop_footer_branch
      %20 = sbr.rel target = $region3
    $region8: #{tpu_custom_call.1} parent=1 // loop_exit
      _
    %2884 = vsyncpa [#allocation4], 1
    %s2885 = scalar_lea.sflag [#allocation4], 1
    %2886 = vsyncpa %s2885, 1
    %2887 = vsyncpa [#allocation7], 1
    %2888 = vsyncpa [#allocation5], 1
    %s2889 = scalar_lea.sflag [#allocation5], 1
    %2890 = vsyncpa %s2889, 1

</llo_original>
